<compile_context>
chip_gen: v5e
topology: v5e:2x2
jax: 0.10.0
libtpu: 0.0.40
codegen_flags: <defaults>
</compile_context>

<pallas_src>
import jax
import jax.numpy as jnp
from jax.experimental import pallas as pl
from jax.experimental.pallas import tpu as pltpu


def fused_kernel(patches_ref, pool_mat_ref, wc_ref, bc_ref, wl_ref, bl_ref,
                 conv_ref, pool_ref, lin_ref):
    # patches_ref : (K, N*Pp)   im2col patches; batch n occupies lanes [n*Pp, n*Pp+P),
    #                           lanes [n*Pp+P, (n+1)*Pp) are zero padding.
    # pool_mat_ref: (N*Pp, N)   1/P on batch n's valid-lane rows in column n, else 0.
    # wc_ref      : (Cout, K)   conv weight (pure reshape of PyTorch OIHW)
    # bc_ref      : (Cout, 1)
    # wl_ref      : (F, Cout)   linear weight, PyTorch (out, in) layout as-is
    # bl_ref      : (F, 1)
    # conv_ref    : (N, Cout, Pp)
    # pool_ref    : (Cout, N)
    # lin_ref     : (F, N)
    prec = jax.lax.Precision.HIGHEST
    bc = bc_ref[...]                                          # (Cout, 1)

    # Single batched conv matmul over all N*Pp lanes.
    conv_nb = jnp.dot(wc_ref[...], patches_ref[...],
                      preferred_element_type=jnp.float32,
                      precision=prec)                          # (Cout, N*Pp), 0 on pad lanes
    conv_b = conv_nb + bc                                      # bias broadcast over lanes

    n_batch, _, p_pad = conv_ref.shape
    for n in range(n_batch):                                   # aligned, unmasked 256-lane stores
        conv_ref[n] = conv_b[:, n * p_pad:(n + 1) * p_pad].astype(conv_ref.dtype)

    # Global average pool for all batches at once: (Cout, L) @ (L, N) -> (Cout, N).
    # conv_nb is exactly zero on padded lanes and pool_mat only weights the valid
    # 196 lanes with 1/196, so the mean is unbiased; conv bias added afterwards.
    pool = jnp.dot(conv_nb, pool_mat_ref[...],
                   preferred_element_type=jnp.float32,
                   precision=prec) + bc                        # (Cout, N)
    pool_ref[...] = pool.astype(pool_ref.dtype)

    # Linear for all batches at once: (F, Cout) @ (Cout, N) + (F, 1).
    lin = jnp.dot(wl_ref[...], pool,
                  preferred_element_type=jnp.float32,
                  precision=prec) + bl_ref[...]                # (F, N)
    lin_ref[...] = lin.astype(lin_ref.dtype)


def test_model_forward(x_nchw, conv_w, conv_b, lin_w, lin_b):
    """x_nchw: (N, 3, H, W) f32. conv_w: (32, 3, 3, 3) OIHW. lin_w: (64, 32)."""
    N, Cin, H, W = x_nchw.shape
    Cout, _, KH, KW = conv_w.shape
    F = lin_w.shape[0]
    Ho, Wo = H - KH + 1, W - KW + 1
    P = Ho * Wo                                   # 196
    K = Cin * KH * KW                             # 27
    Pp = ((P + 127) // 128) * 128                 # 256: lane-dense, unmasked stores
    L = N * Pp                                    # batches concatenated on lane axis

    # im2col with (c, kh, kw) row ordering, built straight from NCHW (no input
    # transpose); one tiny XLA stack+pad+reshape fusion in the wrapper.
    slices = [x_nchw[:, :, i:i + Ho, j:j + Wo]
              for i in range(KH) for j in range(KW)]           # KH*KW x (N, Cin, Ho, Wo)
    patches = jnp.stack(slices, axis=2)                        # (N, Cin, KH*KW, Ho, Wo)
    patches = patches.reshape(N, K, P)                         # (N, K, P)
    patches = jnp.pad(patches, ((0, 0), (0, 0), (0, Pp - P)))  # zero-pad lane segments
    patches = jnp.transpose(patches, (1, 0, 2)).reshape(K, L)  # (K, N*Pp)

    # Segment-mean matrix: column n averages the valid P lanes of batch n.
    rows = jnp.arange(L)
    seg = (rows // Pp)[:, None] == jnp.arange(N)[None, :]      # (L, N)
    valid = (rows % Pp < P)[:, None]                           # (L, 1)
    pool_mat = jnp.where(seg & valid, 1.0 / P, 0.0).astype(jnp.float32)

    wc = conv_w.reshape(Cout, K)                               # matches (c, kh, kw) order
    bc = conv_b.reshape(Cout, 1)
    wl = lin_w                                                 # (F, Cout) as-is
    bl = lin_b.reshape(F, 1)

    flops = 2 * Cout * K * L + 2 * Cout * L * N + 2 * F * Cout * N
    bytes_acc = 4 * (K * L + L * N + Cout * K + Cout + F * Cout + F
                     + N * Cout * Pp + Cout * N + F * N)

    conv_t, pool_t, lin_t = pl.pallas_call(
        fused_kernel,
        out_shape=(
            jax.ShapeDtypeStruct((N, Cout, Pp), jnp.float32),
            jax.ShapeDtypeStruct((Cout, N), jnp.float32),
            jax.ShapeDtypeStruct((F, N), jnp.float32),
        ),
        grid_spec=pltpu.PrefetchScalarGridSpec(
            num_scalar_prefetch=0,
            grid=(1,),                                          # whole problem in VMEM
            in_specs=[
                pl.BlockSpec((K, L), lambda i: (0, 0)),
                pl.BlockSpec((L, N), lambda i: (0, 0)),
                pl.BlockSpec((Cout, K), lambda i: (0, 0)),
                pl.BlockSpec((Cout, 1), lambda i: (0, 0)),
                pl.BlockSpec((F, Cout), lambda i: (0, 0)),
                pl.BlockSpec((F, 1), lambda i: (0, 0)),
            ],
            out_specs=[
                pl.BlockSpec((N, Cout, Pp), lambda i: (0, 0, 0)),
                pl.BlockSpec((Cout, N), lambda i: (0, 0)),
                pl.BlockSpec((F, N), lambda i: (0, 0)),
            ],
        ),
        compiler_params=pltpu.CompilerParams(
            dimension_semantics=("arbitrary",)),
        cost_estimate=pl.CostEstimate(flops=flops, transcendentals=0,
                                      bytes_accessed=bytes_acc),
    )(patches, pool_mat, wc, bc, wl, bl)

    # Back to PyTorch conventions: conv needs only a slice+reshape (no transpose);
    # the remaining transposes act on 64/128-element arrays (negligible).
    conv1_out = conv_t[:, :, :P].reshape(N, Cout, Ho, Wo)       # (N, 32, Ho, Wo)
    flat = pool_t.T                                             # (N, 32)
    avgpool_out = flat.reshape(N, Cout, 1, 1)                   # (N, 32, 1, 1)
    layer1_out = lin_t.T                                        # (N, 64)
    return {
        "conv1_out": conv1_out,
        "avgpool_out": avgpool_out,
        "flat": flat,
        "layer1_out": layer1_out,
    }


if __name__ == "__main__":
    key = jax.random.PRNGKey(0)
    k_x, k_cw, k_cb, k_lw, k_lb = jax.random.split(key, 5)

    N, Cin, H, W = 2, 3, 16, 16
    Cout, KH, KW = 32, 3, 3
    F = 64

    x = jax.random.normal(k_x, (N, Cin, H, W), dtype=jnp.float32)
    conv_w = jax.random.normal(k_cw, (Cout, Cin, KH, KW), dtype=jnp.float32) * 0.1
    conv_b = jax.random.normal(k_cb, (Cout,), dtype=jnp.float32) * 0.1
    lin_w = jax.random.normal(k_lw, (F, Cout), dtype=jnp.float32) * 0.1
    lin_b = jax.random.normal(k_lb, (F,), dtype=jnp.float32) * 0.1

    fwd = jax.jit(test_model_forward)
    out = fwd(x, conv_w, conv_b, lin_w, lin_b)
    out = jax.block_until_ready(out)

    # Cross-check against a pure-JAX reference of the PyTorch semantics.
    x_nhwc = jnp.transpose(x, (0, 2, 3, 1))
    w_hwio = jnp.transpose(conv_w, (2, 3, 1, 0))
    conv_ref = jax.lax.conv_general_dilated(
        x_nhwc, w_hwio, window_strides=(1, 1), padding="VALID",
        dimension_numbers=("NHWC", "HWIO", "NHWC")) + conv_b
    conv_ref = jnp.transpose(conv_ref, (0, 3, 1, 2))
    pool_ref = jnp.mean(conv_ref, axis=(2, 3))
    lin_ref = pool_ref @ lin_w.T + lin_b

    assert out["conv1_out"].shape == (N, Cout, H - 2, W - 2)
    assert out["avgpool_out"].shape == (N, Cout, 1, 1)
    assert out["flat"].shape == (N, Cout)
    assert out["layer1_out"].shape == (N, F)
    assert jnp.allclose(out["conv1_out"], conv_ref, atol=1e-3, rtol=1e-3)
    assert jnp.allclose(out["flat"], pool_ref, atol=1e-3, rtol=1e-3)
    assert jnp.allclose(out["avgpool_out"][:, :, 0, 0], pool_ref, atol=1e-3, rtol=1e-3)
    assert jnp.allclose(out["layer1_out"], lin_ref, atol=1e-3, rtol=1e-3)

    print("KERNEL_OK")
</pallas_src>

<mosaic_0001>
module attributes {stable_mosaic.version = 11 : i64} {
  func.func @fused_kernel(%arg0: i32, %arg1: memref<27x512xf32, #tpu.memory_space<vmem>>, %arg2: memref<512x2xf32, #tpu.memory_space<vmem>>, %arg3: memref<32x27xf32, #tpu.memory_space<vmem>>, %arg4: memref<32x1xf32, #tpu.memory_space<vmem>>, %arg5: memref<64x32xf32, #tpu.memory_space<vmem>>, %arg6: memref<64x1xf32, #tpu.memory_space<vmem>>, %arg7: memref<2x32x256xf32, #tpu.memory_space<vmem>>, %arg8: memref<32x2xf32, #tpu.memory_space<vmem>>, %arg9: memref<64x2xf32, #tpu.memory_space<vmem>>) attributes {dimension_semantics = [#tpu.dimension_semantics<arbitrary>], iteration_bounds = array<i64: 1>, scalar_prefetch = 0 : i64, scratch_operands = 0 : i64, tpu.core_type = #tpu.core_type<tc>, window_params = [{pipeline_mode = #tpu.pipeline_mode<synchronous>, transform_indices = @transform_0, window_bounds = array<i64: 27, 512>}, {pipeline_mode = #tpu.pipeline_mode<synchronous>, transform_indices = @transform_1, window_bounds = array<i64: 512, 2>}, {pipeline_mode = #tpu.pipeline_mode<synchronous>, transform_indices = @transform_2, window_bounds = array<i64: 32, 27>}, {pipeline_mode = #tpu.pipeline_mode<synchronous>, transform_indices = @transform_3, window_bounds = array<i64: 32, 1>}, {pipeline_mode = #tpu.pipeline_mode<synchronous>, transform_indices = @transform_4, window_bounds = array<i64: 64, 32>}, {pipeline_mode = #tpu.pipeline_mode<synchronous>, transform_indices = @transform_5, window_bounds = array<i64: 64, 1>}, {pipeline_mode = #tpu.pipeline_mode<synchronous>, transform_indices = @transform_6, window_bounds = array<i64: 2, 32, 256>}, {pipeline_mode = #tpu.pipeline_mode<synchronous>, transform_indices = @transform_7, window_bounds = array<i64: 32, 2>}, {pipeline_mode = #tpu.pipeline_mode<synchronous>, transform_indices = @transform_8, window_bounds = array<i64: 64, 2>}]} {
    %c0 = arith.constant 0 : index
    %c0_0 = arith.constant 0 : index
    %0 = vector.load %arg4[%c0, %c0_0] : memref<32x1xf32, #tpu.memory_space<vmem>>, vector<32x1xf32>
    %c0_1 = arith.constant 0 : index
    %c0_2 = arith.constant 0 : index
    %1 = vector.load %arg3[%c0_1, %c0_2] : memref<32x27xf32, #tpu.memory_space<vmem>>, vector<32x27xf32>
    %c0_3 = arith.constant 0 : index
    %c0_4 = arith.constant 0 : index
    %2 = vector.load %arg1[%c0_3, %c0_4] : memref<27x512xf32, #tpu.memory_space<vmem>>, vector<27x512xf32>
    %cst = arith.constant dense<0.000000e+00> : vector<32x512xf32>
    %3 = tpu.matmul %1, %2, %cst {dimension_numbers = #tpu.dot_dimension_numbers<[1], [0], [0], [1], [0, 0, 1, 1], [], []>, precision = #tpu.contract_precision<fp32>} : vector<32x27xf32>, vector<27x512xf32>, vector<32x512xf32> -> vector<32x512xf32>
    %4 = vector.broadcast %0 : vector<32x1xf32> to vector<32x512xf32>
    %5 = arith.addf %3, %4 : vector<32x512xf32>
    %6 = vector.extract_strided_slice %5 {offsets = [0, 0], sizes = [32, 256], strides = [1, 1]} : vector<32x512xf32> to vector<32x256xf32>
    %c0_5 = arith.constant 0 : index
    %c0_6 = arith.constant 0 : index
    %c0_7 = arith.constant 0 : index
    %7 = vector.load %arg7[%c0_5, %c0_6, %c0_7] : memref<2x32x256xf32, #tpu.memory_space<vmem>>, vector<1x32x256xf32>
    %8 = vector.shape_cast %7 : vector<1x32x256xf32> to vector<32x256xf32>
    %9 = vector.shape_cast %6 : vector<32x256xf32> to vector<1x32x256xf32>
    tpu.vector_store %arg7[%c0_5, %c0_6, %c0_7], %9 {strides = array<i32>} : memref<2x32x256xf32, #tpu.memory_space<vmem>>, vector<1x32x256xf32>,
    %10 = vector.extract_strided_slice %5 {offsets = [0, 256], sizes = [32, 256], strides = [1, 1]} : vector<32x512xf32> to vector<32x256xf32>
    %c1 = arith.constant 1 : index
    %c0_8 = arith.constant 0 : index
    %c0_9 = arith.constant 0 : index
    %11 = vector.load %arg7[%c1, %c0_8, %c0_9] : memref<2x32x256xf32, #tpu.memory_space<vmem>>, vector<1x32x256xf32>
    %12 = vector.shape_cast %11 : vector<1x32x256xf32> to vector<32x256xf32>
    %13 = vector.shape_cast %10 : vector<32x256xf32> to vector<1x32x256xf32>
    tpu.vector_store %arg7[%c1, %c0_8, %c0_9], %13 {strides = array<i32>} : memref<2x32x256xf32, #tpu.memory_space<vmem>>, vector<1x32x256xf32>,
    %c0_10 = arith.constant 0 : index
    %c0_11 = arith.constant 0 : index
    %14 = vector.load %arg2[%c0_10, %c0_11] : memref<512x2xf32, #tpu.memory_space<vmem>>, vector<512x2xf32>
    %cst_12 = arith.constant dense<0.000000e+00> : vector<32x2xf32>
    %15 = tpu.matmul %3, %14, %cst_12 {dimension_numbers = #tpu.dot_dimension_numbers<[1], [0], [0], [1], [0, 0, 1, 1], [], []>, precision = #tpu.contract_precision<fp32>} : vector<32x512xf32>, vector<512x2xf32>, vector<32x2xf32> -> vector<32x2xf32>
    %16 = vector.broadcast %0 : vector<32x1xf32> to vector<32x2xf32>
    %17 = arith.addf %15, %16 : vector<32x2xf32>
    %c0_13 = arith.constant 0 : index
    %c0_14 = arith.constant 0 : index
    %18 = vector.load %arg8[%c0_13, %c0_14] : memref<32x2xf32, #tpu.memory_space<vmem>>, vector<32x2xf32>
    tpu.vector_store %arg8[%c0_13, %c0_14], %17 {strides = array<i32>} : memref<32x2xf32, #tpu.memory_space<vmem>>, vector<32x2xf32>,
    %c0_15 = arith.constant 0 : index
    %c0_16 = arith.constant 0 : index
    %19 = vector.load %arg5[%c0_15, %c0_16] : memref<64x32xf32, #tpu.memory_space<vmem>>, vector<64x32xf32>
    %cst_17 = arith.constant dense<0.000000e+00> : vector<64x2xf32>
    %20 = tpu.matmul %19, %17, %cst_17 {dimension_numbers = #tpu.dot_dimension_numbers<[1], [0], [0], [1], [0, 0, 1, 1], [], []>, precision = #tpu.contract_precision<fp32>} : vector<64x32xf32>, vector<32x2xf32>, vector<64x2xf32> -> vector<64x2xf32>
    %c0_18 = arith.constant 0 : index
    %c0_19 = arith.constant 0 : index
    %21 = vector.load %arg6[%c0_18, %c0_19] : memref<64x1xf32, #tpu.memory_space<vmem>>, vector<64x1xf32>
    %22 = vector.broadcast %21 : vector<64x1xf32> to vector<64x2xf32>
    %23 = arith.addf %20, %22 : vector<64x2xf32>
    %c0_20 = arith.constant 0 : index
    %c0_21 = arith.constant 0 : index
    %24 = vector.load %arg9[%c0_20, %c0_21] : memref<64x2xf32, #tpu.memory_space<vmem>>, vector<64x2xf32>
    tpu.vector_store %arg9[%c0_20, %c0_21], %23 {strides = array<i32>} : memref<64x2xf32, #tpu.memory_space<vmem>>, vector<64x2xf32>,
    return
  }
  func.func @transform_0(%arg0: i32) -> (i32, i32) {
    %c0_i32 = arith.constant 0 : i32
    %c0_i32_0 = arith.constant 0 : i32
    %c0_i32_1 = arith.constant 0 : i32
    return %c0_i32, %c0_i32_0 : i32, i32
  }
  func.func @transform_1(%arg0: i32) -> (i32, i32) {
    %c0_i32 = arith.constant 0 : i32
    %c0_i32_0 = arith.constant 0 : i32
    %c0_i32_1 = arith.constant 0 : i32
    return %c0_i32, %c0_i32_0 : i32, i32
  }
  func.func @transform_2(%arg0: i32) -> (i32, i32) {
    %c0_i32 = arith.constant 0 : i32
    %c0_i32_0 = arith.constant 0 : i32
    %c0_i32_1 = arith.constant 0 : i32
    return %c0_i32, %c0_i32_0 : i32, i32
  }
  func.func @transform_3(%arg0: i32) -> (i32, i32) {
    %c0_i32 = arith.constant 0 : i32
    %c0_i32_0 = arith.constant 0 : i32
    %c0_i32_1 = arith.constant 0 : i32
    return %c0_i32, %c0_i32_0 : i32, i32
  }
  func.func @transform_4(%arg0: i32) -> (i32, i32) {
    %c0_i32 = arith.constant 0 : i32
    %c0_i32_0 = arith.constant 0 : i32
    %c0_i32_1 = arith.constant 0 : i32
    return %c0_i32, %c0_i32_0 : i32, i32
  }
  func.func @transform_5(%arg0: i32) -> (i32, i32) {
    %c0_i32 = arith.constant 0 : i32
    %c0_i32_0 = arith.constant 0 : i32
    %c0_i32_1 = arith.constant 0 : i32
    return %c0_i32, %c0_i32_0 : i32, i32
  }
  func.func @transform_6(%arg0: i32) -> (i32, i32, i32) {
    %c0_i32 = arith.constant 0 : i32
    %c0_i32_0 = arith.constant 0 : i32
    %c0_i32_1 = arith.constant 0 : i32
    %c0_i32_2 = arith.constant 0 : i32
    return %c0_i32, %c0_i32_0, %c0_i32_1 : i32, i32, i32
  }
  func.func @transform_7(%arg0: i32) -> (i32, i32) {
    %c0_i32 = arith.constant 0 : i32
    %c0_i32_0 = arith.constant 0 : i32
    %c0_i32_1 = arith.constant 0 : i32
    return %c0_i32, %c0_i32_0 : i32, i32
  }
  func.func @transform_8(%arg0: i32) -> (i32, i32) {
    %c0_i32 = arith.constant 0 : i32
    %c0_i32_0 = arith.constant 0 : i32
    %c0_i32_1 = arith.constant 0 : i32
    return %c0_i32, %c0_i32_0 : i32, i32
  }
}

</mosaic_0001>

<llo_original>
// kernel: test_model_forward.1
$region0: #{test_model_forward.1}
  #allocation0 [shape = 'u32[]', space=smem, size = 0x4, offset = 0x4, fixed_abs, tag = 'smem constant byte address 0x4 - core index']
  #allocation1 [shape = 'u32[72,128]{1,0:T(1,128)}', space=vmem, size = 0x9000, scoped, tag = 'internal scratch']
  %s0 = inlined_call_operand.vmem [shape: f32[27,512], index: 0, kind: input, shape index: {}]
  %s1 = inlined_call_operand.vmem [shape: f32[512,2], index: 1, kind: input, shape index: {}]
  %s2 = inlined_call_operand.vmem [shape: f32[32,27], index: 2, kind: input, shape index: {}]
  %s3 = inlined_call_operand.vmem [shape: f32[32,1], index: 3, kind: input, shape index: {}]
  %s4 = inlined_call_operand.vmem [shape: f32[64,32], index: 4, kind: input, shape index: {}]
  %s5 = inlined_call_operand.vmem [shape: f32[64,1], index: 5, kind: input, shape index: {}]
  %s6 = inlined_call_operand.vmem [shape: f32[2,32,256], index: 6, kind: output, shape index: {0}]
  %s7 = inlined_call_operand.vmem [shape: f32[32,2], index: 7, kind: output, shape index: {1}]
  %s8 = inlined_call_operand.vmem [shape: f32[64,2], index: 8, kind: output, shape index: {2}]
  %9 = xla_tuple %s6, %s7, %s8
  %s10 = sld [smem:[#allocation0]]
  $region50: #{test_model_forward.1} parent=0
    _
  %s12 = ssub.s32 1, %s10
  %s13 = scalar_select 0, %s12, %s10
  // Predicated region
  $region2: #{test_model_forward.1} parent=0 // pred_check
    _
  $region3: #{test_model_forward.1} parent=0 // pred_check_branch
    %15 = sbr.rel (0) target = $region5
  $region4: #{test_model_forward.1} parent=0 // pred_region
    _
  $region5: #{test_model_forward.1} parent=0 // pred_fallthru
    _
  // Predicated region
  $region6: #{test_model_forward.1} parent=0 // pred_check
    _
  $region7: #{test_model_forward.1} parent=0 // pred_check_branch
    %17 = sbr.rel (0) target = $region9
  $region8: #{test_model_forward.1} parent=0 // pred_region
    _
  $region9: #{test_model_forward.1} parent=0 // pred_fallthru
    _
  // Predicated region
  $region10: #{test_model_forward.1} parent=0 // pred_check
    _
  $region11: #{test_model_forward.1} parent=0 // pred_check_branch
    %19 = sbr.rel (0) target = $region13
  $region12: #{test_model_forward.1} parent=0 // pred_region
    _
  $region13: #{test_model_forward.1} parent=0 // pred_fallthru
    _
  // Predicated region
  $region14: #{test_model_forward.1} parent=0 // pred_check
    _
  $region15: #{test_model_forward.1} parent=0 // pred_check_branch
    %21 = sbr.rel (0) target = $region17
  $region16: #{test_model_forward.1} parent=0 // pred_region
    _
  $region17: #{test_model_forward.1} parent=0 // pred_fallthru
    _
  // Predicated region
  $region18: #{test_model_forward.1} parent=0 // pred_check
    _
  $region19: #{test_model_forward.1} parent=0 // pred_check_branch
    %23 = sbr.rel (0) target = $region21
  $region20: #{test_model_forward.1} parent=0 // pred_region
    _
  $region21: #{test_model_forward.1} parent=0 // pred_fallthru
    _
  // Predicated region
  $region22: #{test_model_forward.1} parent=0 // pred_check
    _
  $region23: #{test_model_forward.1} parent=0 // pred_check_branch
    %25 = sbr.rel (0) target = $region25
  $region24: #{test_model_forward.1} parent=0 // pred_region
    _
  $region25: #{test_model_forward.1} parent=0 // pred_fallthru
    _
  %v26 = vld [vmem:[%s3] sm:$0xff]
  %v27 = vld [vmem:[%s3 + $0x8] sm:$0xff]
  %v28 = vld [vmem:[%s3 + $0x10] sm:$0xff]
  %v29 = vld [vmem:[%s3 + $0x18] sm:$0xff]
  %v30 = vld [vmem:[%s2] sm:$0xff]
  %v31 = vld [vmem:[%s2 + $0x8] sm:$0xff]
  %v32 = vld [vmem:[%s2 + $0x10] sm:$0xff]
  %v33 = vld [vmem:[%s2 + $0x18] sm:$0xff]
  %v34 = vld [vmem:[%s0] sm:$0xff]
  %v35 = vld [vmem:[%s0 + $0x8] sm:$0xff]
  %v36 = vld [vmem:[%s0 + $0x10] sm:$0xff]
  %v37 = vld [vmem:[%s0 + $0x18] sm:$0xff]
  %v38 = vld [vmem:[%s0 + $0x20] sm:$0xff]
  %v39 = vld [vmem:[%s0 + $0x28] sm:$0xff]
  %v40 = vld [vmem:[%s0 + $0x30] sm:$0xff]
  %v41 = vld [vmem:[%s0 + $0x38] sm:$0xff]
  %v42 = vld [vmem:[%s0 + $0x40] sm:$0xff]
  %v43 = vld [vmem:[%s0 + $0x48] sm:$0xff]
  %v44 = vld [vmem:[%s0 + $0x50] sm:$0xff]
  %v45 = vld [vmem:[%s0 + $0x58] sm:$0xff]
  %v46 = vld [vmem:[%s0 + $0x60] sm:$0x7]
  %v47 = vld [vmem:[%s0 + $0x68] sm:$0x7]
  %v48 = vld [vmem:[%s0 + $0x70] sm:$0x7]
  %v49 = vld [vmem:[%s0 + $0x78] sm:$0x7]
  %vm50 = vcmask 220160
  %v52 = vsel %vm50, %v30, 0
  %v55 = vsel %vm50, %v31, 0
  %v58 = vsel %vm50, %v32, 0
  %v61 = vsel %vm50, %v33, 0
  %vm63 = vcmask 1042432
  %v65 = vsel %vm63, %v46, 0
  %v68 = vsel %vm63, %v47, 0
  %v71 = vsel %vm63, %v48, 0
  %v74 = vsel %vm63, %v49, 0
  %76 = vmatpush.msra.mxu0 0.0
  %77 = vmatpush.msra.mxu0 0.0
  %78 = vmatpush.msra.mxu0 0.0
  %79 = vmatpush.msra.mxu0 0.0
  %80 = vmatpush.msra.mxu0 0.0
  %81 = vmatpush.msra.mxu0 0.0
  %82 = vmatpush.msra.mxu0 0.0
  %83 = vmatpush.msra.mxu0 0.0
  %84 = vmatpush.msra.mxu0 0.0
  %85 = vmatpush.msra.mxu0 0.0
  %86 = vmatpush.msra.mxu0 0.0
  %87 = vmatpush.msra.mxu0 0.0
  %v88 = vand.u32 %v65, 4294901760
  %89 = vmatpush.msra.mxu0 %v88
  %v90 = vand.u32 %v42, 4294901760
  %91 = vmatpush.msra.mxu0 %v90
  %v92 = vand.u32 %v38, 4294901760
  %93 = vmatpush.msra.mxu0 %v92
  %v94 = vand.u32 %v34, 4294901760
  %95 = vmatpush.msra.mxu0 %v94
  %v96 = vand.u32 %v52, 4294901760
  %v97 = vsub.f32 %v52, %v96
  %v98 = vand.u32 %v97, 4294901760
  %v99 = vsub.f32 %v97, %v98
  %v100 = vand.u32 %v99, 4294901760
  %101 = vmatmul.f32.gmra.mxu0 %v100
  %v102 = vpop.f32.mrf.mxu0
  %v103 = vadd.f32 0.0, %v102
  %v104 = vand.u32 %v55, 4294901760
  %v105 = vsub.f32 %v55, %v104
  %v106 = vand.u32 %v105, 4294901760
  %v107 = vsub.f32 %v105, %v106
  %v108 = vand.u32 %v107, 4294901760
  %109 = vmatmul.f32.gmra.mxu0 %v108
  %v110 = vpop.f32.mrf.mxu0
  %v111 = vadd.f32 0.0, %v110
  %v112 = vand.u32 %v58, 4294901760
  %v113 = vsub.f32 %v58, %v112
  %v114 = vand.u32 %v113, 4294901760
  %v115 = vsub.f32 %v113, %v114
  %v116 = vand.u32 %v115, 4294901760
  %117 = vmatmul.f32.gmra.mxu0 %v116
  %v118 = vpop.f32.mrf.mxu0
  %v119 = vadd.f32 0.0, %v118
  %v120 = vand.u32 %v61, 4294901760
  %v121 = vsub.f32 %v61, %v120
  %v122 = vand.u32 %v121, 4294901760
  %v123 = vsub.f32 %v121, %v122
  %v124 = vand.u32 %v123, 4294901760
  %125 = vmatmul.f32.gmra.mxu0 %v124
  %v126 = vpop.f32.mrf.mxu0
  %v127 = vadd.f32 0.0, %v126
  %128 = vdwg.mxu0
  %129 = vmatpush.msra.mxu0 0.0
  %130 = vmatpush.msra.mxu0 0.0
  %131 = vmatpush.msra.mxu0 0.0
  %132 = vmatpush.msra.mxu0 0.0
  %133 = vmatpush.msra.mxu0 0.0
  %134 = vmatpush.msra.mxu0 0.0
  %135 = vmatpush.msra.mxu0 0.0
  %136 = vmatpush.msra.mxu0 0.0
  %137 = vmatpush.msra.mxu0 0.0
  %138 = vmatpush.msra.mxu0 0.0
  %139 = vmatpush.msra.mxu0 0.0
  %140 = vmatpush.msra.mxu0 0.0
  %v141 = vand.u32 %v65, 4294901760
  %v142 = vsub.f32 %v65, %v141
  %v143 = vand.u32 %v142, 4294901760
  %v144 = vsub.f32 %v142, %v143
  %v145 = vand.u32 %v144, 4294901760
  %146 = vmatpush.msra.mxu0 %v145
  %v147 = vand.u32 %v42, 4294901760
  %v148 = vsub.f32 %v42, %v147
  %v149 = vand.u32 %v148, 4294901760
  %v150 = vsub.f32 %v148, %v149
  %v151 = vand.u32 %v150, 4294901760
  %152 = vmatpush.msra.mxu0 %v151
  %v153 = vand.u32 %v38, 4294901760
  %v154 = vsub.f32 %v38, %v153
  %v155 = vand.u32 %v154, 4294901760
  %v156 = vsub.f32 %v154, %v155
  %v157 = vand.u32 %v156, 4294901760
  %158 = vmatpush.msra.mxu0 %v157
  %v159 = vand.u32 %v34, 4294901760
  %v160 = vsub.f32 %v34, %v159
  %v161 = vand.u32 %v160, 4294901760
  %v162 = vsub.f32 %v160, %v161
  %v163 = vand.u32 %v162, 4294901760
  %164 = vmatpush.msra.mxu0 %v163
  %v165 = vand.u32 %v52, 4294901760
  %166 = vmatmul.f32.gmra.mxu0 %v165
  %v167 = vpop.f32.mrf.mxu0
  %v168 = vadd.f32 %v103, %v167
  %v169 = vand.u32 %v55, 4294901760
  %170 = vmatmul.f32.gmra.mxu0 %v169
  %v171 = vpop.f32.mrf.mxu0
  %v172 = vadd.f32 %v111, %v171
  %v173 = vand.u32 %v58, 4294901760
  %174 = vmatmul.f32.gmra.mxu0 %v173
  %v175 = vpop.f32.mrf.mxu0
  %v176 = vadd.f32 %v119, %v175
  %v177 = vand.u32 %v61, 4294901760
  %178 = vmatmul.f32.gmra.mxu0 %v177
  %v179 = vpop.f32.mrf.mxu0
  %v180 = vadd.f32 %v127, %v179
  %181 = vdwg.mxu0
  %182 = vmatpush.msra.mxu0 0.0
  %183 = vmatpush.msra.mxu0 0.0
  %184 = vmatpush.msra.mxu0 0.0
  %185 = vmatpush.msra.mxu0 0.0
  %186 = vmatpush.msra.mxu0 0.0
  %187 = vmatpush.msra.mxu0 0.0
  %188 = vmatpush.msra.mxu0 0.0
  %189 = vmatpush.msra.mxu0 0.0
  %190 = vmatpush.msra.mxu0 0.0
  %191 = vmatpush.msra.mxu0 0.0
  %192 = vmatpush.msra.mxu0 0.0
  %193 = vmatpush.msra.mxu0 0.0
  %v194 = vand.u32 %v65, 4294901760
  %v195 = vsub.f32 %v65, %v194
  %196 = vmatpush.msra.mxu0 %v195
  %v197 = vand.u32 %v42, 4294901760
  %v198 = vsub.f32 %v42, %v197
  %199 = vmatpush.msra.mxu0 %v198
  %v200 = vand.u32 %v38, 4294901760
  %v201 = vsub.f32 %v38, %v200
  %202 = vmatpush.msra.mxu0 %v201
  %v203 = vand.u32 %v34, 4294901760
  %v204 = vsub.f32 %v34, %v203
  %205 = vmatpush.msra.mxu0 %v204
  %v206 = vand.u32 %v52, 4294901760
  %v207 = vsub.f32 %v52, %v206
  %208 = vmatmul.f32.gmra.mxu0 %v207
  %v209 = vpop.f32.mrf.mxu0
  %v210 = vadd.f32 %v168, %v209
  %v211 = vand.u32 %v55, 4294901760
  %v212 = vsub.f32 %v55, %v211
  %213 = vmatmul.f32.gmra.mxu0 %v212
  %v214 = vpop.f32.mrf.mxu0
  %v215 = vadd.f32 %v172, %v214
  %v216 = vand.u32 %v58, 4294901760
  %v217 = vsub.f32 %v58, %v216
  %218 = vmatmul.f32.gmra.mxu0 %v217
  %v219 = vpop.f32.mrf.mxu0
  %v220 = vadd.f32 %v176, %v219
  %v221 = vand.u32 %v61, 4294901760
  %v222 = vsub.f32 %v61, %v221
  %223 = vmatmul.f32.gmra.mxu0 %v222
  %v224 = vpop.f32.mrf.mxu0
  %v225 = vadd.f32 %v180, %v224
  %226 = vdwg.mxu0
  %227 = vmatpush.msra.mxu0 0.0
  %228 = vmatpush.msra.mxu0 0.0
  %229 = vmatpush.msra.mxu0 0.0
  %230 = vmatpush.msra.mxu0 0.0
  %231 = vmatpush.msra.mxu0 0.0
  %232 = vmatpush.msra.mxu0 0.0
  %233 = vmatpush.msra.mxu0 0.0
  %234 = vmatpush.msra.mxu0 0.0
  %235 = vmatpush.msra.mxu0 0.0
  %236 = vmatpush.msra.mxu0 0.0
  %237 = vmatpush.msra.mxu0 0.0
  %238 = vmatpush.msra.mxu0 0.0
  %v239 = vand.u32 %v65, 4294901760
  %240 = vmatpush.msra.mxu0 %v239
  %v241 = vand.u32 %v42, 4294901760
  %242 = vmatpush.msra.mxu0 %v241
  %v243 = vand.u32 %v38, 4294901760
  %244 = vmatpush.msra.mxu0 %v243
  %v245 = vand.u32 %v34, 4294901760
  %246 = vmatpush.msra.mxu0 %v245
  %v247 = vand.u32 %v52, 4294901760
  %v248 = vsub.f32 %v52, %v247
  %v249 = vand.u32 %v248, 4294901760
  %250 = vmatmul.f32.gmra.mxu0 %v249
  %v251 = vpop.f32.mrf.mxu0
  %v252 = vadd.f32 %v210, %v251
  %v253 = vand.u32 %v55, 4294901760
  %v254 = vsub.f32 %v55, %v253
  %v255 = vand.u32 %v254, 4294901760
  %256 = vmatmul.f32.gmra.mxu0 %v255
  %v257 = vpop.f32.mrf.mxu0
  %v258 = vadd.f32 %v215, %v257
  %v259 = vand.u32 %v58, 4294901760
  %v260 = vsub.f32 %v58, %v259
  %v261 = vand.u32 %v260, 4294901760
  %262 = vmatmul.f32.gmra.mxu0 %v261
  %v263 = vpop.f32.mrf.mxu0
  %v264 = vadd.f32 %v220, %v263
  %v265 = vand.u32 %v61, 4294901760
  %v266 = vsub.f32 %v61, %v265
  %v267 = vand.u32 %v266, 4294901760
  %268 = vmatmul.f32.gmra.mxu0 %v267
  %v269 = vpop.f32.mrf.mxu0
  %v270 = vadd.f32 %v225, %v269
  %271 = vdwg.mxu0
  %272 = vmatpush.msra.mxu0 0.0
  %273 = vmatpush.msra.mxu0 0.0
  %274 = vmatpush.msra.mxu0 0.0
  %275 = vmatpush.msra.mxu0 0.0
  %276 = vmatpush.msra.mxu0 0.0
  %277 = vmatpush.msra.mxu0 0.0
  %278 = vmatpush.msra.mxu0 0.0
  %279 = vmatpush.msra.mxu0 0.0
  %280 = vmatpush.msra.mxu0 0.0
  %281 = vmatpush.msra.mxu0 0.0
  %282 = vmatpush.msra.mxu0 0.0
  %283 = vmatpush.msra.mxu0 0.0
  %v284 = vand.u32 %v65, 4294901760
  %v285 = vsub.f32 %v65, %v284
  %v286 = vand.u32 %v285, 4294901760
  %287 = vmatpush.msra.mxu0 %v286
  %v288 = vand.u32 %v42, 4294901760
  %v289 = vsub.f32 %v42, %v288
  %v290 = vand.u32 %v289, 4294901760
  %291 = vmatpush.msra.mxu0 %v290
  %v292 = vand.u32 %v38, 4294901760
  %v293 = vsub.f32 %v38, %v292
  %v294 = vand.u32 %v293, 4294901760
  %295 = vmatpush.msra.mxu0 %v294
  %v296 = vand.u32 %v34, 4294901760
  %v297 = vsub.f32 %v34, %v296
  %v298 = vand.u32 %v297, 4294901760
  %299 = vmatpush.msra.mxu0 %v298
  %v300 = vand.u32 %v52, 4294901760
  %301 = vmatmul.f32.gmra.mxu0 %v300
  %v302 = vpop.f32.mrf.mxu0
  %v303 = vadd.f32 %v252, %v302
  %v304 = vand.u32 %v55, 4294901760
  %305 = vmatmul.f32.gmra.mxu0 %v304
  %v306 = vpop.f32.mrf.mxu0
  %v307 = vadd.f32 %v258, %v306
  %v308 = vand.u32 %v58, 4294901760
  %309 = vmatmul.f32.gmra.mxu0 %v308
  %v310 = vpop.f32.mrf.mxu0
  %v311 = vadd.f32 %v264, %v310
  %v312 = vand.u32 %v61, 4294901760
  %313 = vmatmul.f32.gmra.mxu0 %v312
  %v314 = vpop.f32.mrf.mxu0
  %v315 = vadd.f32 %v270, %v314
  %316 = vdwg.mxu0
  %317 = vmatpush.msra.mxu0 0.0
  %318 = vmatpush.msra.mxu0 0.0
  %319 = vmatpush.msra.mxu0 0.0
  %320 = vmatpush.msra.mxu0 0.0
  %321 = vmatpush.msra.mxu0 0.0
  %322 = vmatpush.msra.mxu0 0.0
  %323 = vmatpush.msra.mxu0 0.0
  %324 = vmatpush.msra.mxu0 0.0
  %325 = vmatpush.msra.mxu0 0.0
  %326 = vmatpush.msra.mxu0 0.0
  %327 = vmatpush.msra.mxu0 0.0
  %328 = vmatpush.msra.mxu0 0.0
  %v329 = vand.u32 %v65, 4294901760
  %330 = vmatpush.msra.mxu0 %v329
  %v331 = vand.u32 %v42, 4294901760
  %332 = vmatpush.msra.mxu0 %v331
  %v333 = vand.u32 %v38, 4294901760
  %334 = vmatpush.msra.mxu0 %v333
  %v335 = vand.u32 %v34, 4294901760
  %336 = vmatpush.msra.mxu0 %v335
  %v337 = vand.u32 %v52, 4294901760
  %338 = vmatmul.f32.gmra.mxu0 %v337
  %v339 = vpop.f32.mrf.mxu0
  %v340 = vadd.f32 %v303, %v339
  %v341 = vand.u32 %v55, 4294901760
  %342 = vmatmul.f32.gmra.mxu0 %v341
  %v343 = vpop.f32.mrf.mxu0
  %v344 = vadd.f32 %v307, %v343
  %v345 = vand.u32 %v58, 4294901760
  %346 = vmatmul.f32.gmra.mxu0 %v345
  %v347 = vpop.f32.mrf.mxu0
  %v348 = vadd.f32 %v311, %v347
  %v349 = vand.u32 %v61, 4294901760
  %350 = vmatmul.f32.gmra.mxu0 %v349
  %v351 = vpop.f32.mrf.mxu0
  %v352 = vadd.f32 %v315, %v351
  %353 = vdwg.mxu0
  %354 = vmatpush.msra.mxu0 0.0
  %355 = vmatpush.msra.mxu0 0.0
  %356 = vmatpush.msra.mxu0 0.0
  %357 = vmatpush.msra.mxu0 0.0
  %358 = vmatpush.msra.mxu0 0.0
  %359 = vmatpush.msra.mxu0 0.0
  %360 = vmatpush.msra.mxu0 0.0
  %361 = vmatpush.msra.mxu0 0.0
  %362 = vmatpush.msra.mxu0 0.0
  %363 = vmatpush.msra.mxu0 0.0
  %364 = vmatpush.msra.mxu0 0.0
  %365 = vmatpush.msra.mxu0 0.0
  %v366 = vand.u32 %v68, 4294901760
  %367 = vmatpush.msra.mxu0 %v366
  %v368 = vand.u32 %v43, 4294901760
  %369 = vmatpush.msra.mxu0 %v368
  %v370 = vand.u32 %v39, 4294901760
  %371 = vmatpush.msra.mxu0 %v370
  %v372 = vand.u32 %v35, 4294901760
  %373 = vmatpush.msra.mxu0 %v372
  %v374 = vand.u32 %v52, 4294901760
  %v375 = vsub.f32 %v52, %v374
  %v376 = vand.u32 %v375, 4294901760
  %v377 = vsub.f32 %v375, %v376
  %v378 = vand.u32 %v377, 4294901760
  %379 = vmatmul.f32.gmra.mxu0 %v378
  %v380 = vpop.f32.mrf.mxu0
  %v381 = vadd.f32 0.0, %v380
  %v382 = vand.u32 %v55, 4294901760
  %v383 = vsub.f32 %v55, %v382
  %v384 = vand.u32 %v383, 4294901760
  %v385 = vsub.f32 %v383, %v384
  %v386 = vand.u32 %v385, 4294901760
  %387 = vmatmul.f32.gmra.mxu0 %v386
  %v388 = vpop.f32.mrf.mxu0
  %v389 = vadd.f32 0.0, %v388
  %v390 = vand.u32 %v58, 4294901760
  %v391 = vsub.f32 %v58, %v390
  %v392 = vand.u32 %v391, 4294901760
  %v393 = vsub.f32 %v391, %v392
  %v394 = vand.u32 %v393, 4294901760
  %395 = vmatmul.f32.gmra.mxu0 %v394
  %v396 = vpop.f32.mrf.mxu0
  %v397 = vadd.f32 0.0, %v396
  %v398 = vand.u32 %v61, 4294901760
  %v399 = vsub.f32 %v61, %v398
  %v400 = vand.u32 %v399, 4294901760
  %v401 = vsub.f32 %v399, %v400
  %v402 = vand.u32 %v401, 4294901760
  %403 = vmatmul.f32.gmra.mxu0 %v402
  %v404 = vpop.f32.mrf.mxu0
  %v405 = vadd.f32 0.0, %v404
  %406 = vdwg.mxu0
  %407 = vmatpush.msra.mxu0 0.0
  %408 = vmatpush.msra.mxu0 0.0
  %409 = vmatpush.msra.mxu0 0.0
  %410 = vmatpush.msra.mxu0 0.0
  %411 = vmatpush.msra.mxu0 0.0
  %412 = vmatpush.msra.mxu0 0.0
  %413 = vmatpush.msra.mxu0 0.0
  %414 = vmatpush.msra.mxu0 0.0
  %415 = vmatpush.msra.mxu0 0.0
  %416 = vmatpush.msra.mxu0 0.0
  %417 = vmatpush.msra.mxu0 0.0
  %418 = vmatpush.msra.mxu0 0.0
  %v419 = vand.u32 %v68, 4294901760
  %v420 = vsub.f32 %v68, %v419
  %v421 = vand.u32 %v420, 4294901760
  %v422 = vsub.f32 %v420, %v421
  %v423 = vand.u32 %v422, 4294901760
  %424 = vmatpush.msra.mxu0 %v423
  %v425 = vand.u32 %v43, 4294901760
  %v426 = vsub.f32 %v43, %v425
  %v427 = vand.u32 %v426, 4294901760
  %v428 = vsub.f32 %v426, %v427
  %v429 = vand.u32 %v428, 4294901760
  %430 = vmatpush.msra.mxu0 %v429
  %v431 = vand.u32 %v39, 4294901760
  %v432 = vsub.f32 %v39, %v431
  %v433 = vand.u32 %v432, 4294901760
  %v434 = vsub.f32 %v432, %v433
  %v435 = vand.u32 %v434, 4294901760
  %436 = vmatpush.msra.mxu0 %v435
  %v437 = vand.u32 %v35, 4294901760
  %v438 = vsub.f32 %v35, %v437
  %v439 = vand.u32 %v438, 4294901760
  %v440 = vsub.f32 %v438, %v439
  %v441 = vand.u32 %v440, 4294901760
  %442 = vmatpush.msra.mxu0 %v441
  %v443 = vand.u32 %v52, 4294901760
  %444 = vmatmul.f32.gmra.mxu0 %v443
  %v445 = vpop.f32.mrf.mxu0
  %v446 = vadd.f32 %v381, %v445
  %v447 = vand.u32 %v55, 4294901760
  %448 = vmatmul.f32.gmra.mxu0 %v447
  %v449 = vpop.f32.mrf.mxu0
  %v450 = vadd.f32 %v389, %v449
  %v451 = vand.u32 %v58, 4294901760
  %452 = vmatmul.f32.gmra.mxu0 %v451
  %v453 = vpop.f32.mrf.mxu0
  %v454 = vadd.f32 %v397, %v453
  %v455 = vand.u32 %v61, 4294901760
  %456 = vmatmul.f32.gmra.mxu0 %v455
  %v457 = vpop.f32.mrf.mxu0
  %v458 = vadd.f32 %v405, %v457
  %459 = vdwg.mxu0
  %460 = vmatpush.msra.mxu0 0.0
  %461 = vmatpush.msra.mxu0 0.0
  %462 = vmatpush.msra.mxu0 0.0
  %463 = vmatpush.msra.mxu0 0.0
  %464 = vmatpush.msra.mxu0 0.0
  %465 = vmatpush.msra.mxu0 0.0
  %466 = vmatpush.msra.mxu0 0.0
  %467 = vmatpush.msra.mxu0 0.0
  %468 = vmatpush.msra.mxu0 0.0
  %469 = vmatpush.msra.mxu0 0.0
  %470 = vmatpush.msra.mxu0 0.0
  %471 = vmatpush.msra.mxu0 0.0
  %v472 = vand.u32 %v68, 4294901760
  %v473 = vsub.f32 %v68, %v472
  %474 = vmatpush.msra.mxu0 %v473
  %v475 = vand.u32 %v43, 4294901760
  %v476 = vsub.f32 %v43, %v475
  %477 = vmatpush.msra.mxu0 %v476
  %v478 = vand.u32 %v39, 4294901760
  %v479 = vsub.f32 %v39, %v478
  %480 = vmatpush.msra.mxu0 %v479
  %v481 = vand.u32 %v35, 4294901760
  %v482 = vsub.f32 %v35, %v481
  %483 = vmatpush.msra.mxu0 %v482
  %v484 = vand.u32 %v52, 4294901760
  %v485 = vsub.f32 %v52, %v484
  %486 = vmatmul.f32.gmra.mxu0 %v485
  %v487 = vpop.f32.mrf.mxu0
  %v488 = vadd.f32 %v446, %v487
  %v489 = vand.u32 %v55, 4294901760
  %v490 = vsub.f32 %v55, %v489
  %491 = vmatmul.f32.gmra.mxu0 %v490
  %v492 = vpop.f32.mrf.mxu0
  %v493 = vadd.f32 %v450, %v492
  %v494 = vand.u32 %v58, 4294901760
  %v495 = vsub.f32 %v58, %v494
  %496 = vmatmul.f32.gmra.mxu0 %v495
  %v497 = vpop.f32.mrf.mxu0
  %v498 = vadd.f32 %v454, %v497
  %v499 = vand.u32 %v61, 4294901760
  %v500 = vsub.f32 %v61, %v499
  %501 = vmatmul.f32.gmra.mxu0 %v500
  %v502 = vpop.f32.mrf.mxu0
  %v503 = vadd.f32 %v458, %v502
  %504 = vdwg.mxu0
  %505 = vmatpush.msra.mxu0 0.0
  %506 = vmatpush.msra.mxu0 0.0
  %507 = vmatpush.msra.mxu0 0.0
  %508 = vmatpush.msra.mxu0 0.0
  %509 = vmatpush.msra.mxu0 0.0
  %510 = vmatpush.msra.mxu0 0.0
  %511 = vmatpush.msra.mxu0 0.0
  %512 = vmatpush.msra.mxu0 0.0
  %513 = vmatpush.msra.mxu0 0.0
  %514 = vmatpush.msra.mxu0 0.0
  %515 = vmatpush.msra.mxu0 0.0
  %516 = vmatpush.msra.mxu0 0.0
  %v517 = vand.u32 %v68, 4294901760
  %518 = vmatpush.msra.mxu0 %v517
  %v519 = vand.u32 %v43, 4294901760
  %520 = vmatpush.msra.mxu0 %v519
  %v521 = vand.u32 %v39, 4294901760
  %522 = vmatpush.msra.mxu0 %v521
  %v523 = vand.u32 %v35, 4294901760
  %524 = vmatpush.msra.mxu0 %v523
  %v525 = vand.u32 %v52, 4294901760
  %v526 = vsub.f32 %v52, %v525
  %v527 = vand.u32 %v526, 4294901760
  %528 = vmatmul.f32.gmra.mxu0 %v527
  %v529 = vpop.f32.mrf.mxu0
  %v530 = vadd.f32 %v488, %v529
  %v531 = vand.u32 %v55, 4294901760
  %v532 = vsub.f32 %v55, %v531
  %v533 = vand.u32 %v532, 4294901760
  %534 = vmatmul.f32.gmra.mxu0 %v533
  %v535 = vpop.f32.mrf.mxu0
  %v536 = vadd.f32 %v493, %v535
  %v537 = vand.u32 %v58, 4294901760
  %v538 = vsub.f32 %v58, %v537
  %v539 = vand.u32 %v538, 4294901760
  %540 = vmatmul.f32.gmra.mxu0 %v539
  %v541 = vpop.f32.mrf.mxu0
  %v542 = vadd.f32 %v498, %v541
  %v543 = vand.u32 %v61, 4294901760
  %v544 = vsub.f32 %v61, %v543
  %v545 = vand.u32 %v544, 4294901760
  %546 = vmatmul.f32.gmra.mxu0 %v545
  %v547 = vpop.f32.mrf.mxu0
  %v548 = vadd.f32 %v503, %v547
  %549 = vdwg.mxu0
  %550 = vmatpush.msra.mxu0 0.0
  %551 = vmatpush.msra.mxu0 0.0
  %552 = vmatpush.msra.mxu0 0.0
  %553 = vmatpush.msra.mxu0 0.0
  %554 = vmatpush.msra.mxu0 0.0
  %555 = vmatpush.msra.mxu0 0.0
  %556 = vmatpush.msra.mxu0 0.0
  %557 = vmatpush.msra.mxu0 0.0
  %558 = vmatpush.msra.mxu0 0.0
  %559 = vmatpush.msra.mxu0 0.0
  %560 = vmatpush.msra.mxu0 0.0
  %561 = vmatpush.msra.mxu0 0.0
  %v562 = vand.u32 %v68, 4294901760
  %v563 = vsub.f32 %v68, %v562
  %v564 = vand.u32 %v563, 4294901760
  %565 = vmatpush.msra.mxu0 %v564
  %v566 = vand.u32 %v43, 4294901760
  %v567 = vsub.f32 %v43, %v566
  %v568 = vand.u32 %v567, 4294901760
  %569 = vmatpush.msra.mxu0 %v568
  %v570 = vand.u32 %v39, 4294901760
  %v571 = vsub.f32 %v39, %v570
  %v572 = vand.u32 %v571, 4294901760
  %573 = vmatpush.msra.mxu0 %v572
  %v574 = vand.u32 %v35, 4294901760
  %v575 = vsub.f32 %v35, %v574
  %v576 = vand.u32 %v575, 4294901760
  %577 = vmatpush.msra.mxu0 %v576
  %v578 = vand.u32 %v52, 4294901760
  %579 = vmatmul.f32.gmra.mxu0 %v578
  %v580 = vpop.f32.mrf.mxu0
  %v581 = vadd.f32 %v530, %v580
  %v582 = vand.u32 %v55, 4294901760
  %583 = vmatmul.f32.gmra.mxu0 %v582
  %v584 = vpop.f32.mrf.mxu0
  %v585 = vadd.f32 %v536, %v584
  %v586 = vand.u32 %v58, 4294901760
  %587 = vmatmul.f32.gmra.mxu0 %v586
  %v588 = vpop.f32.mrf.mxu0
  %v589 = vadd.f32 %v542, %v588
  %v590 = vand.u32 %v61, 4294901760
  %591 = vmatmul.f32.gmra.mxu0 %v590
  %v592 = vpop.f32.mrf.mxu0
  %v593 = vadd.f32 %v548, %v592
  %594 = vdwg.mxu0
  %595 = vmatpush.msra.mxu0 0.0
  %596 = vmatpush.msra.mxu0 0.0
  %597 = vmatpush.msra.mxu0 0.0
  %598 = vmatpush.msra.mxu0 0.0
  %599 = vmatpush.msra.mxu0 0.0
  %600 = vmatpush.msra.mxu0 0.0
  %601 = vmatpush.msra.mxu0 0.0
  %602 = vmatpush.msra.mxu0 0.0
  %603 = vmatpush.msra.mxu0 0.0
  %604 = vmatpush.msra.mxu0 0.0
  %605 = vmatpush.msra.mxu0 0.0
  %606 = vmatpush.msra.mxu0 0.0
  %v607 = vand.u32 %v68, 4294901760
  %608 = vmatpush.msra.mxu0 %v607
  %v609 = vand.u32 %v43, 4294901760
  %610 = vmatpush.msra.mxu0 %v609
  %v611 = vand.u32 %v39, 4294901760
  %612 = vmatpush.msra.mxu0 %v611
  %v613 = vand.u32 %v35, 4294901760
  %614 = vmatpush.msra.mxu0 %v613
  %v615 = vand.u32 %v52, 4294901760
  %616 = vmatmul.f32.gmra.mxu0 %v615
  %v617 = vpop.f32.mrf.mxu0
  %v618 = vadd.f32 %v581, %v617
  %v619 = vand.u32 %v55, 4294901760
  %620 = vmatmul.f32.gmra.mxu0 %v619
  %v621 = vpop.f32.mrf.mxu0
  %v622 = vadd.f32 %v585, %v621
  %v623 = vand.u32 %v58, 4294901760
  %624 = vmatmul.f32.gmra.mxu0 %v623
  %v625 = vpop.f32.mrf.mxu0
  %v626 = vadd.f32 %v589, %v625
  %v627 = vand.u32 %v61, 4294901760
  %628 = vmatmul.f32.gmra.mxu0 %v627
  %v629 = vpop.f32.mrf.mxu0
  %v630 = vadd.f32 %v593, %v629
  %631 = vdwg.mxu0
  %632 = vmatpush.msra.mxu0 0.0
  %633 = vmatpush.msra.mxu0 0.0
  %634 = vmatpush.msra.mxu0 0.0
  %635 = vmatpush.msra.mxu0 0.0
  %636 = vmatpush.msra.mxu0 0.0
  %637 = vmatpush.msra.mxu0 0.0
  %638 = vmatpush.msra.mxu0 0.0
  %639 = vmatpush.msra.mxu0 0.0
  %640 = vmatpush.msra.mxu0 0.0
  %641 = vmatpush.msra.mxu0 0.0
  %642 = vmatpush.msra.mxu0 0.0
  %643 = vmatpush.msra.mxu0 0.0
  %v644 = vand.u32 %v71, 4294901760
  %645 = vmatpush.msra.mxu0 %v644
  %v646 = vand.u32 %v44, 4294901760
  %647 = vmatpush.msra.mxu0 %v646
  %v648 = vand.u32 %v40, 4294901760
  %649 = vmatpush.msra.mxu0 %v648
  %v650 = vand.u32 %v36, 4294901760
  %651 = vmatpush.msra.mxu0 %v650
  %v652 = vand.u32 %v52, 4294901760
  %v653 = vsub.f32 %v52, %v652
  %v654 = vand.u32 %v653, 4294901760
  %v655 = vsub.f32 %v653, %v654
  %v656 = vand.u32 %v655, 4294901760
  %657 = vmatmul.f32.gmra.mxu0 %v656
  %v658 = vpop.f32.mrf.mxu0
  %v659 = vadd.f32 0.0, %v658
  %v660 = vand.u32 %v55, 4294901760
  %v661 = vsub.f32 %v55, %v660
  %v662 = vand.u32 %v661, 4294901760
  %v663 = vsub.f32 %v661, %v662
  %v664 = vand.u32 %v663, 4294901760
  %665 = vmatmul.f32.gmra.mxu0 %v664
  %v666 = vpop.f32.mrf.mxu0
  %v667 = vadd.f32 0.0, %v666
  %v668 = vand.u32 %v58, 4294901760
  %v669 = vsub.f32 %v58, %v668
  %v670 = vand.u32 %v669, 4294901760
  %v671 = vsub.f32 %v669, %v670
  %v672 = vand.u32 %v671, 4294901760
  %673 = vmatmul.f32.gmra.mxu0 %v672
  %v674 = vpop.f32.mrf.mxu0
  %v675 = vadd.f32 0.0, %v674
  %v676 = vand.u32 %v61, 4294901760
  %v677 = vsub.f32 %v61, %v676
  %v678 = vand.u32 %v677, 4294901760
  %v679 = vsub.f32 %v677, %v678
  %v680 = vand.u32 %v679, 4294901760
  %681 = vmatmul.f32.gmra.mxu0 %v680
  %v682 = vpop.f32.mrf.mxu0
  %v683 = vadd.f32 0.0, %v682
  %684 = vdwg.mxu0
  %685 = vmatpush.msra.mxu0 0.0
  %686 = vmatpush.msra.mxu0 0.0
  %687 = vmatpush.msra.mxu0 0.0
  %688 = vmatpush.msra.mxu0 0.0
  %689 = vmatpush.msra.mxu0 0.0
  %690 = vmatpush.msra.mxu0 0.0
  %691 = vmatpush.msra.mxu0 0.0
  %692 = vmatpush.msra.mxu0 0.0
  %693 = vmatpush.msra.mxu0 0.0
  %694 = vmatpush.msra.mxu0 0.0
  %695 = vmatpush.msra.mxu0 0.0
  %696 = vmatpush.msra.mxu0 0.0
  %v697 = vand.u32 %v71, 4294901760
  %v698 = vsub.f32 %v71, %v697
  %v699 = vand.u32 %v698, 4294901760
  %v700 = vsub.f32 %v698, %v699
  %v701 = vand.u32 %v700, 4294901760
  %702 = vmatpush.msra.mxu0 %v701
  %v703 = vand.u32 %v44, 4294901760
  %v704 = vsub.f32 %v44, %v703
  %v705 = vand.u32 %v704, 4294901760
  %v706 = vsub.f32 %v704, %v705
  %v707 = vand.u32 %v706, 4294901760
  %708 = vmatpush.msra.mxu0 %v707
  %v709 = vand.u32 %v40, 4294901760
  %v710 = vsub.f32 %v40, %v709
  %v711 = vand.u32 %v710, 4294901760
  %v712 = vsub.f32 %v710, %v711
  %v713 = vand.u32 %v712, 4294901760
  %714 = vmatpush.msra.mxu0 %v713
  %v715 = vand.u32 %v36, 4294901760
  %v716 = vsub.f32 %v36, %v715
  %v717 = vand.u32 %v716, 4294901760
  %v718 = vsub.f32 %v716, %v717
  %v719 = vand.u32 %v718, 4294901760
  %720 = vmatpush.msra.mxu0 %v719
  %v721 = vand.u32 %v52, 4294901760
  %722 = vmatmul.f32.gmra.mxu0 %v721
  %v723 = vpop.f32.mrf.mxu0
  %v724 = vadd.f32 %v659, %v723
  %v725 = vand.u32 %v55, 4294901760
  %726 = vmatmul.f32.gmra.mxu0 %v725
  %v727 = vpop.f32.mrf.mxu0
  %v728 = vadd.f32 %v667, %v727
  %v729 = vand.u32 %v58, 4294901760
  %730 = vmatmul.f32.gmra.mxu0 %v729
  %v731 = vpop.f32.mrf.mxu0
  %v732 = vadd.f32 %v675, %v731
  %v733 = vand.u32 %v61, 4294901760
  %734 = vmatmul.f32.gmra.mxu0 %v733
  %v735 = vpop.f32.mrf.mxu0
  %v736 = vadd.f32 %v683, %v735
  %737 = vdwg.mxu0
  %738 = vmatpush.msra.mxu0 0.0
  %739 = vmatpush.msra.mxu0 0.0
  %740 = vmatpush.msra.mxu0 0.0
  %741 = vmatpush.msra.mxu0 0.0
  %742 = vmatpush.msra.mxu0 0.0
  %743 = vmatpush.msra.mxu0 0.0
  %744 = vmatpush.msra.mxu0 0.0
  %745 = vmatpush.msra.mxu0 0.0
  %746 = vmatpush.msra.mxu0 0.0
  %747 = vmatpush.msra.mxu0 0.0
  %748 = vmatpush.msra.mxu0 0.0
  %749 = vmatpush.msra.mxu0 0.0
  %v750 = vand.u32 %v71, 4294901760
  %v751 = vsub.f32 %v71, %v750
  %752 = vmatpush.msra.mxu0 %v751
  %v753 = vand.u32 %v44, 4294901760
  %v754 = vsub.f32 %v44, %v753
  %755 = vmatpush.msra.mxu0 %v754
  %v756 = vand.u32 %v40, 4294901760
  %v757 = vsub.f32 %v40, %v756
  %758 = vmatpush.msra.mxu0 %v757
  %v759 = vand.u32 %v36, 4294901760
  %v760 = vsub.f32 %v36, %v759
  %761 = vmatpush.msra.mxu0 %v760
  %v762 = vand.u32 %v52, 4294901760
  %v763 = vsub.f32 %v52, %v762
  %764 = vmatmul.f32.gmra.mxu0 %v763
  %v765 = vpop.f32.mrf.mxu0
  %v766 = vadd.f32 %v724, %v765
  %v767 = vand.u32 %v55, 4294901760
  %v768 = vsub.f32 %v55, %v767
  %769 = vmatmul.f32.gmra.mxu0 %v768
  %v770 = vpop.f32.mrf.mxu0
  %v771 = vadd.f32 %v728, %v770
  %v772 = vand.u32 %v58, 4294901760
  %v773 = vsub.f32 %v58, %v772
  %774 = vmatmul.f32.gmra.mxu0 %v773
  %v775 = vpop.f32.mrf.mxu0
  %v776 = vadd.f32 %v732, %v775
  %v777 = vand.u32 %v61, 4294901760
  %v778 = vsub.f32 %v61, %v777
  %779 = vmatmul.f32.gmra.mxu0 %v778
  %v780 = vpop.f32.mrf.mxu0
  %v781 = vadd.f32 %v736, %v780
  %782 = vdwg.mxu0
  %783 = vmatpush.msra.mxu0 0.0
  %784 = vmatpush.msra.mxu0 0.0
  %785 = vmatpush.msra.mxu0 0.0
  %786 = vmatpush.msra.mxu0 0.0
  %787 = vmatpush.msra.mxu0 0.0
  %788 = vmatpush.msra.mxu0 0.0
  %789 = vmatpush.msra.mxu0 0.0
  %790 = vmatpush.msra.mxu0 0.0
  %791 = vmatpush.msra.mxu0 0.0
  %792 = vmatpush.msra.mxu0 0.0
  %793 = vmatpush.msra.mxu0 0.0
  %794 = vmatpush.msra.mxu0 0.0
  %v795 = vand.u32 %v71, 4294901760
  %796 = vmatpush.msra.mxu0 %v795
  %v797 = vand.u32 %v44, 4294901760
  %798 = vmatpush.msra.mxu0 %v797
  %v799 = vand.u32 %v40, 4294901760
  %800 = vmatpush.msra.mxu0 %v799
  %v801 = vand.u32 %v36, 4294901760
  %802 = vmatpush.msra.mxu0 %v801
  %v803 = vand.u32 %v52, 4294901760
  %v804 = vsub.f32 %v52, %v803
  %v805 = vand.u32 %v804, 4294901760
  %806 = vmatmul.f32.gmra.mxu0 %v805
  %v807 = vpop.f32.mrf.mxu0
  %v808 = vadd.f32 %v766, %v807
  %v809 = vand.u32 %v55, 4294901760
  %v810 = vsub.f32 %v55, %v809
  %v811 = vand.u32 %v810, 4294901760
  %812 = vmatmul.f32.gmra.mxu0 %v811
  %v813 = vpop.f32.mrf.mxu0
  %v814 = vadd.f32 %v771, %v813
  %v815 = vand.u32 %v58, 4294901760
  %v816 = vsub.f32 %v58, %v815
  %v817 = vand.u32 %v816, 4294901760
  %818 = vmatmul.f32.gmra.mxu0 %v817
  %v819 = vpop.f32.mrf.mxu0
  %v820 = vadd.f32 %v776, %v819
  %v821 = vand.u32 %v61, 4294901760
  %v822 = vsub.f32 %v61, %v821
  %v823 = vand.u32 %v822, 4294901760
  %824 = vmatmul.f32.gmra.mxu0 %v823
  %v825 = vpop.f32.mrf.mxu0
  %v826 = vadd.f32 %v781, %v825
  %827 = vdwg.mxu0
  %828 = vmatpush.msra.mxu0 0.0
  %829 = vmatpush.msra.mxu0 0.0
  %830 = vmatpush.msra.mxu0 0.0
  %831 = vmatpush.msra.mxu0 0.0
  %832 = vmatpush.msra.mxu0 0.0
  %833 = vmatpush.msra.mxu0 0.0
  %834 = vmatpush.msra.mxu0 0.0
  %835 = vmatpush.msra.mxu0 0.0
  %836 = vmatpush.msra.mxu0 0.0
  %837 = vmatpush.msra.mxu0 0.0
  %838 = vmatpush.msra.mxu0 0.0
  %839 = vmatpush.msra.mxu0 0.0
  %v840 = vand.u32 %v71, 4294901760
  %v841 = vsub.f32 %v71, %v840
  %v842 = vand.u32 %v841, 4294901760
  %843 = vmatpush.msra.mxu0 %v842
  %v844 = vand.u32 %v44, 4294901760
  %v845 = vsub.f32 %v44, %v844
  %v846 = vand.u32 %v845, 4294901760
  %847 = vmatpush.msra.mxu0 %v846
  %v848 = vand.u32 %v40, 4294901760
  %v849 = vsub.f32 %v40, %v848
  %v850 = vand.u32 %v849, 4294901760
  %851 = vmatpush.msra.mxu0 %v850
  %v852 = vand.u32 %v36, 4294901760
  %v853 = vsub.f32 %v36, %v852
  %v854 = vand.u32 %v853, 4294901760
  %855 = vmatpush.msra.mxu0 %v854
  %v856 = vand.u32 %v52, 4294901760
  %857 = vmatmul.f32.gmra.mxu0 %v856
  %v858 = vpop.f32.mrf.mxu0
  %v859 = vadd.f32 %v808, %v858
  %v860 = vand.u32 %v55, 4294901760
  %861 = vmatmul.f32.gmra.mxu0 %v860
  %v862 = vpop.f32.mrf.mxu0
  %v863 = vadd.f32 %v814, %v862
  %v864 = vand.u32 %v58, 4294901760
  %865 = vmatmul.f32.gmra.mxu0 %v864
  %v866 = vpop.f32.mrf.mxu0
  %v867 = vadd.f32 %v820, %v866
  %v868 = vand.u32 %v61, 4294901760
  %869 = vmatmul.f32.gmra.mxu0 %v868
  %v870 = vpop.f32.mrf.mxu0
  %v871 = vadd.f32 %v826, %v870
  %872 = vdwg.mxu0
  %873 = vmatpush.msra.mxu0 0.0
  %874 = vmatpush.msra.mxu0 0.0
  %875 = vmatpush.msra.mxu0 0.0
  %876 = vmatpush.msra.mxu0 0.0
  %877 = vmatpush.msra.mxu0 0.0
  %878 = vmatpush.msra.mxu0 0.0
  %879 = vmatpush.msra.mxu0 0.0
  %880 = vmatpush.msra.mxu0 0.0
  %881 = vmatpush.msra.mxu0 0.0
  %882 = vmatpush.msra.mxu0 0.0
  %883 = vmatpush.msra.mxu0 0.0
  %884 = vmatpush.msra.mxu0 0.0
  %v885 = vand.u32 %v71, 4294901760
  %886 = vmatpush.msra.mxu0 %v885
  %v887 = vand.u32 %v44, 4294901760
  %888 = vmatpush.msra.mxu0 %v887
  %v889 = vand.u32 %v40, 4294901760
  %890 = vmatpush.msra.mxu0 %v889
  %v891 = vand.u32 %v36, 4294901760
  %892 = vmatpush.msra.mxu0 %v891
  %v893 = vand.u32 %v52, 4294901760
  %894 = vmatmul.f32.gmra.mxu0 %v893
  %v895 = vpop.f32.mrf.mxu0
  %v896 = vadd.f32 %v859, %v895
  %v897 = vand.u32 %v55, 4294901760
  %898 = vmatmul.f32.gmra.mxu0 %v897
  %v899 = vpop.f32.mrf.mxu0
  %v900 = vadd.f32 %v863, %v899
  %v901 = vand.u32 %v58, 4294901760
  %902 = vmatmul.f32.gmra.mxu0 %v901
  %v903 = vpop.f32.mrf.mxu0
  %v904 = vadd.f32 %v867, %v903
  %v905 = vand.u32 %v61, 4294901760
  %906 = vmatmul.f32.gmra.mxu0 %v905
  %v907 = vpop.f32.mrf.mxu0
  %v908 = vadd.f32 %v871, %v907
  %909 = vdwg.mxu0
  %910 = vmatpush.msra.mxu0 0.0
  %911 = vmatpush.msra.mxu0 0.0
  %912 = vmatpush.msra.mxu0 0.0
  %913 = vmatpush.msra.mxu0 0.0
  %914 = vmatpush.msra.mxu0 0.0
  %915 = vmatpush.msra.mxu0 0.0
  %916 = vmatpush.msra.mxu0 0.0
  %917 = vmatpush.msra.mxu0 0.0
  %918 = vmatpush.msra.mxu0 0.0
  %919 = vmatpush.msra.mxu0 0.0
  %920 = vmatpush.msra.mxu0 0.0
  %921 = vmatpush.msra.mxu0 0.0
  %v922 = vand.u32 %v74, 4294901760
  %923 = vmatpush.msra.mxu0 %v922
  %v924 = vand.u32 %v45, 4294901760
  %925 = vmatpush.msra.mxu0 %v924
  %v926 = vand.u32 %v41, 4294901760
  %927 = vmatpush.msra.mxu0 %v926
  %v928 = vand.u32 %v37, 4294901760
  %929 = vmatpush.msra.mxu0 %v928
  %v930 = vand.u32 %v52, 4294901760
  %v931 = vsub.f32 %v52, %v930
  %v932 = vand.u32 %v931, 4294901760
  %v933 = vsub.f32 %v931, %v932
  %v934 = vand.u32 %v933, 4294901760
  %935 = vmatmul.f32.gmra.mxu0 %v934
  %v936 = vpop.f32.mrf.mxu0
  %v937 = vadd.f32 0.0, %v936
  %v938 = vand.u32 %v55, 4294901760
  %v939 = vsub.f32 %v55, %v938
  %v940 = vand.u32 %v939, 4294901760
  %v941 = vsub.f32 %v939, %v940
  %v942 = vand.u32 %v941, 4294901760
  %943 = vmatmul.f32.gmra.mxu0 %v942
  %v944 = vpop.f32.mrf.mxu0
  %v945 = vadd.f32 0.0, %v944
  %v946 = vand.u32 %v58, 4294901760
  %v947 = vsub.f32 %v58, %v946
  %v948 = vand.u32 %v947, 4294901760
  %v949 = vsub.f32 %v947, %v948
  %v950 = vand.u32 %v949, 4294901760
  %951 = vmatmul.f32.gmra.mxu0 %v950
  %v952 = vpop.f32.mrf.mxu0
  %v953 = vadd.f32 0.0, %v952
  %v954 = vand.u32 %v61, 4294901760
  %v955 = vsub.f32 %v61, %v954
  %v956 = vand.u32 %v955, 4294901760
  %v957 = vsub.f32 %v955, %v956
  %v958 = vand.u32 %v957, 4294901760
  %959 = vmatmul.f32.gmra.mxu0 %v958
  %v960 = vpop.f32.mrf.mxu0
  %v961 = vadd.f32 0.0, %v960
  %962 = vdwg.mxu0
  %963 = vmatpush.msra.mxu0 0.0
  %964 = vmatpush.msra.mxu0 0.0
  %965 = vmatpush.msra.mxu0 0.0
  %966 = vmatpush.msra.mxu0 0.0
  %967 = vmatpush.msra.mxu0 0.0
  %968 = vmatpush.msra.mxu0 0.0
  %969 = vmatpush.msra.mxu0 0.0
  %970 = vmatpush.msra.mxu0 0.0
  %971 = vmatpush.msra.mxu0 0.0
  %972 = vmatpush.msra.mxu0 0.0
  %973 = vmatpush.msra.mxu0 0.0
  %974 = vmatpush.msra.mxu0 0.0
  %v975 = vand.u32 %v74, 4294901760
  %v976 = vsub.f32 %v74, %v975
  %v977 = vand.u32 %v976, 4294901760
  %v978 = vsub.f32 %v976, %v977
  %v979 = vand.u32 %v978, 4294901760
  %980 = vmatpush.msra.mxu0 %v979
  %v981 = vand.u32 %v45, 4294901760
  %v982 = vsub.f32 %v45, %v981
  %v983 = vand.u32 %v982, 4294901760
  %v984 = vsub.f32 %v982, %v983
  %v985 = vand.u32 %v984, 4294901760
  %986 = vmatpush.msra.mxu0 %v985
  %v987 = vand.u32 %v41, 4294901760
  %v988 = vsub.f32 %v41, %v987
  %v989 = vand.u32 %v988, 4294901760
  %v990 = vsub.f32 %v988, %v989
  %v991 = vand.u32 %v990, 4294901760
  %992 = vmatpush.msra.mxu0 %v991
  %v993 = vand.u32 %v37, 4294901760
  %v994 = vsub.f32 %v37, %v993
  %v995 = vand.u32 %v994, 4294901760
  %v996 = vsub.f32 %v994, %v995
  %v997 = vand.u32 %v996, 4294901760
  %998 = vmatpush.msra.mxu0 %v997
  %v999 = vand.u32 %v52, 4294901760
  %1000 = vmatmul.f32.gmra.mxu0 %v999
  %v1001 = vpop.f32.mrf.mxu0
  %v1002 = vadd.f32 %v937, %v1001
  %v1003 = vand.u32 %v55, 4294901760
  %1004 = vmatmul.f32.gmra.mxu0 %v1003
  %v1005 = vpop.f32.mrf.mxu0
  %v1006 = vadd.f32 %v945, %v1005
  %v1007 = vand.u32 %v58, 4294901760
  %1008 = vmatmul.f32.gmra.mxu0 %v1007
  %v1009 = vpop.f32.mrf.mxu0
  %v1010 = vadd.f32 %v953, %v1009
  %v1011 = vand.u32 %v61, 4294901760
  %1012 = vmatmul.f32.gmra.mxu0 %v1011
  %v1013 = vpop.f32.mrf.mxu0
  %v1014 = vadd.f32 %v961, %v1013
  %1015 = vdwg.mxu0
  %1016 = vmatpush.msra.mxu0 0.0
  %1017 = vmatpush.msra.mxu0 0.0
  %1018 = vmatpush.msra.mxu0 0.0
  %1019 = vmatpush.msra.mxu0 0.0
  %1020 = vmatpush.msra.mxu0 0.0
  %1021 = vmatpush.msra.mxu0 0.0
  %1022 = vmatpush.msra.mxu0 0.0
  %1023 = vmatpush.msra.mxu0 0.0
  %1024 = vmatpush.msra.mxu0 0.0
  %1025 = vmatpush.msra.mxu0 0.0
  %1026 = vmatpush.msra.mxu0 0.0
  %1027 = vmatpush.msra.mxu0 0.0
  %v1028 = vand.u32 %v74, 4294901760
  %v1029 = vsub.f32 %v74, %v1028
  %1030 = vmatpush.msra.mxu0 %v1029
  %v1031 = vand.u32 %v45, 4294901760
  %v1032 = vsub.f32 %v45, %v1031
  %1033 = vmatpush.msra.mxu0 %v1032
  %v1034 = vand.u32 %v41, 4294901760
  %v1035 = vsub.f32 %v41, %v1034
  %1036 = vmatpush.msra.mxu0 %v1035
  %v1037 = vand.u32 %v37, 4294901760
  %v1038 = vsub.f32 %v37, %v1037
  %1039 = vmatpush.msra.mxu0 %v1038
  %v1040 = vand.u32 %v52, 4294901760
  %v1041 = vsub.f32 %v52, %v1040
  %1042 = vmatmul.f32.gmra.mxu0 %v1041
  %v1043 = vpop.f32.mrf.mxu0
  %v1044 = vadd.f32 %v1002, %v1043
  %v1045 = vand.u32 %v55, 4294901760
  %v1046 = vsub.f32 %v55, %v1045
  %1047 = vmatmul.f32.gmra.mxu0 %v1046
  %v1048 = vpop.f32.mrf.mxu0
  %v1049 = vadd.f32 %v1006, %v1048
  %v1050 = vand.u32 %v58, 4294901760
  %v1051 = vsub.f32 %v58, %v1050
  %1052 = vmatmul.f32.gmra.mxu0 %v1051
  %v1053 = vpop.f32.mrf.mxu0
  %v1054 = vadd.f32 %v1010, %v1053
  %v1055 = vand.u32 %v61, 4294901760
  %v1056 = vsub.f32 %v61, %v1055
  %1057 = vmatmul.f32.gmra.mxu0 %v1056
  %v1058 = vpop.f32.mrf.mxu0
  %v1059 = vadd.f32 %v1014, %v1058
  %1060 = vdwg.mxu0
  %1061 = vmatpush.msra.mxu0 0.0
  %1062 = vmatpush.msra.mxu0 0.0
  %1063 = vmatpush.msra.mxu0 0.0
  %1064 = vmatpush.msra.mxu0 0.0
  %1065 = vmatpush.msra.mxu0 0.0
  %1066 = vmatpush.msra.mxu0 0.0
  %1067 = vmatpush.msra.mxu0 0.0
  %1068 = vmatpush.msra.mxu0 0.0
  %1069 = vmatpush.msra.mxu0 0.0
  %1070 = vmatpush.msra.mxu0 0.0
  %1071 = vmatpush.msra.mxu0 0.0
  %1072 = vmatpush.msra.mxu0 0.0
  %v1073 = vand.u32 %v74, 4294901760
  %1074 = vmatpush.msra.mxu0 %v1073
  %v1075 = vand.u32 %v45, 4294901760
  %1076 = vmatpush.msra.mxu0 %v1075
  %v1077 = vand.u32 %v41, 4294901760
  %1078 = vmatpush.msra.mxu0 %v1077
  %v1079 = vand.u32 %v37, 4294901760
  %1080 = vmatpush.msra.mxu0 %v1079
  %v1081 = vand.u32 %v52, 4294901760
  %v1082 = vsub.f32 %v52, %v1081
  %v1083 = vand.u32 %v1082, 4294901760
  %1084 = vmatmul.f32.gmra.mxu0 %v1083
  %v1085 = vpop.f32.mrf.mxu0
  %v1086 = vadd.f32 %v1044, %v1085
  %v1087 = vand.u32 %v55, 4294901760
  %v1088 = vsub.f32 %v55, %v1087
  %v1089 = vand.u32 %v1088, 4294901760
  %1090 = vmatmul.f32.gmra.mxu0 %v1089
  %v1091 = vpop.f32.mrf.mxu0
  %v1092 = vadd.f32 %v1049, %v1091
  %v1093 = vand.u32 %v58, 4294901760
  %v1094 = vsub.f32 %v58, %v1093
  %v1095 = vand.u32 %v1094, 4294901760
  %1096 = vmatmul.f32.gmra.mxu0 %v1095
  %v1097 = vpop.f32.mrf.mxu0
  %v1098 = vadd.f32 %v1054, %v1097
  %v1099 = vand.u32 %v61, 4294901760
  %v1100 = vsub.f32 %v61, %v1099
  %v1101 = vand.u32 %v1100, 4294901760
  %1102 = vmatmul.f32.gmra.mxu0 %v1101
  %v1103 = vpop.f32.mrf.mxu0
  %v1104 = vadd.f32 %v1059, %v1103
  %1105 = vdwg.mxu0
  %1106 = vmatpush.msra.mxu0 0.0
  %1107 = vmatpush.msra.mxu0 0.0
  %1108 = vmatpush.msra.mxu0 0.0
  %1109 = vmatpush.msra.mxu0 0.0
  %1110 = vmatpush.msra.mxu0 0.0
  %1111 = vmatpush.msra.mxu0 0.0
  %1112 = vmatpush.msra.mxu0 0.0
  %1113 = vmatpush.msra.mxu0 0.0
  %1114 = vmatpush.msra.mxu0 0.0
  %1115 = vmatpush.msra.mxu0 0.0
  %1116 = vmatpush.msra.mxu0 0.0
  %1117 = vmatpush.msra.mxu0 0.0
  %v1118 = vand.u32 %v74, 4294901760
  %v1119 = vsub.f32 %v74, %v1118
  %v1120 = vand.u32 %v1119, 4294901760
  %1121 = vmatpush.msra.mxu0 %v1120
  %v1122 = vand.u32 %v45, 4294901760
  %v1123 = vsub.f32 %v45, %v1122
  %v1124 = vand.u32 %v1123, 4294901760
  %1125 = vmatpush.msra.mxu0 %v1124
  %v1126 = vand.u32 %v41, 4294901760
  %v1127 = vsub.f32 %v41, %v1126
  %v1128 = vand.u32 %v1127, 4294901760
  %1129 = vmatpush.msra.mxu0 %v1128
  %v1130 = vand.u32 %v37, 4294901760
  %v1131 = vsub.f32 %v37, %v1130
  %v1132 = vand.u32 %v1131, 4294901760
  %1133 = vmatpush.msra.mxu0 %v1132
  %v1134 = vand.u32 %v52, 4294901760
  %1135 = vmatmul.f32.gmra.mxu0 %v1134
  %v1136 = vpop.f32.mrf.mxu0
  %v1137 = vadd.f32 %v1086, %v1136
  %v1138 = vand.u32 %v55, 4294901760
  %1139 = vmatmul.f32.gmra.mxu0 %v1138
  %v1140 = vpop.f32.mrf.mxu0
  %v1141 = vadd.f32 %v1092, %v1140
  %v1142 = vand.u32 %v58, 4294901760
  %1143 = vmatmul.f32.gmra.mxu0 %v1142
  %v1144 = vpop.f32.mrf.mxu0
  %v1145 = vadd.f32 %v1098, %v1144
  %v1146 = vand.u32 %v61, 4294901760
  %1147 = vmatmul.f32.gmra.mxu0 %v1146
  %v1148 = vpop.f32.mrf.mxu0
  %v1149 = vadd.f32 %v1104, %v1148
  %1150 = vdwg.mxu0
  %1151 = vmatpush.msra.mxu0 0.0
  %1152 = vmatpush.msra.mxu0 0.0
  %1153 = vmatpush.msra.mxu0 0.0
  %1154 = vmatpush.msra.mxu0 0.0
  %1155 = vmatpush.msra.mxu0 0.0
  %1156 = vmatpush.msra.mxu0 0.0
  %1157 = vmatpush.msra.mxu0 0.0
  %1158 = vmatpush.msra.mxu0 0.0
  %1159 = vmatpush.msra.mxu0 0.0
  %1160 = vmatpush.msra.mxu0 0.0
  %1161 = vmatpush.msra.mxu0 0.0
  %1162 = vmatpush.msra.mxu0 0.0
  %v1163 = vand.u32 %v74, 4294901760
  %1164 = vmatpush.msra.mxu0 %v1163
  %v1165 = vand.u32 %v45, 4294901760
  %1166 = vmatpush.msra.mxu0 %v1165
  %v1167 = vand.u32 %v41, 4294901760
  %1168 = vmatpush.msra.mxu0 %v1167
  %v1169 = vand.u32 %v37, 4294901760
  %1170 = vmatpush.msra.mxu0 %v1169
  %v1171 = vand.u32 %v52, 4294901760
  %1172 = vmatmul.f32.gmra.mxu0 %v1171
  %v1173 = vpop.f32.mrf.mxu0
  %v1174 = vadd.f32 %v1137, %v1173
  %v1175 = vand.u32 %v55, 4294901760
  %1176 = vmatmul.f32.gmra.mxu0 %v1175
  %v1177 = vpop.f32.mrf.mxu0
  %v1178 = vadd.f32 %v1141, %v1177
  %v1179 = vand.u32 %v58, 4294901760
  %1180 = vmatmul.f32.gmra.mxu0 %v1179
  %v1181 = vpop.f32.mrf.mxu0
  %v1182 = vadd.f32 %v1145, %v1181
  %v1183 = vand.u32 %v61, 4294901760
  %1184 = vmatmul.f32.gmra.mxu0 %v1183
  %v1185 = vpop.f32.mrf.mxu0
  %v1186 = vadd.f32 %v1149, %v1185
  %1187 = vdwg.mxu0
  %1189 = vset.pattern.permute.xlu0 0
  %1190 = vperm.xlu0 %1189, %v26
  %v1191 = vpop.permute.xlu0 %1190
  %1194 = vset.pattern.permute.xlu0 0
  %1195 = vperm.xlu0 %1194, %v27
  %v1196 = vpop.permute.xlu0 %1195
  %1199 = vset.pattern.permute.xlu0 0
  %1200 = vperm.xlu0 %1199, %v28
  %v1201 = vpop.permute.xlu0 %1200
  %1204 = vset.pattern.permute.xlu0 0
  %1205 = vperm.xlu0 %1204, %v29
  %v1206 = vpop.permute.xlu0 %1205
  %v1208 = vadd.f32 %v340, %v1191
  %v1209 = vadd.f32 %v618, %v1191
  %v1210 = vadd.f32 %v896, %v1191
  %v1211 = vadd.f32 %v1174, %v1191
  %v1212 = vadd.f32 %v344, %v1196
  %v1213 = vadd.f32 %v622, %v1196
  %v1214 = vadd.f32 %v900, %v1196
  %v1215 = vadd.f32 %v1178, %v1196
  %v1216 = vadd.f32 %v348, %v1201
  %v1217 = vadd.f32 %v626, %v1201
  %v1218 = vadd.f32 %v904, %v1201
  %v1219 = vadd.f32 %v1182, %v1201
  %v1220 = vadd.f32 %v352, %v1206
  %v1221 = vadd.f32 %v630, %v1206
  %v1222 = vadd.f32 %v908, %v1206
  %v1223 = vadd.f32 %v1186, %v1206
  %1224 = vst [vmem:[%s6] sm:$0xff] %v1208
  %1225 = vst [vmem:[%s6 + $0x8] sm:$0xff] %v1209
  %1226 = vst [vmem:[%s6 + $0x10] sm:$0xff] %v1212
  %1227 = vst [vmem:[%s6 + $0x18] sm:$0xff] %v1213
  %1228 = vst [vmem:[%s6 + $0x20] sm:$0xff] %v1216
  %1229 = vst [vmem:[%s6 + $0x28] sm:$0xff] %v1217
  %1230 = vst [vmem:[%s6 + $0x30] sm:$0xff] %v1220
  %1231 = vst [vmem:[%s6 + $0x38] sm:$0xff] %v1221
  %s1232 = scalar_lea.vmem %s6, 64
  %1233 = vst [vmem:[%s1232] sm:$0xff] %v1210
  %1234 = vst [vmem:[%s1232 + $0x8] sm:$0xff] %v1211
  %1235 = vst [vmem:[%s1232 + $0x10] sm:$0xff] %v1214
  %1236 = vst [vmem:[%s1232 + $0x18] sm:$0xff] %v1215
  %1237 = vst [vmem:[%s1232 + $0x20] sm:$0xff] %v1218
  %1238 = vst [vmem:[%s1232 + $0x28] sm:$0xff] %v1219
  %1239 = vst [vmem:[%s1232 + $0x30] sm:$0xff] %v1222
  %1240 = vst [vmem:[%s1232 + $0x38] sm:$0xff] %v1223
  %v1241 = vld [vmem:[%s1] sm:$0xff]
  %v1242 = vld [vmem:[%s1 + $0x8] sm:$0xff]
  %v1243 = vld [vmem:[%s1 + $0x10] sm:$0xff]
  %v1244 = vld [vmem:[%s1 + $0x18] sm:$0xff]
  %v1245 = vld [vmem:[%s1 + $0x20] sm:$0xff]
  %v1246 = vld [vmem:[%s1 + $0x28] sm:$0xff]
  %v1247 = vld [vmem:[%s1 + $0x30] sm:$0xff]
  %v1248 = vld [vmem:[%s1 + $0x38] sm:$0xff]
  %v1249 = vld [vmem:[%s1 + $0x40] sm:$0xff]
  %v1250 = vld [vmem:[%s1 + $0x48] sm:$0xff]
  %v1251 = vld [vmem:[%s1 + $0x50] sm:$0xff]
  %v1252 = vld [vmem:[%s1 + $0x58] sm:$0xff]
  %v1253 = vld [vmem:[%s1 + $0x60] sm:$0xff]
  %v1254 = vld [vmem:[%s1 + $0x68] sm:$0xff]
  %v1255 = vld [vmem:[%s1 + $0x70] sm:$0xff]
  %v1256 = vld [vmem:[%s1 + $0x78] sm:$0xff]
  %v1257 = vld [vmem:[%s1 + $0x80] sm:$0xff]
  %v1258 = vld [vmem:[%s1 + $0x88] sm:$0xff]
  %v1259 = vld [vmem:[%s1 + $0x90] sm:$0xff]
  %v1260 = vld [vmem:[%s1 + $0x98] sm:$0xff]
  %v1261 = vld [vmem:[%s1 + $0xa0] sm:$0xff]
  %v1262 = vld [vmem:[%s1 + $0xa8] sm:$0xff]
  %v1263 = vld [vmem:[%s1 + $0xb0] sm:$0xff]
  %v1264 = vld [vmem:[%s1 + $0xb8] sm:$0xff]
  %v1265 = vld [vmem:[%s1 + $0xc0] sm:$0xff]
  %v1266 = vld [vmem:[%s1 + $0xc8] sm:$0xff]
  %v1267 = vld [vmem:[%s1 + $0xd0] sm:$0xff]
  %v1268 = vld [vmem:[%s1 + $0xd8] sm:$0xff]
  %v1269 = vld [vmem:[%s1 + $0xe0] sm:$0xff]
  %v1270 = vld [vmem:[%s1 + $0xe8] sm:$0xff]
  %v1271 = vld [vmem:[%s1 + $0xf0] sm:$0xff]
  %v1272 = vld [vmem:[%s1 + $0xf8] sm:$0xff]
  %v1273 = vld [vmem:[%s1 + $0x100] sm:$0xff]
  %v1274 = vld [vmem:[%s1 + $0x108] sm:$0xff]
  %v1275 = vld [vmem:[%s1 + $0x110] sm:$0xff]
  %v1276 = vld [vmem:[%s1 + $0x118] sm:$0xff]
  %v1277 = vld [vmem:[%s1 + $0x120] sm:$0xff]
  %v1278 = vld [vmem:[%s1 + $0x128] sm:$0xff]
  %v1279 = vld [vmem:[%s1 + $0x130] sm:$0xff]
  %v1280 = vld [vmem:[%s1 + $0x138] sm:$0xff]
  %v1281 = vld [vmem:[%s1 + $0x140] sm:$0xff]
  %v1282 = vld [vmem:[%s1 + $0x148] sm:$0xff]
  %v1283 = vld [vmem:[%s1 + $0x150] sm:$0xff]
  %v1284 = vld [vmem:[%s1 + $0x158] sm:$0xff]
  %v1285 = vld [vmem:[%s1 + $0x160] sm:$0xff]
  %v1286 = vld [vmem:[%s1 + $0x168] sm:$0xff]
  %v1287 = vld [vmem:[%s1 + $0x170] sm:$0xff]
  %v1288 = vld [vmem:[%s1 + $0x178] sm:$0xff]
  %v1289 = vld [vmem:[%s1 + $0x180] sm:$0xff]
  %v1290 = vld [vmem:[%s1 + $0x188] sm:$0xff]
  %v1291 = vld [vmem:[%s1 + $0x190] sm:$0xff]
  %v1292 = vld [vmem:[%s1 + $0x198] sm:$0xff]
  %v1293 = vld [vmem:[%s1 + $0x1a0] sm:$0xff]
  %v1294 = vld [vmem:[%s1 + $0x1a8] sm:$0xff]
  %v1295 = vld [vmem:[%s1 + $0x1b0] sm:$0xff]
  %v1296 = vld [vmem:[%s1 + $0x1b8] sm:$0xff]
  %v1297 = vld [vmem:[%s1 + $0x1c0] sm:$0xff]
  %v1298 = vld [vmem:[%s1 + $0x1c8] sm:$0xff]
  %v1299 = vld [vmem:[%s1 + $0x1d0] sm:$0xff]
  %v1300 = vld [vmem:[%s1 + $0x1d8] sm:$0xff]
  %v1301 = vld [vmem:[%s1 + $0x1e0] sm:$0xff]
  %v1302 = vld [vmem:[%s1 + $0x1e8] sm:$0xff]
  %v1303 = vld [vmem:[%s1 + $0x1f0] sm:$0xff]
  %v1304 = vld [vmem:[%s1 + $0x1f8] sm:$0xff]
  %v1305 = vand.u32 %v1256, 4294901760
  %1306 = vmatpush.msra.mxu0 %v1305
  %v1307 = vand.u32 %v1255, 4294901760
  %1308 = vmatpush.msra.mxu0 %v1307
  %v1309 = vand.u32 %v1254, 4294901760
  %1310 = vmatpush.msra.mxu0 %v1309
  %v1311 = vand.u32 %v1253, 4294901760
  %1312 = vmatpush.msra.mxu0 %v1311
  %v1313 = vand.u32 %v1252, 4294901760
  %1314 = vmatpush.msra.mxu0 %v1313
  %v1315 = vand.u32 %v1251, 4294901760
  %1316 = vmatpush.msra.mxu0 %v1315
  %v1317 = vand.u32 %v1250, 4294901760
  %1318 = vmatpush.msra.mxu0 %v1317
  %v1319 = vand.u32 %v1249, 4294901760
  %1320 = vmatpush.msra.mxu0 %v1319
  %v1321 = vand.u32 %v1248, 4294901760
  %1322 = vmatpush.msra.mxu0 %v1321
  %v1323 = vand.u32 %v1247, 4294901760
  %1324 = vmatpush.msra.mxu0 %v1323
  %v1325 = vand.u32 %v1246, 4294901760
  %1326 = vmatpush.msra.mxu0 %v1325
  %v1327 = vand.u32 %v1245, 4294901760
  %1328 = vmatpush.msra.mxu0 %v1327
  %v1329 = vand.u32 %v1244, 4294901760
  %1330 = vmatpush.msra.mxu0 %v1329
  %v1331 = vand.u32 %v1243, 4294901760
  %1332 = vmatpush.msra.mxu0 %v1331
  %v1333 = vand.u32 %v1242, 4294901760
  %1334 = vmatpush.msra.mxu0 %v1333
  %v1335 = vand.u32 %v1241, 4294901760
  %1336 = vmatpush.msra.mxu0 %v1335
  %v1337 = vand.u32 %v340, 4294901760
  %v1338 = vsub.f32 %v340, %v1337
  %v1339 = vand.u32 %v1338, 4294901760
  %v1340 = vsub.f32 %v1338, %v1339
  %v1341 = vand.u32 %v1340, 4294901760
  %1342 = vmatmul.f32.gmra.mxu0 %v1341
  %v1343 = vpop.f32.mrf.mxu0
  %v1344 = vadd.f32 %v1191, %v1343
  %v1345 = vand.u32 %v344, 4294901760
  %v1346 = vsub.f32 %v344, %v1345
  %v1347 = vand.u32 %v1346, 4294901760
  %v1348 = vsub.f32 %v1346, %v1347
  %v1349 = vand.u32 %v1348, 4294901760
  %1350 = vmatmul.f32.gmra.mxu0 %v1349
  %v1351 = vpop.f32.mrf.mxu0
  %v1352 = vadd.f32 %v1196, %v1351
  %v1353 = vand.u32 %v348, 4294901760
  %v1354 = vsub.f32 %v348, %v1353
  %v1355 = vand.u32 %v1354, 4294901760
  %v1356 = vsub.f32 %v1354, %v1355
  %v1357 = vand.u32 %v1356, 4294901760
  %1358 = vmatmul.f32.gmra.mxu0 %v1357
  %v1359 = vpop.f32.mrf.mxu0
  %v1360 = vadd.f32 %v1201, %v1359
  %v1361 = vand.u32 %v352, 4294901760
  %v1362 = vsub.f32 %v352, %v1361
  %v1363 = vand.u32 %v1362, 4294901760
  %v1364 = vsub.f32 %v1362, %v1363
  %v1365 = vand.u32 %v1364, 4294901760
  %1366 = vmatmul.f32.gmra.mxu0 %v1365
  %v1367 = vpop.f32.mrf.mxu0
  %v1368 = vadd.f32 %v1206, %v1367
  %1369 = vdwg.mxu0
  %v1370 = vand.u32 %v1256, 4294901760
  %v1371 = vsub.f32 %v1256, %v1370
  %v1372 = vand.u32 %v1371, 4294901760
  %v1373 = vsub.f32 %v1371, %v1372
  %v1374 = vand.u32 %v1373, 4294901760
  %1375 = vmatpush.msra.mxu0 %v1374
  %v1376 = vand.u32 %v1255, 4294901760
  %v1377 = vsub.f32 %v1255, %v1376
  %v1378 = vand.u32 %v1377, 4294901760
  %v1379 = vsub.f32 %v1377, %v1378
  %v1380 = vand.u32 %v1379, 4294901760
  %1381 = vmatpush.msra.mxu0 %v1380
  %v1382 = vand.u32 %v1254, 4294901760
  %v1383 = vsub.f32 %v1254, %v1382
  %v1384 = vand.u32 %v1383, 4294901760
  %v1385 = vsub.f32 %v1383, %v1384
  %v1386 = vand.u32 %v1385, 4294901760
  %1387 = vmatpush.msra.mxu0 %v1386
  %v1388 = vand.u32 %v1253, 4294901760
  %v1389 = vsub.f32 %v1253, %v1388
  %v1390 = vand.u32 %v1389, 4294901760
  %v1391 = vsub.f32 %v1389, %v1390
  %v1392 = vand.u32 %v1391, 4294901760
  %1393 = vmatpush.msra.mxu0 %v1392
  %v1394 = vand.u32 %v1252, 4294901760
  %v1395 = vsub.f32 %v1252, %v1394
  %v1396 = vand.u32 %v1395, 4294901760
  %v1397 = vsub.f32 %v1395, %v1396
  %v1398 = vand.u32 %v1397, 4294901760
  %1399 = vmatpush.msra.mxu0 %v1398
  %v1400 = vand.u32 %v1251, 4294901760
  %v1401 = vsub.f32 %v1251, %v1400
  %v1402 = vand.u32 %v1401, 4294901760
  %v1403 = vsub.f32 %v1401, %v1402
  %v1404 = vand.u32 %v1403, 4294901760
  %1405 = vmatpush.msra.mxu0 %v1404
  %v1406 = vand.u32 %v1250, 4294901760
  %v1407 = vsub.f32 %v1250, %v1406
  %v1408 = vand.u32 %v1407, 4294901760
  %v1409 = vsub.f32 %v1407, %v1408
  %v1410 = vand.u32 %v1409, 4294901760
  %1411 = vmatpush.msra.mxu0 %v1410
  %v1412 = vand.u32 %v1249, 4294901760
  %v1413 = vsub.f32 %v1249, %v1412
  %v1414 = vand.u32 %v1413, 4294901760
  %v1415 = vsub.f32 %v1413, %v1414
  %v1416 = vand.u32 %v1415, 4294901760
  %1417 = vmatpush.msra.mxu0 %v1416
  %v1418 = vand.u32 %v1248, 4294901760
  %v1419 = vsub.f32 %v1248, %v1418
  %v1420 = vand.u32 %v1419, 4294901760
  %v1421 = vsub.f32 %v1419, %v1420
  %v1422 = vand.u32 %v1421, 4294901760
  %1423 = vmatpush.msra.mxu0 %v1422
  %v1424 = vand.u32 %v1247, 4294901760
  %v1425 = vsub.f32 %v1247, %v1424
  %v1426 = vand.u32 %v1425, 4294901760
  %v1427 = vsub.f32 %v1425, %v1426
  %v1428 = vand.u32 %v1427, 4294901760
  %1429 = vmatpush.msra.mxu0 %v1428
  %v1430 = vand.u32 %v1246, 4294901760
  %v1431 = vsub.f32 %v1246, %v1430
  %v1432 = vand.u32 %v1431, 4294901760
  %v1433 = vsub.f32 %v1431, %v1432
  %v1434 = vand.u32 %v1433, 4294901760
  %1435 = vmatpush.msra.mxu0 %v1434
  %v1436 = vand.u32 %v1245, 4294901760
  %v1437 = vsub.f32 %v1245, %v1436
  %v1438 = vand.u32 %v1437, 4294901760
  %v1439 = vsub.f32 %v1437, %v1438
  %v1440 = vand.u32 %v1439, 4294901760
  %1441 = vmatpush.msra.mxu0 %v1440
  %v1442 = vand.u32 %v1244, 4294901760
  %v1443 = vsub.f32 %v1244, %v1442
  %v1444 = vand.u32 %v1443, 4294901760
  %v1445 = vsub.f32 %v1443, %v1444
  %v1446 = vand.u32 %v1445, 4294901760
  %1447 = vmatpush.msra.mxu0 %v1446
  %v1448 = vand.u32 %v1243, 4294901760
  %v1449 = vsub.f32 %v1243, %v1448
  %v1450 = vand.u32 %v1449, 4294901760
  %v1451 = vsub.f32 %v1449, %v1450
  %v1452 = vand.u32 %v1451, 4294901760
  %1453 = vmatpush.msra.mxu0 %v1452
  %v1454 = vand.u32 %v1242, 4294901760
  %v1455 = vsub.f32 %v1242, %v1454
  %v1456 = vand.u32 %v1455, 4294901760
  %v1457 = vsub.f32 %v1455, %v1456
  %v1458 = vand.u32 %v1457, 4294901760
  %1459 = vmatpush.msra.mxu0 %v1458
  %v1460 = vand.u32 %v1241, 4294901760
  %v1461 = vsub.f32 %v1241, %v1460
  %v1462 = vand.u32 %v1461, 4294901760
  %v1463 = vsub.f32 %v1461, %v1462
  %v1464 = vand.u32 %v1463, 4294901760
  %1465 = vmatpush.msra.mxu0 %v1464
  %v1466 = vand.u32 %v340, 4294901760
  %1467 = vmatmul.f32.gmra.mxu0 %v1466
  %v1468 = vpop.f32.mrf.mxu0
  %v1469 = vadd.f32 %v1344, %v1468
  %v1470 = vand.u32 %v344, 4294901760
  %1471 = vmatmul.f32.gmra.mxu0 %v1470
  %v1472 = vpop.f32.mrf.mxu0
  %v1473 = vadd.f32 %v1352, %v1472
  %v1474 = vand.u32 %v348, 4294901760
  %1475 = vmatmul.f32.gmra.mxu0 %v1474
  %v1476 = vpop.f32.mrf.mxu0
  %v1477 = vadd.f32 %v1360, %v1476
  %v1478 = vand.u32 %v352, 4294901760
  %1479 = vmatmul.f32.gmra.mxu0 %v1478
  %v1480 = vpop.f32.mrf.mxu0
  %v1481 = vadd.f32 %v1368, %v1480
  %1482 = vdwg.mxu0
  %v1483 = vand.u32 %v1256, 4294901760
  %v1484 = vsub.f32 %v1256, %v1483
  %1485 = vmatpush.msra.mxu0 %v1484
  %v1486 = vand.u32 %v1255, 4294901760
  %v1487 = vsub.f32 %v1255, %v1486
  %1488 = vmatpush.msra.mxu0 %v1487
  %v1489 = vand.u32 %v1254, 4294901760
  %v1490 = vsub.f32 %v1254, %v1489
  %1491 = vmatpush.msra.mxu0 %v1490
  %v1492 = vand.u32 %v1253, 4294901760
  %v1493 = vsub.f32 %v1253, %v1492
  %1494 = vmatpush.msra.mxu0 %v1493
  %v1495 = vand.u32 %v1252, 4294901760
  %v1496 = vsub.f32 %v1252, %v1495
  %1497 = vmatpush.msra.mxu0 %v1496
  %v1498 = vand.u32 %v1251, 4294901760
  %v1499 = vsub.f32 %v1251, %v1498
  %1500 = vmatpush.msra.mxu0 %v1499
  %v1501 = vand.u32 %v1250, 4294901760
  %v1502 = vsub.f32 %v1250, %v1501
  %1503 = vmatpush.msra.mxu0 %v1502
  %v1504 = vand.u32 %v1249, 4294901760
  %v1505 = vsub.f32 %v1249, %v1504
  %1506 = vmatpush.msra.mxu0 %v1505
  %v1507 = vand.u32 %v1248, 4294901760
  %v1508 = vsub.f32 %v1248, %v1507
  %1509 = vmatpush.msra.mxu0 %v1508
  %v1510 = vand.u32 %v1247, 4294901760
  %v1511 = vsub.f32 %v1247, %v1510
  %1512 = vmatpush.msra.mxu0 %v1511
  %v1513 = vand.u32 %v1246, 4294901760
  %v1514 = vsub.f32 %v1246, %v1513
  %1515 = vmatpush.msra.mxu0 %v1514
  %v1516 = vand.u32 %v1245, 4294901760
  %v1517 = vsub.f32 %v1245, %v1516
  %1518 = vmatpush.msra.mxu0 %v1517
  %v1519 = vand.u32 %v1244, 4294901760
  %v1520 = vsub.f32 %v1244, %v1519
  %1521 = vmatpush.msra.mxu0 %v1520
  %v1522 = vand.u32 %v1243, 4294901760
  %v1523 = vsub.f32 %v1243, %v1522
  %1524 = vmatpush.msra.mxu0 %v1523
  %v1525 = vand.u32 %v1242, 4294901760
  %v1526 = vsub.f32 %v1242, %v1525
  %1527 = vmatpush.msra.mxu0 %v1526
  %v1528 = vand.u32 %v1241, 4294901760
  %v1529 = vsub.f32 %v1241, %v1528
  %1530 = vmatpush.msra.mxu0 %v1529
  %v1531 = vand.u32 %v340, 4294901760
  %v1532 = vsub.f32 %v340, %v1531
  %1533 = vmatmul.f32.gmra.mxu0 %v1532
  %v1534 = vpop.f32.mrf.mxu0
  %v1535 = vadd.f32 %v1469, %v1534
  %v1536 = vand.u32 %v344, 4294901760
  %v1537 = vsub.f32 %v344, %v1536
  %1538 = vmatmul.f32.gmra.mxu0 %v1537
  %v1539 = vpop.f32.mrf.mxu0
  %v1540 = vadd.f32 %v1473, %v1539
  %v1541 = vand.u32 %v348, 4294901760
  %v1542 = vsub.f32 %v348, %v1541
  %1543 = vmatmul.f32.gmra.mxu0 %v1542
  %v1544 = vpop.f32.mrf.mxu0
  %v1545 = vadd.f32 %v1477, %v1544
  %v1546 = vand.u32 %v352, 4294901760
  %v1547 = vsub.f32 %v352, %v1546
  %1548 = vmatmul.f32.gmra.mxu0 %v1547
  %v1549 = vpop.f32.mrf.mxu0
  %v1550 = vadd.f32 %v1481, %v1549
  %1551 = vdwg.mxu0
  %v1552 = vand.u32 %v1256, 4294901760
  %1553 = vmatpush.msra.mxu0 %v1552
  %v1554 = vand.u32 %v1255, 4294901760
  %1555 = vmatpush.msra.mxu0 %v1554
  %v1556 = vand.u32 %v1254, 4294901760
  %1557 = vmatpush.msra.mxu0 %v1556
  %v1558 = vand.u32 %v1253, 4294901760
  %1559 = vmatpush.msra.mxu0 %v1558
  %v1560 = vand.u32 %v1252, 4294901760
  %1561 = vmatpush.msra.mxu0 %v1560
  %v1562 = vand.u32 %v1251, 4294901760
  %1563 = vmatpush.msra.mxu0 %v1562
  %v1564 = vand.u32 %v1250, 4294901760
  %1565 = vmatpush.msra.mxu0 %v1564
  %v1566 = vand.u32 %v1249, 4294901760
  %1567 = vmatpush.msra.mxu0 %v1566
  %v1568 = vand.u32 %v1248, 4294901760
  %1569 = vmatpush.msra.mxu0 %v1568
  %v1570 = vand.u32 %v1247, 4294901760
  %1571 = vmatpush.msra.mxu0 %v1570
  %v1572 = vand.u32 %v1246, 4294901760
  %1573 = vmatpush.msra.mxu0 %v1572
  %v1574 = vand.u32 %v1245, 4294901760
  %1575 = vmatpush.msra.mxu0 %v1574
  %v1576 = vand.u32 %v1244, 4294901760
  %1577 = vmatpush.msra.mxu0 %v1576
  %v1578 = vand.u32 %v1243, 4294901760
  %1579 = vmatpush.msra.mxu0 %v1578
  %v1580 = vand.u32 %v1242, 4294901760
  %1581 = vmatpush.msra.mxu0 %v1580
  %v1582 = vand.u32 %v1241, 4294901760
  %1583 = vmatpush.msra.mxu0 %v1582
  %v1584 = vand.u32 %v340, 4294901760
  %v1585 = vsub.f32 %v340, %v1584
  %v1586 = vand.u32 %v1585, 4294901760
  %1587 = vmatmul.f32.gmra.mxu0 %v1586
  %v1588 = vpop.f32.mrf.mxu0
  %v1589 = vadd.f32 %v1535, %v1588
  %v1590 = vand.u32 %v344, 4294901760
  %v1591 = vsub.f32 %v344, %v1590
  %v1592 = vand.u32 %v1591, 4294901760
  %1593 = vmatmul.f32.gmra.mxu0 %v1592
  %v1594 = vpop.f32.mrf.mxu0
  %v1595 = vadd.f32 %v1540, %v1594
  %v1596 = vand.u32 %v348, 4294901760
  %v1597 = vsub.f32 %v348, %v1596
  %v1598 = vand.u32 %v1597, 4294901760
  %1599 = vmatmul.f32.gmra.mxu0 %v1598
  %v1600 = vpop.f32.mrf.mxu0
  %v1601 = vadd.f32 %v1545, %v1600
  %v1602 = vand.u32 %v352, 4294901760
  %v1603 = vsub.f32 %v352, %v1602
  %v1604 = vand.u32 %v1603, 4294901760
  %1605 = vmatmul.f32.gmra.mxu0 %v1604
  %v1606 = vpop.f32.mrf.mxu0
  %v1607 = vadd.f32 %v1550, %v1606
  %1608 = vdwg.mxu0
  %v1609 = vand.u32 %v1256, 4294901760
  %v1610 = vsub.f32 %v1256, %v1609
  %v1611 = vand.u32 %v1610, 4294901760
  %1612 = vmatpush.msra.mxu0 %v1611
  %v1613 = vand.u32 %v1255, 4294901760
  %v1614 = vsub.f32 %v1255, %v1613
  %v1615 = vand.u32 %v1614, 4294901760
  %1616 = vmatpush.msra.mxu0 %v1615
  %v1617 = vand.u32 %v1254, 4294901760
  %v1618 = vsub.f32 %v1254, %v1617
  %v1619 = vand.u32 %v1618, 4294901760
  %1620 = vmatpush.msra.mxu0 %v1619
  %v1621 = vand.u32 %v1253, 4294901760
  %v1622 = vsub.f32 %v1253, %v1621
  %v1623 = vand.u32 %v1622, 4294901760
  %1624 = vmatpush.msra.mxu0 %v1623
  %v1625 = vand.u32 %v1252, 4294901760
  %v1626 = vsub.f32 %v1252, %v1625
  %v1627 = vand.u32 %v1626, 4294901760
  %1628 = vmatpush.msra.mxu0 %v1627
  %v1629 = vand.u32 %v1251, 4294901760
  %v1630 = vsub.f32 %v1251, %v1629
  %v1631 = vand.u32 %v1630, 4294901760
  %1632 = vmatpush.msra.mxu0 %v1631
  %v1633 = vand.u32 %v1250, 4294901760
  %v1634 = vsub.f32 %v1250, %v1633
  %v1635 = vand.u32 %v1634, 4294901760
  %1636 = vmatpush.msra.mxu0 %v1635
  %v1637 = vand.u32 %v1249, 4294901760
  %v1638 = vsub.f32 %v1249, %v1637
  %v1639 = vand.u32 %v1638, 4294901760
  %1640 = vmatpush.msra.mxu0 %v1639
  %v1641 = vand.u32 %v1248, 4294901760
  %v1642 = vsub.f32 %v1248, %v1641
  %v1643 = vand.u32 %v1642, 4294901760
  %1644 = vmatpush.msra.mxu0 %v1643
  %v1645 = vand.u32 %v1247, 4294901760
  %v1646 = vsub.f32 %v1247, %v1645
  %v1647 = vand.u32 %v1646, 4294901760
  %1648 = vmatpush.msra.mxu0 %v1647
  %v1649 = vand.u32 %v1246, 4294901760
  %v1650 = vsub.f32 %v1246, %v1649
  %v1651 = vand.u32 %v1650, 4294901760
  %1652 = vmatpush.msra.mxu0 %v1651
  %v1653 = vand.u32 %v1245, 4294901760
  %v1654 = vsub.f32 %v1245, %v1653
  %v1655 = vand.u32 %v1654, 4294901760
  %1656 = vmatpush.msra.mxu0 %v1655
  %v1657 = vand.u32 %v1244, 4294901760
  %v1658 = vsub.f32 %v1244, %v1657
  %v1659 = vand.u32 %v1658, 4294901760
  %1660 = vmatpush.msra.mxu0 %v1659
  %v1661 = vand.u32 %v1243, 4294901760
  %v1662 = vsub.f32 %v1243, %v1661
  %v1663 = vand.u32 %v1662, 4294901760
  %1664 = vmatpush.msra.mxu0 %v1663
  %v1665 = vand.u32 %v1242, 4294901760
  %v1666 = vsub.f32 %v1242, %v1665
  %v1667 = vand.u32 %v1666, 4294901760
  %1668 = vmatpush.msra.mxu0 %v1667
  %v1669 = vand.u32 %v1241, 4294901760
  %v1670 = vsub.f32 %v1241, %v1669
  %v1671 = vand.u32 %v1670, 4294901760
  %1672 = vmatpush.msra.mxu0 %v1671
  %v1673 = vand.u32 %v340, 4294901760
  %1674 = vmatmul.f32.gmra.mxu0 %v1673
  %v1675 = vpop.f32.mrf.mxu0
  %v1676 = vadd.f32 %v1589, %v1675
  %v1677 = vand.u32 %v344, 4294901760
  %1678 = vmatmul.f32.gmra.mxu0 %v1677
  %v1679 = vpop.f32.mrf.mxu0
  %v1680 = vadd.f32 %v1595, %v1679
  %v1681 = vand.u32 %v348, 4294901760
  %1682 = vmatmul.f32.gmra.mxu0 %v1681
  %v1683 = vpop.f32.mrf.mxu0
  %v1684 = vadd.f32 %v1601, %v1683
  %v1685 = vand.u32 %v352, 4294901760
  %1686 = vmatmul.f32.gmra.mxu0 %v1685
  %v1687 = vpop.f32.mrf.mxu0
  %v1688 = vadd.f32 %v1607, %v1687
  %1689 = vdwg.mxu0
  %v1690 = vand.u32 %v1256, 4294901760
  %1691 = vmatpush.msra.mxu0 %v1690
  %v1692 = vand.u32 %v1255, 4294901760
  %1693 = vmatpush.msra.mxu0 %v1692
  %v1694 = vand.u32 %v1254, 4294901760
  %1695 = vmatpush.msra.mxu0 %v1694
  %v1696 = vand.u32 %v1253, 4294901760
  %1697 = vmatpush.msra.mxu0 %v1696
  %v1698 = vand.u32 %v1252, 4294901760
  %1699 = vmatpush.msra.mxu0 %v1698
  %v1700 = vand.u32 %v1251, 4294901760
  %1701 = vmatpush.msra.mxu0 %v1700
  %v1702 = vand.u32 %v1250, 4294901760
  %1703 = vmatpush.msra.mxu0 %v1702
  %v1704 = vand.u32 %v1249, 4294901760
  %1705 = vmatpush.msra.mxu0 %v1704
  %v1706 = vand.u32 %v1248, 4294901760
  %1707 = vmatpush.msra.mxu0 %v1706
  %v1708 = vand.u32 %v1247, 4294901760
  %1709 = vmatpush.msra.mxu0 %v1708
  %v1710 = vand.u32 %v1246, 4294901760
  %1711 = vmatpush.msra.mxu0 %v1710
  %v1712 = vand.u32 %v1245, 4294901760
  %1713 = vmatpush.msra.mxu0 %v1712
  %v1714 = vand.u32 %v1244, 4294901760
  %1715 = vmatpush.msra.mxu0 %v1714
  %v1716 = vand.u32 %v1243, 4294901760
  %1717 = vmatpush.msra.mxu0 %v1716
  %v1718 = vand.u32 %v1242, 4294901760
  %1719 = vmatpush.msra.mxu0 %v1718
  %v1720 = vand.u32 %v1241, 4294901760
  %1721 = vmatpush.msra.mxu0 %v1720
  %v1722 = vand.u32 %v340, 4294901760
  %1723 = vmatmul.f32.gmra.mxu0 %v1722
  %v1724 = vpop.f32.mrf.mxu0
  %v1725 = vadd.f32 %v1676, %v1724
  %v1726 = vand.u32 %v344, 4294901760
  %1727 = vmatmul.f32.gmra.mxu0 %v1726
  %v1728 = vpop.f32.mrf.mxu0
  %v1729 = vadd.f32 %v1680, %v1728
  %v1730 = vand.u32 %v348, 4294901760
  %1731 = vmatmul.f32.gmra.mxu0 %v1730
  %v1732 = vpop.f32.mrf.mxu0
  %v1733 = vadd.f32 %v1684, %v1732
  %v1734 = vand.u32 %v352, 4294901760
  %1735 = vmatmul.f32.gmra.mxu0 %v1734
  %v1736 = vpop.f32.mrf.mxu0
  %v1737 = vadd.f32 %v1688, %v1736
  %1738 = vdwg.mxu0
  %v1739 = vand.u32 %v1272, 4294901760
  %1740 = vmatpush.msra.mxu0 %v1739
  %v1741 = vand.u32 %v1271, 4294901760
  %1742 = vmatpush.msra.mxu0 %v1741
  %v1743 = vand.u32 %v1270, 4294901760
  %1744 = vmatpush.msra.mxu0 %v1743
  %v1745 = vand.u32 %v1269, 4294901760
  %1746 = vmatpush.msra.mxu0 %v1745
  %v1747 = vand.u32 %v1268, 4294901760
  %1748 = vmatpush.msra.mxu0 %v1747
  %v1749 = vand.u32 %v1267, 4294901760
  %1750 = vmatpush.msra.mxu0 %v1749
  %v1751 = vand.u32 %v1266, 4294901760
  %1752 = vmatpush.msra.mxu0 %v1751
  %v1753 = vand.u32 %v1265, 4294901760
  %1754 = vmatpush.msra.mxu0 %v1753
  %v1755 = vand.u32 %v1264, 4294901760
  %1756 = vmatpush.msra.mxu0 %v1755
  %v1757 = vand.u32 %v1263, 4294901760
  %1758 = vmatpush.msra.mxu0 %v1757
  %v1759 = vand.u32 %v1262, 4294901760
  %1760 = vmatpush.msra.mxu0 %v1759
  %v1761 = vand.u32 %v1261, 4294901760
  %1762 = vmatpush.msra.mxu0 %v1761
  %v1763 = vand.u32 %v1260, 4294901760
  %1764 = vmatpush.msra.mxu0 %v1763
  %v1765 = vand.u32 %v1259, 4294901760
  %1766 = vmatpush.msra.mxu0 %v1765
  %v1767 = vand.u32 %v1258, 4294901760
  %1768 = vmatpush.msra.mxu0 %v1767
  %v1769 = vand.u32 %v1257, 4294901760
  %1770 = vmatpush.msra.mxu0 %v1769
  %v1771 = vand.u32 %v618, 4294901760
  %v1772 = vsub.f32 %v618, %v1771
  %v1773 = vand.u32 %v1772, 4294901760
  %v1774 = vsub.f32 %v1772, %v1773
  %v1775 = vand.u32 %v1774, 4294901760
  %1776 = vmatmul.f32.gmra.mxu0 %v1775
  %v1777 = vpop.f32.mrf.mxu0
  %v1778 = vadd.f32 %v1725, %v1777
  %v1779 = vand.u32 %v622, 4294901760
  %v1780 = vsub.f32 %v622, %v1779
  %v1781 = vand.u32 %v1780, 4294901760
  %v1782 = vsub.f32 %v1780, %v1781
  %v1783 = vand.u32 %v1782, 4294901760
  %1784 = vmatmul.f32.gmra.mxu0 %v1783
  %v1785 = vpop.f32.mrf.mxu0
  %v1786 = vadd.f32 %v1729, %v1785
  %v1787 = vand.u32 %v626, 4294901760
  %v1788 = vsub.f32 %v626, %v1787
  %v1789 = vand.u32 %v1788, 4294901760
  %v1790 = vsub.f32 %v1788, %v1789
  %v1791 = vand.u32 %v1790, 4294901760
  %1792 = vmatmul.f32.gmra.mxu0 %v1791
  %v1793 = vpop.f32.mrf.mxu0
  %v1794 = vadd.f32 %v1733, %v1793
  %v1795 = vand.u32 %v630, 4294901760
  %v1796 = vsub.f32 %v630, %v1795
  %v1797 = vand.u32 %v1796, 4294901760
  %v1798 = vsub.f32 %v1796, %v1797
  %v1799 = vand.u32 %v1798, 4294901760
  %1800 = vmatmul.f32.gmra.mxu0 %v1799
  %v1801 = vpop.f32.mrf.mxu0
  %v1802 = vadd.f32 %v1737, %v1801
  %1803 = vdwg.mxu0
  %v1804 = vand.u32 %v1272, 4294901760
  %v1805 = vsub.f32 %v1272, %v1804
  %v1806 = vand.u32 %v1805, 4294901760
  %v1807 = vsub.f32 %v1805, %v1806
  %v1808 = vand.u32 %v1807, 4294901760
  %1809 = vmatpush.msra.mxu0 %v1808
  %v1810 = vand.u32 %v1271, 4294901760
  %v1811 = vsub.f32 %v1271, %v1810
  %v1812 = vand.u32 %v1811, 4294901760
  %v1813 = vsub.f32 %v1811, %v1812
  %v1814 = vand.u32 %v1813, 4294901760
  %1815 = vmatpush.msra.mxu0 %v1814
  %v1816 = vand.u32 %v1270, 4294901760
  %v1817 = vsub.f32 %v1270, %v1816
  %v1818 = vand.u32 %v1817, 4294901760
  %v1819 = vsub.f32 %v1817, %v1818
  %v1820 = vand.u32 %v1819, 4294901760
  %1821 = vmatpush.msra.mxu0 %v1820
  %v1822 = vand.u32 %v1269, 4294901760
  %v1823 = vsub.f32 %v1269, %v1822
  %v1824 = vand.u32 %v1823, 4294901760
  %v1825 = vsub.f32 %v1823, %v1824
  %v1826 = vand.u32 %v1825, 4294901760
  %1827 = vmatpush.msra.mxu0 %v1826
  %v1828 = vand.u32 %v1268, 4294901760
  %v1829 = vsub.f32 %v1268, %v1828
  %v1830 = vand.u32 %v1829, 4294901760
  %v1831 = vsub.f32 %v1829, %v1830
  %v1832 = vand.u32 %v1831, 4294901760
  %1833 = vmatpush.msra.mxu0 %v1832
  %v1834 = vand.u32 %v1267, 4294901760
  %v1835 = vsub.f32 %v1267, %v1834
  %v1836 = vand.u32 %v1835, 4294901760
  %v1837 = vsub.f32 %v1835, %v1836
  %v1838 = vand.u32 %v1837, 4294901760
  %1839 = vmatpush.msra.mxu0 %v1838
  %v1840 = vand.u32 %v1266, 4294901760
  %v1841 = vsub.f32 %v1266, %v1840
  %v1842 = vand.u32 %v1841, 4294901760
  %v1843 = vsub.f32 %v1841, %v1842
  %v1844 = vand.u32 %v1843, 4294901760
  %1845 = vmatpush.msra.mxu0 %v1844
  %v1846 = vand.u32 %v1265, 4294901760
  %v1847 = vsub.f32 %v1265, %v1846
  %v1848 = vand.u32 %v1847, 4294901760
  %v1849 = vsub.f32 %v1847, %v1848
  %v1850 = vand.u32 %v1849, 4294901760
  %1851 = vmatpush.msra.mxu0 %v1850
  %v1852 = vand.u32 %v1264, 4294901760
  %v1853 = vsub.f32 %v1264, %v1852
  %v1854 = vand.u32 %v1853, 4294901760
  %v1855 = vsub.f32 %v1853, %v1854
  %v1856 = vand.u32 %v1855, 4294901760
  %1857 = vmatpush.msra.mxu0 %v1856
  %v1858 = vand.u32 %v1263, 4294901760
  %v1859 = vsub.f32 %v1263, %v1858
  %v1860 = vand.u32 %v1859, 4294901760
  %v1861 = vsub.f32 %v1859, %v1860
  %v1862 = vand.u32 %v1861, 4294901760
  %1863 = vmatpush.msra.mxu0 %v1862
  %v1864 = vand.u32 %v1262, 4294901760
  %v1865 = vsub.f32 %v1262, %v1864
  %v1866 = vand.u32 %v1865, 4294901760
  %v1867 = vsub.f32 %v1865, %v1866
  %v1868 = vand.u32 %v1867, 4294901760
  %1869 = vmatpush.msra.mxu0 %v1868
  %v1870 = vand.u32 %v1261, 4294901760
  %v1871 = vsub.f32 %v1261, %v1870
  %v1872 = vand.u32 %v1871, 4294901760
  %v1873 = vsub.f32 %v1871, %v1872
  %v1874 = vand.u32 %v1873, 4294901760
  %1875 = vmatpush.msra.mxu0 %v1874
  %v1876 = vand.u32 %v1260, 4294901760
  %v1877 = vsub.f32 %v1260, %v1876
  %v1878 = vand.u32 %v1877, 4294901760
  %v1879 = vsub.f32 %v1877, %v1878
  %v1880 = vand.u32 %v1879, 4294901760
  %1881 = vmatpush.msra.mxu0 %v1880
  %v1882 = vand.u32 %v1259, 4294901760
  %v1883 = vsub.f32 %v1259, %v1882
  %v1884 = vand.u32 %v1883, 4294901760
  %v1885 = vsub.f32 %v1883, %v1884
  %v1886 = vand.u32 %v1885, 4294901760
  %1887 = vmatpush.msra.mxu0 %v1886
  %v1888 = vand.u32 %v1258, 4294901760
  %v1889 = vsub.f32 %v1258, %v1888
  %v1890 = vand.u32 %v1889, 4294901760
  %v1891 = vsub.f32 %v1889, %v1890
  %v1892 = vand.u32 %v1891, 4294901760
  %1893 = vmatpush.msra.mxu0 %v1892
  %v1894 = vand.u32 %v1257, 4294901760
  %v1895 = vsub.f32 %v1257, %v1894
  %v1896 = vand.u32 %v1895, 4294901760
  %v1897 = vsub.f32 %v1895, %v1896
  %v1898 = vand.u32 %v1897, 4294901760
  %1899 = vmatpush.msra.mxu0 %v1898
  %v1900 = vand.u32 %v618, 4294901760
  %1901 = vmatmul.f32.gmra.mxu0 %v1900
  %v1902 = vpop.f32.mrf.mxu0
  %v1903 = vadd.f32 %v1778, %v1902
  %v1904 = vand.u32 %v622, 4294901760
  %1905 = vmatmul.f32.gmra.mxu0 %v1904
  %v1906 = vpop.f32.mrf.mxu0
  %v1907 = vadd.f32 %v1786, %v1906
  %v1908 = vand.u32 %v626, 4294901760
  %1909 = vmatmul.f32.gmra.mxu0 %v1908
  %v1910 = vpop.f32.mrf.mxu0
  %v1911 = vadd.f32 %v1794, %v1910
  %v1912 = vand.u32 %v630, 4294901760
  %1913 = vmatmul.f32.gmra.mxu0 %v1912
  %v1914 = vpop.f32.mrf.mxu0
  %v1915 = vadd.f32 %v1802, %v1914
  %1916 = vdwg.mxu0
  %v1917 = vand.u32 %v1272, 4294901760
  %v1918 = vsub.f32 %v1272, %v1917
  %1919 = vmatpush.msra.mxu0 %v1918
  %v1920 = vand.u32 %v1271, 4294901760
  %v1921 = vsub.f32 %v1271, %v1920
  %1922 = vmatpush.msra.mxu0 %v1921
  %v1923 = vand.u32 %v1270, 4294901760
  %v1924 = vsub.f32 %v1270, %v1923
  %1925 = vmatpush.msra.mxu0 %v1924
  %v1926 = vand.u32 %v1269, 4294901760
  %v1927 = vsub.f32 %v1269, %v1926
  %1928 = vmatpush.msra.mxu0 %v1927
  %v1929 = vand.u32 %v1268, 4294901760
  %v1930 = vsub.f32 %v1268, %v1929
  %1931 = vmatpush.msra.mxu0 %v1930
  %v1932 = vand.u32 %v1267, 4294901760
  %v1933 = vsub.f32 %v1267, %v1932
  %1934 = vmatpush.msra.mxu0 %v1933
  %v1935 = vand.u32 %v1266, 4294901760
  %v1936 = vsub.f32 %v1266, %v1935
  %1937 = vmatpush.msra.mxu0 %v1936
  %v1938 = vand.u32 %v1265, 4294901760
  %v1939 = vsub.f32 %v1265, %v1938
  %1940 = vmatpush.msra.mxu0 %v1939
  %v1941 = vand.u32 %v1264, 4294901760
  %v1942 = vsub.f32 %v1264, %v1941
  %1943 = vmatpush.msra.mxu0 %v1942
  %v1944 = vand.u32 %v1263, 4294901760
  %v1945 = vsub.f32 %v1263, %v1944
  %1946 = vmatpush.msra.mxu0 %v1945
  %v1947 = vand.u32 %v1262, 4294901760
  %v1948 = vsub.f32 %v1262, %v1947
  %1949 = vmatpush.msra.mxu0 %v1948
  %v1950 = vand.u32 %v1261, 4294901760
  %v1951 = vsub.f32 %v1261, %v1950
  %1952 = vmatpush.msra.mxu0 %v1951
  %v1953 = vand.u32 %v1260, 4294901760
  %v1954 = vsub.f32 %v1260, %v1953
  %1955 = vmatpush.msra.mxu0 %v1954
  %v1956 = vand.u32 %v1259, 4294901760
  %v1957 = vsub.f32 %v1259, %v1956
  %1958 = vmatpush.msra.mxu0 %v1957
  %v1959 = vand.u32 %v1258, 4294901760
  %v1960 = vsub.f32 %v1258, %v1959
  %1961 = vmatpush.msra.mxu0 %v1960
  %v1962 = vand.u32 %v1257, 4294901760
  %v1963 = vsub.f32 %v1257, %v1962
  %1964 = vmatpush.msra.mxu0 %v1963
  %v1965 = vand.u32 %v618, 4294901760
  %v1966 = vsub.f32 %v618, %v1965
  %1967 = vmatmul.f32.gmra.mxu0 %v1966
  %v1968 = vpop.f32.mrf.mxu0
  %v1969 = vadd.f32 %v1903, %v1968
  %v1970 = vand.u32 %v622, 4294901760
  %v1971 = vsub.f32 %v622, %v1970
  %1972 = vmatmul.f32.gmra.mxu0 %v1971
  %v1973 = vpop.f32.mrf.mxu0
  %v1974 = vadd.f32 %v1907, %v1973
  %v1975 = vand.u32 %v626, 4294901760
  %v1976 = vsub.f32 %v626, %v1975
  %1977 = vmatmul.f32.gmra.mxu0 %v1976
  %v1978 = vpop.f32.mrf.mxu0
  %v1979 = vadd.f32 %v1911, %v1978
  %v1980 = vand.u32 %v630, 4294901760
  %v1981 = vsub.f32 %v630, %v1980
  %1982 = vmatmul.f32.gmra.mxu0 %v1981
  %v1983 = vpop.f32.mrf.mxu0
  %v1984 = vadd.f32 %v1915, %v1983
  %1985 = vdwg.mxu0
  %v1986 = vand.u32 %v1272, 4294901760
  %1987 = vmatpush.msra.mxu0 %v1986
  %v1988 = vand.u32 %v1271, 4294901760
  %1989 = vmatpush.msra.mxu0 %v1988
  %v1990 = vand.u32 %v1270, 4294901760
  %1991 = vmatpush.msra.mxu0 %v1990
  %v1992 = vand.u32 %v1269, 4294901760
  %1993 = vmatpush.msra.mxu0 %v1992
  %v1994 = vand.u32 %v1268, 4294901760
  %1995 = vmatpush.msra.mxu0 %v1994
  %v1996 = vand.u32 %v1267, 4294901760
  %1997 = vmatpush.msra.mxu0 %v1996
  %v1998 = vand.u32 %v1266, 4294901760
  %1999 = vmatpush.msra.mxu0 %v1998
  %v2000 = vand.u32 %v1265, 4294901760
  %2001 = vmatpush.msra.mxu0 %v2000
  %v2002 = vand.u32 %v1264, 4294901760
  %2003 = vmatpush.msra.mxu0 %v2002
  %v2004 = vand.u32 %v1263, 4294901760
  %2005 = vmatpush.msra.mxu0 %v2004
  %v2006 = vand.u32 %v1262, 4294901760
  %2007 = vmatpush.msra.mxu0 %v2006
  %v2008 = vand.u32 %v1261, 4294901760
  %2009 = vmatpush.msra.mxu0 %v2008
  %v2010 = vand.u32 %v1260, 4294901760
  %2011 = vmatpush.msra.mxu0 %v2010
  %v2012 = vand.u32 %v1259, 4294901760
  %2013 = vmatpush.msra.mxu0 %v2012
  %v2014 = vand.u32 %v1258, 4294901760
  %2015 = vmatpush.msra.mxu0 %v2014
  %v2016 = vand.u32 %v1257, 4294901760
  %2017 = vmatpush.msra.mxu0 %v2016
  %v2018 = vand.u32 %v618, 4294901760
  %v2019 = vsub.f32 %v618, %v2018
  %v2020 = vand.u32 %v2019, 4294901760
  %2021 = vmatmul.f32.gmra.mxu0 %v2020
  %v2022 = vpop.f32.mrf.mxu0
  %v2023 = vadd.f32 %v1969, %v2022
  %v2024 = vand.u32 %v622, 4294901760
  %v2025 = vsub.f32 %v622, %v2024
  %v2026 = vand.u32 %v2025, 4294901760
  %2027 = vmatmul.f32.gmra.mxu0 %v2026
  %v2028 = vpop.f32.mrf.mxu0
  %v2029 = vadd.f32 %v1974, %v2028
  %v2030 = vand.u32 %v626, 4294901760
  %v2031 = vsub.f32 %v626, %v2030
  %v2032 = vand.u32 %v2031, 4294901760
  %2033 = vmatmul.f32.gmra.mxu0 %v2032
  %v2034 = vpop.f32.mrf.mxu0
  %v2035 = vadd.f32 %v1979, %v2034
  %v2036 = vand.u32 %v630, 4294901760
  %v2037 = vsub.f32 %v630, %v2036
  %v2038 = vand.u32 %v2037, 4294901760
  %2039 = vmatmul.f32.gmra.mxu0 %v2038
  %v2040 = vpop.f32.mrf.mxu0
  %v2041 = vadd.f32 %v1984, %v2040
  %2042 = vdwg.mxu0
  %v2043 = vand.u32 %v1272, 4294901760
  %v2044 = vsub.f32 %v1272, %v2043
  %v2045 = vand.u32 %v2044, 4294901760
  %2046 = vmatpush.msra.mxu0 %v2045
  %v2047 = vand.u32 %v1271, 4294901760
  %v2048 = vsub.f32 %v1271, %v2047
  %v2049 = vand.u32 %v2048, 4294901760
  %2050 = vmatpush.msra.mxu0 %v2049
  %v2051 = vand.u32 %v1270, 4294901760
  %v2052 = vsub.f32 %v1270, %v2051
  %v2053 = vand.u32 %v2052, 4294901760
  %2054 = vmatpush.msra.mxu0 %v2053
  %v2055 = vand.u32 %v1269, 4294901760
  %v2056 = vsub.f32 %v1269, %v2055
  %v2057 = vand.u32 %v2056, 4294901760
  %2058 = vmatpush.msra.mxu0 %v2057
  %v2059 = vand.u32 %v1268, 4294901760
  %v2060 = vsub.f32 %v1268, %v2059
  %v2061 = vand.u32 %v2060, 4294901760
  %2062 = vmatpush.msra.mxu0 %v2061
  %v2063 = vand.u32 %v1267, 4294901760
  %v2064 = vsub.f32 %v1267, %v2063
  %v2065 = vand.u32 %v2064, 4294901760
  %2066 = vmatpush.msra.mxu0 %v2065
  %v2067 = vand.u32 %v1266, 4294901760
  %v2068 = vsub.f32 %v1266, %v2067
  %v2069 = vand.u32 %v2068, 4294901760
  %2070 = vmatpush.msra.mxu0 %v2069
  %v2071 = vand.u32 %v1265, 4294901760
  %v2072 = vsub.f32 %v1265, %v2071
  %v2073 = vand.u32 %v2072, 4294901760
  %2074 = vmatpush.msra.mxu0 %v2073
  %v2075 = vand.u32 %v1264, 4294901760
  %v2076 = vsub.f32 %v1264, %v2075
  %v2077 = vand.u32 %v2076, 4294901760
  %2078 = vmatpush.msra.mxu0 %v2077
  %v2079 = vand.u32 %v1263, 4294901760
  %v2080 = vsub.f32 %v1263, %v2079
  %v2081 = vand.u32 %v2080, 4294901760
  %2082 = vmatpush.msra.mxu0 %v2081
  %v2083 = vand.u32 %v1262, 4294901760
  %v2084 = vsub.f32 %v1262, %v2083
  %v2085 = vand.u32 %v2084, 4294901760
  %2086 = vmatpush.msra.mxu0 %v2085
  %v2087 = vand.u32 %v1261, 4294901760
  %v2088 = vsub.f32 %v1261, %v2087
  %v2089 = vand.u32 %v2088, 4294901760
  %2090 = vmatpush.msra.mxu0 %v2089
  %v2091 = vand.u32 %v1260, 4294901760
  %v2092 = vsub.f32 %v1260, %v2091
  %v2093 = vand.u32 %v2092, 4294901760
  %2094 = vmatpush.msra.mxu0 %v2093
  %v2095 = vand.u32 %v1259, 4294901760
  %v2096 = vsub.f32 %v1259, %v2095
  %v2097 = vand.u32 %v2096, 4294901760
  %2098 = vmatpush.msra.mxu0 %v2097
  %v2099 = vand.u32 %v1258, 4294901760
  %v2100 = vsub.f32 %v1258, %v2099
  %v2101 = vand.u32 %v2100, 4294901760
  %2102 = vmatpush.msra.mxu0 %v2101
  %v2103 = vand.u32 %v1257, 4294901760
  %v2104 = vsub.f32 %v1257, %v2103
  %v2105 = vand.u32 %v2104, 4294901760
  %2106 = vmatpush.msra.mxu0 %v2105
  %v2107 = vand.u32 %v618, 4294901760
  %2108 = vmatmul.f32.gmra.mxu0 %v2107
  %v2109 = vpop.f32.mrf.mxu0
  %v2110 = vadd.f32 %v2023, %v2109
  %v2111 = vand.u32 %v622, 4294901760
  %2112 = vmatmul.f32.gmra.mxu0 %v2111
  %v2113 = vpop.f32.mrf.mxu0
  %v2114 = vadd.f32 %v2029, %v2113
  %v2115 = vand.u32 %v626, 4294901760
  %2116 = vmatmul.f32.gmra.mxu0 %v2115
  %v2117 = vpop.f32.mrf.mxu0
  %v2118 = vadd.f32 %v2035, %v2117
  %v2119 = vand.u32 %v630, 4294901760
  %2120 = vmatmul.f32.gmra.mxu0 %v2119
  %v2121 = vpop.f32.mrf.mxu0
  %v2122 = vadd.f32 %v2041, %v2121
  %2123 = vdwg.mxu0
  %v2124 = vand.u32 %v1272, 4294901760
  %2125 = vmatpush.msra.mxu0 %v2124
  %v2126 = vand.u32 %v1271, 4294901760
  %2127 = vmatpush.msra.mxu0 %v2126
  %v2128 = vand.u32 %v1270, 4294901760
  %2129 = vmatpush.msra.mxu0 %v2128
  %v2130 = vand.u32 %v1269, 4294901760
  %2131 = vmatpush.msra.mxu0 %v2130
  %v2132 = vand.u32 %v1268, 4294901760
  %2133 = vmatpush.msra.mxu0 %v2132
  %v2134 = vand.u32 %v1267, 4294901760
  %2135 = vmatpush.msra.mxu0 %v2134
  %v2136 = vand.u32 %v1266, 4294901760
  %2137 = vmatpush.msra.mxu0 %v2136
  %v2138 = vand.u32 %v1265, 4294901760
  %2139 = vmatpush.msra.mxu0 %v2138
  %v2140 = vand.u32 %v1264, 4294901760
  %2141 = vmatpush.msra.mxu0 %v2140
  %v2142 = vand.u32 %v1263, 4294901760
  %2143 = vmatpush.msra.mxu0 %v2142
  %v2144 = vand.u32 %v1262, 4294901760
  %2145 = vmatpush.msra.mxu0 %v2144
  %v2146 = vand.u32 %v1261, 4294901760
  %2147 = vmatpush.msra.mxu0 %v2146
  %v2148 = vand.u32 %v1260, 4294901760
  %2149 = vmatpush.msra.mxu0 %v2148
  %v2150 = vand.u32 %v1259, 4294901760
  %2151 = vmatpush.msra.mxu0 %v2150
  %v2152 = vand.u32 %v1258, 4294901760
  %2153 = vmatpush.msra.mxu0 %v2152
  %v2154 = vand.u32 %v1257, 4294901760
  %2155 = vmatpush.msra.mxu0 %v2154
  %v2156 = vand.u32 %v618, 4294901760
  %2157 = vmatmul.f32.gmra.mxu0 %v2156
  %v2158 = vpop.f32.mrf.mxu0
  %v2159 = vadd.f32 %v2110, %v2158
  %v2160 = vand.u32 %v622, 4294901760
  %2161 = vmatmul.f32.gmra.mxu0 %v2160
  %v2162 = vpop.f32.mrf.mxu0
  %v2163 = vadd.f32 %v2114, %v2162
  %v2164 = vand.u32 %v626, 4294901760
  %2165 = vmatmul.f32.gmra.mxu0 %v2164
  %v2166 = vpop.f32.mrf.mxu0
  %v2167 = vadd.f32 %v2118, %v2166
  %v2168 = vand.u32 %v630, 4294901760
  %2169 = vmatmul.f32.gmra.mxu0 %v2168
  %v2170 = vpop.f32.mrf.mxu0
  %v2171 = vadd.f32 %v2122, %v2170
  %2172 = vdwg.mxu0
  %v2173 = vand.u32 %v1288, 4294901760
  %2174 = vmatpush.msra.mxu0 %v2173
  %v2175 = vand.u32 %v1287, 4294901760
  %2176 = vmatpush.msra.mxu0 %v2175
  %v2177 = vand.u32 %v1286, 4294901760
  %2178 = vmatpush.msra.mxu0 %v2177
  %v2179 = vand.u32 %v1285, 4294901760
  %2180 = vmatpush.msra.mxu0 %v2179
  %v2181 = vand.u32 %v1284, 4294901760
  %2182 = vmatpush.msra.mxu0 %v2181
  %v2183 = vand.u32 %v1283, 4294901760
  %2184 = vmatpush.msra.mxu0 %v2183
  %v2185 = vand.u32 %v1282, 4294901760
  %2186 = vmatpush.msra.mxu0 %v2185
  %v2187 = vand.u32 %v1281, 4294901760
  %2188 = vmatpush.msra.mxu0 %v2187
  %v2189 = vand.u32 %v1280, 4294901760
  %2190 = vmatpush.msra.mxu0 %v2189
  %v2191 = vand.u32 %v1279, 4294901760
  %2192 = vmatpush.msra.mxu0 %v2191
  %v2193 = vand.u32 %v1278, 4294901760
  %2194 = vmatpush.msra.mxu0 %v2193
  %v2195 = vand.u32 %v1277, 4294901760
  %2196 = vmatpush.msra.mxu0 %v2195
  %v2197 = vand.u32 %v1276, 4294901760
  %2198 = vmatpush.msra.mxu0 %v2197
  %v2199 = vand.u32 %v1275, 4294901760
  %2200 = vmatpush.msra.mxu0 %v2199
  %v2201 = vand.u32 %v1274, 4294901760
  %2202 = vmatpush.msra.mxu0 %v2201
  %v2203 = vand.u32 %v1273, 4294901760
  %2204 = vmatpush.msra.mxu0 %v2203
  %v2205 = vand.u32 %v896, 4294901760
  %v2206 = vsub.f32 %v896, %v2205
  %v2207 = vand.u32 %v2206, 4294901760
  %v2208 = vsub.f32 %v2206, %v2207
  %v2209 = vand.u32 %v2208, 4294901760
  %2210 = vmatmul.f32.gmra.mxu0 %v2209
  %v2211 = vpop.f32.mrf.mxu0
  %v2212 = vadd.f32 %v2159, %v2211
  %v2213 = vand.u32 %v900, 4294901760
  %v2214 = vsub.f32 %v900, %v2213
  %v2215 = vand.u32 %v2214, 4294901760
  %v2216 = vsub.f32 %v2214, %v2215
  %v2217 = vand.u32 %v2216, 4294901760
  %2218 = vmatmul.f32.gmra.mxu0 %v2217
  %v2219 = vpop.f32.mrf.mxu0
  %v2220 = vadd.f32 %v2163, %v2219
  %v2221 = vand.u32 %v904, 4294901760
  %v2222 = vsub.f32 %v904, %v2221
  %v2223 = vand.u32 %v2222, 4294901760
  %v2224 = vsub.f32 %v2222, %v2223
  %v2225 = vand.u32 %v2224, 4294901760
  %2226 = vmatmul.f32.gmra.mxu0 %v2225
  %v2227 = vpop.f32.mrf.mxu0
  %v2228 = vadd.f32 %v2167, %v2227
  %v2229 = vand.u32 %v908, 4294901760
  %v2230 = vsub.f32 %v908, %v2229
  %v2231 = vand.u32 %v2230, 4294901760
  %v2232 = vsub.f32 %v2230, %v2231
  %v2233 = vand.u32 %v2232, 4294901760
  %2234 = vmatmul.f32.gmra.mxu0 %v2233
  %v2235 = vpop.f32.mrf.mxu0
  %v2236 = vadd.f32 %v2171, %v2235
  %2237 = vdwg.mxu0
  %v2238 = vand.u32 %v1288, 4294901760
  %v2239 = vsub.f32 %v1288, %v2238
  %v2240 = vand.u32 %v2239, 4294901760
  %v2241 = vsub.f32 %v2239, %v2240
  %v2242 = vand.u32 %v2241, 4294901760
  %2243 = vmatpush.msra.mxu0 %v2242
  %v2244 = vand.u32 %v1287, 4294901760
  %v2245 = vsub.f32 %v1287, %v2244
  %v2246 = vand.u32 %v2245, 4294901760
  %v2247 = vsub.f32 %v2245, %v2246
  %v2248 = vand.u32 %v2247, 4294901760
  %2249 = vmatpush.msra.mxu0 %v2248
  %v2250 = vand.u32 %v1286, 4294901760
  %v2251 = vsub.f32 %v1286, %v2250
  %v2252 = vand.u32 %v2251, 4294901760
  %v2253 = vsub.f32 %v2251, %v2252
  %v2254 = vand.u32 %v2253, 4294901760
  %2255 = vmatpush.msra.mxu0 %v2254
  %v2256 = vand.u32 %v1285, 4294901760
  %v2257 = vsub.f32 %v1285, %v2256
  %v2258 = vand.u32 %v2257, 4294901760
  %v2259 = vsub.f32 %v2257, %v2258
  %v2260 = vand.u32 %v2259, 4294901760
  %2261 = vmatpush.msra.mxu0 %v2260
  %v2262 = vand.u32 %v1284, 4294901760
  %v2263 = vsub.f32 %v1284, %v2262
  %v2264 = vand.u32 %v2263, 4294901760
  %v2265 = vsub.f32 %v2263, %v2264
  %v2266 = vand.u32 %v2265, 4294901760
  %2267 = vmatpush.msra.mxu0 %v2266
  %v2268 = vand.u32 %v1283, 4294901760
  %v2269 = vsub.f32 %v1283, %v2268
  %v2270 = vand.u32 %v2269, 4294901760
  %v2271 = vsub.f32 %v2269, %v2270
  %v2272 = vand.u32 %v2271, 4294901760
  %2273 = vmatpush.msra.mxu0 %v2272
  %v2274 = vand.u32 %v1282, 4294901760
  %v2275 = vsub.f32 %v1282, %v2274
  %v2276 = vand.u32 %v2275, 4294901760
  %v2277 = vsub.f32 %v2275, %v2276
  %v2278 = vand.u32 %v2277, 4294901760
  %2279 = vmatpush.msra.mxu0 %v2278
  %v2280 = vand.u32 %v1281, 4294901760
  %v2281 = vsub.f32 %v1281, %v2280
  %v2282 = vand.u32 %v2281, 4294901760
  %v2283 = vsub.f32 %v2281, %v2282
  %v2284 = vand.u32 %v2283, 4294901760
  %2285 = vmatpush.msra.mxu0 %v2284
  %v2286 = vand.u32 %v1280, 4294901760
  %v2287 = vsub.f32 %v1280, %v2286
  %v2288 = vand.u32 %v2287, 4294901760
  %v2289 = vsub.f32 %v2287, %v2288
  %v2290 = vand.u32 %v2289, 4294901760
  %2291 = vmatpush.msra.mxu0 %v2290
  %v2292 = vand.u32 %v1279, 4294901760
  %v2293 = vsub.f32 %v1279, %v2292
  %v2294 = vand.u32 %v2293, 4294901760
  %v2295 = vsub.f32 %v2293, %v2294
  %v2296 = vand.u32 %v2295, 4294901760
  %2297 = vmatpush.msra.mxu0 %v2296
  %v2298 = vand.u32 %v1278, 4294901760
  %v2299 = vsub.f32 %v1278, %v2298
  %v2300 = vand.u32 %v2299, 4294901760
  %v2301 = vsub.f32 %v2299, %v2300
  %v2302 = vand.u32 %v2301, 4294901760
  %2303 = vmatpush.msra.mxu0 %v2302
  %v2304 = vand.u32 %v1277, 4294901760
  %v2305 = vsub.f32 %v1277, %v2304
  %v2306 = vand.u32 %v2305, 4294901760
  %v2307 = vsub.f32 %v2305, %v2306
  %v2308 = vand.u32 %v2307, 4294901760
  %2309 = vmatpush.msra.mxu0 %v2308
  %v2310 = vand.u32 %v1276, 4294901760
  %v2311 = vsub.f32 %v1276, %v2310
  %v2312 = vand.u32 %v2311, 4294901760
  %v2313 = vsub.f32 %v2311, %v2312
  %v2314 = vand.u32 %v2313, 4294901760
  %2315 = vmatpush.msra.mxu0 %v2314
  %v2316 = vand.u32 %v1275, 4294901760
  %v2317 = vsub.f32 %v1275, %v2316
  %v2318 = vand.u32 %v2317, 4294901760
  %v2319 = vsub.f32 %v2317, %v2318
  %v2320 = vand.u32 %v2319, 4294901760
  %2321 = vmatpush.msra.mxu0 %v2320
  %v2322 = vand.u32 %v1274, 4294901760
  %v2323 = vsub.f32 %v1274, %v2322
  %v2324 = vand.u32 %v2323, 4294901760
  %v2325 = vsub.f32 %v2323, %v2324
  %v2326 = vand.u32 %v2325, 4294901760
  %2327 = vmatpush.msra.mxu0 %v2326
  %v2328 = vand.u32 %v1273, 4294901760
  %v2329 = vsub.f32 %v1273, %v2328
  %v2330 = vand.u32 %v2329, 4294901760
  %v2331 = vsub.f32 %v2329, %v2330
  %v2332 = vand.u32 %v2331, 4294901760
  %2333 = vmatpush.msra.mxu0 %v2332
  %v2334 = vand.u32 %v896, 4294901760
  %2335 = vmatmul.f32.gmra.mxu0 %v2334
  %v2336 = vpop.f32.mrf.mxu0
  %v2337 = vadd.f32 %v2212, %v2336
  %v2338 = vand.u32 %v900, 4294901760
  %2339 = vmatmul.f32.gmra.mxu0 %v2338
  %v2340 = vpop.f32.mrf.mxu0
  %v2341 = vadd.f32 %v2220, %v2340
  %v2342 = vand.u32 %v904, 4294901760
  %2343 = vmatmul.f32.gmra.mxu0 %v2342
  %v2344 = vpop.f32.mrf.mxu0
  %v2345 = vadd.f32 %v2228, %v2344
  %v2346 = vand.u32 %v908, 4294901760
  %2347 = vmatmul.f32.gmra.mxu0 %v2346
  %v2348 = vpop.f32.mrf.mxu0
  %v2349 = vadd.f32 %v2236, %v2348
  %2350 = vdwg.mxu0
  %v2351 = vand.u32 %v1288, 4294901760
  %v2352 = vsub.f32 %v1288, %v2351
  %2353 = vmatpush.msra.mxu0 %v2352
  %v2354 = vand.u32 %v1287, 4294901760
  %v2355 = vsub.f32 %v1287, %v2354
  %2356 = vmatpush.msra.mxu0 %v2355
  %v2357 = vand.u32 %v1286, 4294901760
  %v2358 = vsub.f32 %v1286, %v2357
  %2359 = vmatpush.msra.mxu0 %v2358
  %v2360 = vand.u32 %v1285, 4294901760
  %v2361 = vsub.f32 %v1285, %v2360
  %2362 = vmatpush.msra.mxu0 %v2361
  %v2363 = vand.u32 %v1284, 4294901760
  %v2364 = vsub.f32 %v1284, %v2363
  %2365 = vmatpush.msra.mxu0 %v2364
  %v2366 = vand.u32 %v1283, 4294901760
  %v2367 = vsub.f32 %v1283, %v2366
  %2368 = vmatpush.msra.mxu0 %v2367
  %v2369 = vand.u32 %v1282, 4294901760
  %v2370 = vsub.f32 %v1282, %v2369
  %2371 = vmatpush.msra.mxu0 %v2370
  %v2372 = vand.u32 %v1281, 4294901760
  %v2373 = vsub.f32 %v1281, %v2372
  %2374 = vmatpush.msra.mxu0 %v2373
  %v2375 = vand.u32 %v1280, 4294901760
  %v2376 = vsub.f32 %v1280, %v2375
  %2377 = vmatpush.msra.mxu0 %v2376
  %v2378 = vand.u32 %v1279, 4294901760
  %v2379 = vsub.f32 %v1279, %v2378
  %2380 = vmatpush.msra.mxu0 %v2379
  %v2381 = vand.u32 %v1278, 4294901760
  %v2382 = vsub.f32 %v1278, %v2381
  %2383 = vmatpush.msra.mxu0 %v2382
  %v2384 = vand.u32 %v1277, 4294901760
  %v2385 = vsub.f32 %v1277, %v2384
  %2386 = vmatpush.msra.mxu0 %v2385
  %v2387 = vand.u32 %v1276, 4294901760
  %v2388 = vsub.f32 %v1276, %v2387
  %2389 = vmatpush.msra.mxu0 %v2388
  %v2390 = vand.u32 %v1275, 4294901760
  %v2391 = vsub.f32 %v1275, %v2390
  %2392 = vmatpush.msra.mxu0 %v2391
  %v2393 = vand.u32 %v1274, 4294901760
  %v2394 = vsub.f32 %v1274, %v2393
  %2395 = vmatpush.msra.mxu0 %v2394
  %v2396 = vand.u32 %v1273, 4294901760
  %v2397 = vsub.f32 %v1273, %v2396
  %2398 = vmatpush.msra.mxu0 %v2397
  %v2399 = vand.u32 %v896, 4294901760
  %v2400 = vsub.f32 %v896, %v2399
  %2401 = vmatmul.f32.gmra.mxu0 %v2400
  %v2402 = vpop.f32.mrf.mxu0
  %v2403 = vadd.f32 %v2337, %v2402
  %v2404 = vand.u32 %v900, 4294901760
  %v2405 = vsub.f32 %v900, %v2404
  %2406 = vmatmul.f32.gmra.mxu0 %v2405
  %v2407 = vpop.f32.mrf.mxu0
  %v2408 = vadd.f32 %v2341, %v2407
  %v2409 = vand.u32 %v904, 4294901760
  %v2410 = vsub.f32 %v904, %v2409
  %2411 = vmatmul.f32.gmra.mxu0 %v2410
  %v2412 = vpop.f32.mrf.mxu0
  %v2413 = vadd.f32 %v2345, %v2412
  %v2414 = vand.u32 %v908, 4294901760
  %v2415 = vsub.f32 %v908, %v2414
  %2416 = vmatmul.f32.gmra.mxu0 %v2415
  %v2417 = vpop.f32.mrf.mxu0
  %v2418 = vadd.f32 %v2349, %v2417
  %2419 = vdwg.mxu0
  %v2420 = vand.u32 %v1288, 4294901760
  %2421 = vmatpush.msra.mxu0 %v2420
  %v2422 = vand.u32 %v1287, 4294901760
  %2423 = vmatpush.msra.mxu0 %v2422
  %v2424 = vand.u32 %v1286, 4294901760
  %2425 = vmatpush.msra.mxu0 %v2424
  %v2426 = vand.u32 %v1285, 4294901760
  %2427 = vmatpush.msra.mxu0 %v2426
  %v2428 = vand.u32 %v1284, 4294901760
  %2429 = vmatpush.msra.mxu0 %v2428
  %v2430 = vand.u32 %v1283, 4294901760
  %2431 = vmatpush.msra.mxu0 %v2430
  %v2432 = vand.u32 %v1282, 4294901760
  %2433 = vmatpush.msra.mxu0 %v2432
  %v2434 = vand.u32 %v1281, 4294901760
  %2435 = vmatpush.msra.mxu0 %v2434
  %v2436 = vand.u32 %v1280, 4294901760
  %2437 = vmatpush.msra.mxu0 %v2436
  %v2438 = vand.u32 %v1279, 4294901760
  %2439 = vmatpush.msra.mxu0 %v2438
  %v2440 = vand.u32 %v1278, 4294901760
  %2441 = vmatpush.msra.mxu0 %v2440
  %v2442 = vand.u32 %v1277, 4294901760
  %2443 = vmatpush.msra.mxu0 %v2442
  %v2444 = vand.u32 %v1276, 4294901760
  %2445 = vmatpush.msra.mxu0 %v2444
  %v2446 = vand.u32 %v1275, 4294901760
  %2447 = vmatpush.msra.mxu0 %v2446
  %v2448 = vand.u32 %v1274, 4294901760
  %2449 = vmatpush.msra.mxu0 %v2448
  %v2450 = vand.u32 %v1273, 4294901760
  %2451 = vmatpush.msra.mxu0 %v2450
  %v2452 = vand.u32 %v896, 4294901760
  %v2453 = vsub.f32 %v896, %v2452
  %v2454 = vand.u32 %v2453, 4294901760
  %2455 = vmatmul.f32.gmra.mxu0 %v2454
  %v2456 = vpop.f32.mrf.mxu0
  %v2457 = vadd.f32 %v2403, %v2456
  %v2458 = vand.u32 %v900, 4294901760
  %v2459 = vsub.f32 %v900, %v2458
  %v2460 = vand.u32 %v2459, 4294901760
  %2461 = vmatmul.f32.gmra.mxu0 %v2460
  %v2462 = vpop.f32.mrf.mxu0
  %v2463 = vadd.f32 %v2408, %v2462
  %v2464 = vand.u32 %v904, 4294901760
  %v2465 = vsub.f32 %v904, %v2464
  %v2466 = vand.u32 %v2465, 4294901760
  %2467 = vmatmul.f32.gmra.mxu0 %v2466
  %v2468 = vpop.f32.mrf.mxu0
  %v2469 = vadd.f32 %v2413, %v2468
  %v2470 = vand.u32 %v908, 4294901760
  %v2471 = vsub.f32 %v908, %v2470
  %v2472 = vand.u32 %v2471, 4294901760
  %2473 = vmatmul.f32.gmra.mxu0 %v2472
  %v2474 = vpop.f32.mrf.mxu0
  %v2475 = vadd.f32 %v2418, %v2474
  %2476 = vdwg.mxu0
  %v2477 = vand.u32 %v1288, 4294901760
  %v2478 = vsub.f32 %v1288, %v2477
  %v2479 = vand.u32 %v2478, 4294901760
  %2480 = vmatpush.msra.mxu0 %v2479
  %v2481 = vand.u32 %v1287, 4294901760
  %v2482 = vsub.f32 %v1287, %v2481
  %v2483 = vand.u32 %v2482, 4294901760
  %2484 = vmatpush.msra.mxu0 %v2483
  %v2485 = vand.u32 %v1286, 4294901760
  %v2486 = vsub.f32 %v1286, %v2485
  %v2487 = vand.u32 %v2486, 4294901760
  %2488 = vmatpush.msra.mxu0 %v2487
  %v2489 = vand.u32 %v1285, 4294901760
  %v2490 = vsub.f32 %v1285, %v2489
  %v2491 = vand.u32 %v2490, 4294901760
  %2492 = vmatpush.msra.mxu0 %v2491
  %v2493 = vand.u32 %v1284, 4294901760
  %v2494 = vsub.f32 %v1284, %v2493
  %v2495 = vand.u32 %v2494, 4294901760
  %2496 = vmatpush.msra.mxu0 %v2495
  %v2497 = vand.u32 %v1283, 4294901760
  %v2498 = vsub.f32 %v1283, %v2497
  %v2499 = vand.u32 %v2498, 4294901760
  %2500 = vmatpush.msra.mxu0 %v2499
  %v2501 = vand.u32 %v1282, 4294901760
  %v2502 = vsub.f32 %v1282, %v2501
  %v2503 = vand.u32 %v2502, 4294901760
  %2504 = vmatpush.msra.mxu0 %v2503
  %v2505 = vand.u32 %v1281, 4294901760
  %v2506 = vsub.f32 %v1281, %v2505
  %v2507 = vand.u32 %v2506, 4294901760
  %2508 = vmatpush.msra.mxu0 %v2507
  %v2509 = vand.u32 %v1280, 4294901760
  %v2510 = vsub.f32 %v1280, %v2509
  %v2511 = vand.u32 %v2510, 4294901760
  %2512 = vmatpush.msra.mxu0 %v2511
  %v2513 = vand.u32 %v1279, 4294901760
  %v2514 = vsub.f32 %v1279, %v2513
  %v2515 = vand.u32 %v2514, 4294901760
  %2516 = vmatpush.msra.mxu0 %v2515
  %v2517 = vand.u32 %v1278, 4294901760
  %v2518 = vsub.f32 %v1278, %v2517
  %v2519 = vand.u32 %v2518, 4294901760
  %2520 = vmatpush.msra.mxu0 %v2519
  %v2521 = vand.u32 %v1277, 4294901760
  %v2522 = vsub.f32 %v1277, %v2521
  %v2523 = vand.u32 %v2522, 4294901760
  %2524 = vmatpush.msra.mxu0 %v2523
  %v2525 = vand.u32 %v1276, 4294901760
  %v2526 = vsub.f32 %v1276, %v2525
  %v2527 = vand.u32 %v2526, 4294901760
  %2528 = vmatpush.msra.mxu0 %v2527
  %v2529 = vand.u32 %v1275, 4294901760
  %v2530 = vsub.f32 %v1275, %v2529
  %v2531 = vand.u32 %v2530, 4294901760
  %2532 = vmatpush.msra.mxu0 %v2531
  %v2533 = vand.u32 %v1274, 4294901760
  %v2534 = vsub.f32 %v1274, %v2533
  %v2535 = vand.u32 %v2534, 4294901760
  %2536 = vmatpush.msra.mxu0 %v2535
  %v2537 = vand.u32 %v1273, 4294901760
  %v2538 = vsub.f32 %v1273, %v2537
  %v2539 = vand.u32 %v2538, 4294901760
  %2540 = vmatpush.msra.mxu0 %v2539
  %v2541 = vand.u32 %v896, 4294901760
  %2542 = vmatmul.f32.gmra.mxu0 %v2541
  %v2543 = vpop.f32.mrf.mxu0
  %v2544 = vadd.f32 %v2457, %v2543
  %v2545 = vand.u32 %v900, 4294901760
  %2546 = vmatmul.f32.gmra.mxu0 %v2545
  %v2547 = vpop.f32.mrf.mxu0
  %v2548 = vadd.f32 %v2463, %v2547
  %v2549 = vand.u32 %v904, 4294901760
  %2550 = vmatmul.f32.gmra.mxu0 %v2549
  %v2551 = vpop.f32.mrf.mxu0
  %v2552 = vadd.f32 %v2469, %v2551
  %v2553 = vand.u32 %v908, 4294901760
  %2554 = vmatmul.f32.gmra.mxu0 %v2553
  %v2555 = vpop.f32.mrf.mxu0
  %v2556 = vadd.f32 %v2475, %v2555
  %2557 = vdwg.mxu0
  %v2558 = vand.u32 %v1288, 4294901760
  %2559 = vmatpush.msra.mxu0 %v2558
  %v2560 = vand.u32 %v1287, 4294901760
  %2561 = vmatpush.msra.mxu0 %v2560
  %v2562 = vand.u32 %v1286, 4294901760
  %2563 = vmatpush.msra.mxu0 %v2562
  %v2564 = vand.u32 %v1285, 4294901760
  %2565 = vmatpush.msra.mxu0 %v2564
  %v2566 = vand.u32 %v1284, 4294901760
  %2567 = vmatpush.msra.mxu0 %v2566
  %v2568 = vand.u32 %v1283, 4294901760
  %2569 = vmatpush.msra.mxu0 %v2568
  %v2570 = vand.u32 %v1282, 4294901760
  %2571 = vmatpush.msra.mxu0 %v2570
  %v2572 = vand.u32 %v1281, 4294901760
  %2573 = vmatpush.msra.mxu0 %v2572
  %v2574 = vand.u32 %v1280, 4294901760
  %2575 = vmatpush.msra.mxu0 %v2574
  %v2576 = vand.u32 %v1279, 4294901760
  %2577 = vmatpush.msra.mxu0 %v2576
  %v2578 = vand.u32 %v1278, 4294901760
  %2579 = vmatpush.msra.mxu0 %v2578
  %v2580 = vand.u32 %v1277, 4294901760
  %2581 = vmatpush.msra.mxu0 %v2580
  %v2582 = vand.u32 %v1276, 4294901760
  %2583 = vmatpush.msra.mxu0 %v2582
  %v2584 = vand.u32 %v1275, 4294901760
  %2585 = vmatpush.msra.mxu0 %v2584
  %v2586 = vand.u32 %v1274, 4294901760
  %2587 = vmatpush.msra.mxu0 %v2586
  %v2588 = vand.u32 %v1273, 4294901760
  %2589 = vmatpush.msra.mxu0 %v2588
  %v2590 = vand.u32 %v896, 4294901760
  %2591 = vmatmul.f32.gmra.mxu0 %v2590
  %v2592 = vpop.f32.mrf.mxu0
  %v2593 = vadd.f32 %v2544, %v2592
  %v2594 = vand.u32 %v900, 4294901760
  %2595 = vmatmul.f32.gmra.mxu0 %v2594
  %v2596 = vpop.f32.mrf.mxu0
  %v2597 = vadd.f32 %v2548, %v2596
  %v2598 = vand.u32 %v904, 4294901760
  %2599 = vmatmul.f32.gmra.mxu0 %v2598
  %v2600 = vpop.f32.mrf.mxu0
  %v2601 = vadd.f32 %v2552, %v2600
  %v2602 = vand.u32 %v908, 4294901760
  %2603 = vmatmul.f32.gmra.mxu0 %v2602
  %v2604 = vpop.f32.mrf.mxu0
  %v2605 = vadd.f32 %v2556, %v2604
  %2606 = vdwg.mxu0
  %v2607 = vand.u32 %v1304, 4294901760
  %2608 = vmatpush.msra.mxu0 %v2607
  %v2609 = vand.u32 %v1303, 4294901760
  %2610 = vmatpush.msra.mxu0 %v2609
  %v2611 = vand.u32 %v1302, 4294901760
  %2612 = vmatpush.msra.mxu0 %v2611
  %v2613 = vand.u32 %v1301, 4294901760
  %2614 = vmatpush.msra.mxu0 %v2613
  %v2615 = vand.u32 %v1300, 4294901760
  %2616 = vmatpush.msra.mxu0 %v2615
  %v2617 = vand.u32 %v1299, 4294901760
  %2618 = vmatpush.msra.mxu0 %v2617
  %v2619 = vand.u32 %v1298, 4294901760
  %2620 = vmatpush.msra.mxu0 %v2619
  %v2621 = vand.u32 %v1297, 4294901760
  %2622 = vmatpush.msra.mxu0 %v2621
  %v2623 = vand.u32 %v1296, 4294901760
  %2624 = vmatpush.msra.mxu0 %v2623
  %v2625 = vand.u32 %v1295, 4294901760
  %2626 = vmatpush.msra.mxu0 %v2625
  %v2627 = vand.u32 %v1294, 4294901760
  %2628 = vmatpush.msra.mxu0 %v2627
  %v2629 = vand.u32 %v1293, 4294901760
  %2630 = vmatpush.msra.mxu0 %v2629
  %v2631 = vand.u32 %v1292, 4294901760
  %2632 = vmatpush.msra.mxu0 %v2631
  %v2633 = vand.u32 %v1291, 4294901760
  %2634 = vmatpush.msra.mxu0 %v2633
  %v2635 = vand.u32 %v1290, 4294901760
  %2636 = vmatpush.msra.mxu0 %v2635
  %v2637 = vand.u32 %v1289, 4294901760
  %2638 = vmatpush.msra.mxu0 %v2637
  %v2639 = vand.u32 %v1174, 4294901760
  %v2640 = vsub.f32 %v1174, %v2639
  %v2641 = vand.u32 %v2640, 4294901760
  %v2642 = vsub.f32 %v2640, %v2641
  %v2643 = vand.u32 %v2642, 4294901760
  %2644 = vmatmul.f32.gmra.mxu0 %v2643
  %v2645 = vpop.f32.mrf.mxu0
  %v2646 = vadd.f32 %v2593, %v2645
  %v2647 = vand.u32 %v1178, 4294901760
  %v2648 = vsub.f32 %v1178, %v2647
  %v2649 = vand.u32 %v2648, 4294901760
  %v2650 = vsub.f32 %v2648, %v2649
  %v2651 = vand.u32 %v2650, 4294901760
  %2652 = vmatmul.f32.gmra.mxu0 %v2651
  %v2653 = vpop.f32.mrf.mxu0
  %v2654 = vadd.f32 %v2597, %v2653
  %v2655 = vand.u32 %v1182, 4294901760
  %v2656 = vsub.f32 %v1182, %v2655
  %v2657 = vand.u32 %v2656, 4294901760
  %v2658 = vsub.f32 %v2656, %v2657
  %v2659 = vand.u32 %v2658, 4294901760
  %2660 = vmatmul.f32.gmra.mxu0 %v2659
  %v2661 = vpop.f32.mrf.mxu0
  %v2662 = vadd.f32 %v2601, %v2661
  %v2663 = vand.u32 %v1186, 4294901760
  %v2664 = vsub.f32 %v1186, %v2663
  %v2665 = vand.u32 %v2664, 4294901760
  %v2666 = vsub.f32 %v2664, %v2665
  %v2667 = vand.u32 %v2666, 4294901760
  %2668 = vmatmul.f32.gmra.mxu0 %v2667
  %v2669 = vpop.f32.mrf.mxu0
  %v2670 = vadd.f32 %v2605, %v2669
  %2671 = vdwg.mxu0
  %v2672 = vand.u32 %v1304, 4294901760
  %v2673 = vsub.f32 %v1304, %v2672
  %v2674 = vand.u32 %v2673, 4294901760
  %v2675 = vsub.f32 %v2673, %v2674
  %v2676 = vand.u32 %v2675, 4294901760
  %2677 = vmatpush.msra.mxu0 %v2676
  %v2678 = vand.u32 %v1303, 4294901760
  %v2679 = vsub.f32 %v1303, %v2678
  %v2680 = vand.u32 %v2679, 4294901760
  %v2681 = vsub.f32 %v2679, %v2680
  %v2682 = vand.u32 %v2681, 4294901760
  %2683 = vmatpush.msra.mxu0 %v2682
  %v2684 = vand.u32 %v1302, 4294901760
  %v2685 = vsub.f32 %v1302, %v2684
  %v2686 = vand.u32 %v2685, 4294901760
  %v2687 = vsub.f32 %v2685, %v2686
  %v2688 = vand.u32 %v2687, 4294901760
  %2689 = vmatpush.msra.mxu0 %v2688
  %v2690 = vand.u32 %v1301, 4294901760
  %v2691 = vsub.f32 %v1301, %v2690
  %v2692 = vand.u32 %v2691, 4294901760
  %v2693 = vsub.f32 %v2691, %v2692
  %v2694 = vand.u32 %v2693, 4294901760
  %2695 = vmatpush.msra.mxu0 %v2694
  %v2696 = vand.u32 %v1300, 4294901760
  %v2697 = vsub.f32 %v1300, %v2696
  %v2698 = vand.u32 %v2697, 4294901760
  %v2699 = vsub.f32 %v2697, %v2698
  %v2700 = vand.u32 %v2699, 4294901760
  %2701 = vmatpush.msra.mxu0 %v2700
  %v2702 = vand.u32 %v1299, 4294901760
  %v2703 = vsub.f32 %v1299, %v2702
  %v2704 = vand.u32 %v2703, 4294901760
  %v2705 = vsub.f32 %v2703, %v2704
  %v2706 = vand.u32 %v2705, 4294901760
  %2707 = vmatpush.msra.mxu0 %v2706
  %v2708 = vand.u32 %v1298, 4294901760
  %v2709 = vsub.f32 %v1298, %v2708
  %v2710 = vand.u32 %v2709, 4294901760
  %v2711 = vsub.f32 %v2709, %v2710
  %v2712 = vand.u32 %v2711, 4294901760
  %2713 = vmatpush.msra.mxu0 %v2712
  %v2714 = vand.u32 %v1297, 4294901760
  %v2715 = vsub.f32 %v1297, %v2714
  %v2716 = vand.u32 %v2715, 4294901760
  %v2717 = vsub.f32 %v2715, %v2716
  %v2718 = vand.u32 %v2717, 4294901760
  %2719 = vmatpush.msra.mxu0 %v2718
  %v2720 = vand.u32 %v1296, 4294901760
  %v2721 = vsub.f32 %v1296, %v2720
  %v2722 = vand.u32 %v2721, 4294901760
  %v2723 = vsub.f32 %v2721, %v2722
  %v2724 = vand.u32 %v2723, 4294901760
  %2725 = vmatpush.msra.mxu0 %v2724
  %v2726 = vand.u32 %v1295, 4294901760
  %v2727 = vsub.f32 %v1295, %v2726
  %v2728 = vand.u32 %v2727, 4294901760
  %v2729 = vsub.f32 %v2727, %v2728
  %v2730 = vand.u32 %v2729, 4294901760
  %2731 = vmatpush.msra.mxu0 %v2730
  %v2732 = vand.u32 %v1294, 4294901760
  %v2733 = vsub.f32 %v1294, %v2732
  %v2734 = vand.u32 %v2733, 4294901760
  %v2735 = vsub.f32 %v2733, %v2734
  %v2736 = vand.u32 %v2735, 4294901760
  %2737 = vmatpush.msra.mxu0 %v2736
  %v2738 = vand.u32 %v1293, 4294901760
  %v2739 = vsub.f32 %v1293, %v2738
  %v2740 = vand.u32 %v2739, 4294901760
  %v2741 = vsub.f32 %v2739, %v2740
  %v2742 = vand.u32 %v2741, 4294901760
  %2743 = vmatpush.msra.mxu0 %v2742
  %v2744 = vand.u32 %v1292, 4294901760
  %v2745 = vsub.f32 %v1292, %v2744
  %v2746 = vand.u32 %v2745, 4294901760
  %v2747 = vsub.f32 %v2745, %v2746
  %v2748 = vand.u32 %v2747, 4294901760
  %2749 = vmatpush.msra.mxu0 %v2748
  %v2750 = vand.u32 %v1291, 4294901760
  %v2751 = vsub.f32 %v1291, %v2750
  %v2752 = vand.u32 %v2751, 4294901760
  %v2753 = vsub.f32 %v2751, %v2752
  %v2754 = vand.u32 %v2753, 4294901760
  %2755 = vmatpush.msra.mxu0 %v2754
  %v2756 = vand.u32 %v1290, 4294901760
  %v2757 = vsub.f32 %v1290, %v2756
  %v2758 = vand.u32 %v2757, 4294901760
  %v2759 = vsub.f32 %v2757, %v2758
  %v2760 = vand.u32 %v2759, 4294901760
  %2761 = vmatpush.msra.mxu0 %v2760
  %v2762 = vand.u32 %v1289, 4294901760
  %v2763 = vsub.f32 %v1289, %v2762
  %v2764 = vand.u32 %v2763, 4294901760
  %v2765 = vsub.f32 %v2763, %v2764
  %v2766 = vand.u32 %v2765, 4294901760
  %2767 = vmatpush.msra.mxu0 %v2766
  %v2768 = vand.u32 %v1174, 4294901760
  %2769 = vmatmul.f32.gmra.mxu0 %v2768
  %v2770 = vpop.f32.mrf.mxu0
  %v2771 = vadd.f32 %v2646, %v2770
  %v2772 = vand.u32 %v1178, 4294901760
  %2773 = vmatmul.f32.gmra.mxu0 %v2772
  %v2774 = vpop.f32.mrf.mxu0
  %v2775 = vadd.f32 %v2654, %v2774
  %v2776 = vand.u32 %v1182, 4294901760
  %2777 = vmatmul.f32.gmra.mxu0 %v2776
  %v2778 = vpop.f32.mrf.mxu0
  %v2779 = vadd.f32 %v2662, %v2778
  %v2780 = vand.u32 %v1186, 4294901760
  %2781 = vmatmul.f32.gmra.mxu0 %v2780
  %v2782 = vpop.f32.mrf.mxu0
  %v2783 = vadd.f32 %v2670, %v2782
  %2784 = vdwg.mxu0
  %v2785 = vand.u32 %v1304, 4294901760
  %v2786 = vsub.f32 %v1304, %v2785
  %2787 = vmatpush.msra.mxu0 %v2786
  %v2788 = vand.u32 %v1303, 4294901760
  %v2789 = vsub.f32 %v1303, %v2788
  %2790 = vmatpush.msra.mxu0 %v2789
  %v2791 = vand.u32 %v1302, 4294901760
  %v2792 = vsub.f32 %v1302, %v2791
  %2793 = vmatpush.msra.mxu0 %v2792
  %v2794 = vand.u32 %v1301, 4294901760
  %v2795 = vsub.f32 %v1301, %v2794
  %2796 = vmatpush.msra.mxu0 %v2795
  %v2797 = vand.u32 %v1300, 4294901760
  %v2798 = vsub.f32 %v1300, %v2797
  %2799 = vmatpush.msra.mxu0 %v2798
  %v2800 = vand.u32 %v1299, 4294901760
  %v2801 = vsub.f32 %v1299, %v2800
  %2802 = vmatpush.msra.mxu0 %v2801
  %v2803 = vand.u32 %v1298, 4294901760
  %v2804 = vsub.f32 %v1298, %v2803
  %2805 = vmatpush.msra.mxu0 %v2804
  %v2806 = vand.u32 %v1297, 4294901760
  %v2807 = vsub.f32 %v1297, %v2806
  %2808 = vmatpush.msra.mxu0 %v2807
  %v2809 = vand.u32 %v1296, 4294901760
  %v2810 = vsub.f32 %v1296, %v2809
  %2811 = vmatpush.msra.mxu0 %v2810
  %v2812 = vand.u32 %v1295, 4294901760
  %v2813 = vsub.f32 %v1295, %v2812
  %2814 = vmatpush.msra.mxu0 %v2813
  %v2815 = vand.u32 %v1294, 4294901760
  %v2816 = vsub.f32 %v1294, %v2815
  %2817 = vmatpush.msra.mxu0 %v2816
  %v2818 = vand.u32 %v1293, 4294901760
  %v2819 = vsub.f32 %v1293, %v2818
  %2820 = vmatpush.msra.mxu0 %v2819
  %v2821 = vand.u32 %v1292, 4294901760
  %v2822 = vsub.f32 %v1292, %v2821
  %2823 = vmatpush.msra.mxu0 %v2822
  %v2824 = vand.u32 %v1291, 4294901760
  %v2825 = vsub.f32 %v1291, %v2824
  %2826 = vmatpush.msra.mxu0 %v2825
  %v2827 = vand.u32 %v1290, 4294901760
  %v2828 = vsub.f32 %v1290, %v2827
  %2829 = vmatpush.msra.mxu0 %v2828
  %v2830 = vand.u32 %v1289, 4294901760
  %v2831 = vsub.f32 %v1289, %v2830
  %2832 = vmatpush.msra.mxu0 %v2831
  %v2833 = vand.u32 %v1174, 4294901760
  %v2834 = vsub.f32 %v1174, %v2833
  %2835 = vmatmul.f32.gmra.mxu0 %v2834
  %v2836 = vpop.f32.mrf.mxu0
  %v2837 = vadd.f32 %v2771, %v2836
  %v2838 = vand.u32 %v1178, 4294901760
  %v2839 = vsub.f32 %v1178, %v2838
  %2840 = vmatmul.f32.gmra.mxu0 %v2839
  %v2841 = vpop.f32.mrf.mxu0
  %v2842 = vadd.f32 %v2775, %v2841
  %v2843 = vand.u32 %v1182, 4294901760
  %v2844 = vsub.f32 %v1182, %v2843
  %2845 = vmatmul.f32.gmra.mxu0 %v2844
  %v2846 = vpop.f32.mrf.mxu0
  %v2847 = vadd.f32 %v2779, %v2846
  %v2848 = vand.u32 %v1186, 4294901760
  %v2849 = vsub.f32 %v1186, %v2848
  %2850 = vmatmul.f32.gmra.mxu0 %v2849
  %v2851 = vpop.f32.mrf.mxu0
  %v2852 = vadd.f32 %v2783, %v2851
  %2853 = vdwg.mxu0
  %v2854 = vand.u32 %v1304, 4294901760
  %2855 = vmatpush.msra.mxu0 %v2854
  %v2856 = vand.u32 %v1303, 4294901760
  %2857 = vmatpush.msra.mxu0 %v2856
  %v2858 = vand.u32 %v1302, 4294901760
  %2859 = vmatpush.msra.mxu0 %v2858
  %v2860 = vand.u32 %v1301, 4294901760
  %2861 = vmatpush.msra.mxu0 %v2860
  %v2862 = vand.u32 %v1300, 4294901760
  %2863 = vmatpush.msra.mxu0 %v2862
  %v2864 = vand.u32 %v1299, 4294901760
  %2865 = vmatpush.msra.mxu0 %v2864
  %v2866 = vand.u32 %v1298, 4294901760
  %2867 = vmatpush.msra.mxu0 %v2866
  %v2868 = vand.u32 %v1297, 4294901760
  %2869 = vmatpush.msra.mxu0 %v2868
  %v2870 = vand.u32 %v1296, 4294901760
  %2871 = vmatpush.msra.mxu0 %v2870
  %v2872 = vand.u32 %v1295, 4294901760
  %2873 = vmatpush.msra.mxu0 %v2872
  %v2874 = vand.u32 %v1294, 4294901760
  %2875 = vmatpush.msra.mxu0 %v2874
  %v2876 = vand.u32 %v1293, 4294901760
  %2877 = vmatpush.msra.mxu0 %v2876
  %v2878 = vand.u32 %v1292, 4294901760
  %2879 = vmatpush.msra.mxu0 %v2878
  %v2880 = vand.u32 %v1291, 4294901760
  %2881 = vmatpush.msra.mxu0 %v2880
  %v2882 = vand.u32 %v1290, 4294901760
  %2883 = vmatpush.msra.mxu0 %v2882
  %v2884 = vand.u32 %v1289, 4294901760
  %2885 = vmatpush.msra.mxu0 %v2884
  %v2886 = vand.u32 %v1174, 4294901760
  %v2887 = vsub.f32 %v1174, %v2886
  %v2888 = vand.u32 %v2887, 4294901760
  %2889 = vmatmul.f32.gmra.mxu0 %v2888
  %v2890 = vpop.f32.mrf.mxu0
  %v2891 = vadd.f32 %v2837, %v2890
  %v2892 = vand.u32 %v1178, 4294901760
  %v2893 = vsub.f32 %v1178, %v2892
  %v2894 = vand.u32 %v2893, 4294901760
  %2895 = vmatmul.f32.gmra.mxu0 %v2894
  %v2896 = vpop.f32.mrf.mxu0
  %v2897 = vadd.f32 %v2842, %v2896
  %v2898 = vand.u32 %v1182, 4294901760
  %v2899 = vsub.f32 %v1182, %v2898
  %v2900 = vand.u32 %v2899, 4294901760
  %2901 = vmatmul.f32.gmra.mxu0 %v2900
  %v2902 = vpop.f32.mrf.mxu0
  %v2903 = vadd.f32 %v2847, %v2902
  %v2904 = vand.u32 %v1186, 4294901760
  %v2905 = vsub.f32 %v1186, %v2904
  %v2906 = vand.u32 %v2905, 4294901760
  %2907 = vmatmul.f32.gmra.mxu0 %v2906
  %v2908 = vpop.f32.mrf.mxu0
  %v2909 = vadd.f32 %v2852, %v2908
  %2910 = vdwg.mxu0
  %v2911 = vand.u32 %v1304, 4294901760
  %v2912 = vsub.f32 %v1304, %v2911
  %v2913 = vand.u32 %v2912, 4294901760
  %2914 = vmatpush.msra.mxu0 %v2913
  %v2915 = vand.u32 %v1303, 4294901760
  %v2916 = vsub.f32 %v1303, %v2915
  %v2917 = vand.u32 %v2916, 4294901760
  %2918 = vmatpush.msra.mxu0 %v2917
  %v2919 = vand.u32 %v1302, 4294901760
  %v2920 = vsub.f32 %v1302, %v2919
  %v2921 = vand.u32 %v2920, 4294901760
  %2922 = vmatpush.msra.mxu0 %v2921
  %v2923 = vand.u32 %v1301, 4294901760
  %v2924 = vsub.f32 %v1301, %v2923
  %v2925 = vand.u32 %v2924, 4294901760
  %2926 = vmatpush.msra.mxu0 %v2925
  %v2927 = vand.u32 %v1300, 4294901760
  %v2928 = vsub.f32 %v1300, %v2927
  %v2929 = vand.u32 %v2928, 4294901760
  %2930 = vmatpush.msra.mxu0 %v2929
  %v2931 = vand.u32 %v1299, 4294901760
  %v2932 = vsub.f32 %v1299, %v2931
  %v2933 = vand.u32 %v2932, 4294901760
  %2934 = vmatpush.msra.mxu0 %v2933
  %v2935 = vand.u32 %v1298, 4294901760
  %v2936 = vsub.f32 %v1298, %v2935
  %v2937 = vand.u32 %v2936, 4294901760
  %2938 = vmatpush.msra.mxu0 %v2937
  %v2939 = vand.u32 %v1297, 4294901760
  %v2940 = vsub.f32 %v1297, %v2939
  %v2941 = vand.u32 %v2940, 4294901760
  %2942 = vmatpush.msra.mxu0 %v2941
  %v2943 = vand.u32 %v1296, 4294901760
  %v2944 = vsub.f32 %v1296, %v2943
  %v2945 = vand.u32 %v2944, 4294901760
  %2946 = vmatpush.msra.mxu0 %v2945
  %v2947 = vand.u32 %v1295, 4294901760
  %v2948 = vsub.f32 %v1295, %v2947
  %v2949 = vand.u32 %v2948, 4294901760
  %2950 = vmatpush.msra.mxu0 %v2949
  %v2951 = vand.u32 %v1294, 4294901760
  %v2952 = vsub.f32 %v1294, %v2951
  %v2953 = vand.u32 %v2952, 4294901760
  %2954 = vmatpush.msra.mxu0 %v2953
  %v2955 = vand.u32 %v1293, 4294901760
  %v2956 = vsub.f32 %v1293, %v2955
  %v2957 = vand.u32 %v2956, 4294901760
  %2958 = vmatpush.msra.mxu0 %v2957
  %v2959 = vand.u32 %v1292, 4294901760
  %v2960 = vsub.f32 %v1292, %v2959
  %v2961 = vand.u32 %v2960, 4294901760
  %2962 = vmatpush.msra.mxu0 %v2961
  %v2963 = vand.u32 %v1291, 4294901760
  %v2964 = vsub.f32 %v1291, %v2963
  %v2965 = vand.u32 %v2964, 4294901760
  %2966 = vmatpush.msra.mxu0 %v2965
  %v2967 = vand.u32 %v1290, 4294901760
  %v2968 = vsub.f32 %v1290, %v2967
  %v2969 = vand.u32 %v2968, 4294901760
  %2970 = vmatpush.msra.mxu0 %v2969
  %v2971 = vand.u32 %v1289, 4294901760
  %v2972 = vsub.f32 %v1289, %v2971
  %v2973 = vand.u32 %v2972, 4294901760
  %2974 = vmatpush.msra.mxu0 %v2973
  %v2975 = vand.u32 %v1174, 4294901760
  %2976 = vmatmul.f32.gmra.mxu0 %v2975
  %v2977 = vpop.f32.mrf.mxu0
  %v2978 = vadd.f32 %v2891, %v2977
  %v2979 = vand.u32 %v1178, 4294901760
  %2980 = vmatmul.f32.gmra.mxu0 %v2979
  %v2981 = vpop.f32.mrf.mxu0
  %v2982 = vadd.f32 %v2897, %v2981
  %v2983 = vand.u32 %v1182, 4294901760
  %2984 = vmatmul.f32.gmra.mxu0 %v2983
  %v2985 = vpop.f32.mrf.mxu0
  %v2986 = vadd.f32 %v2903, %v2985
  %v2987 = vand.u32 %v1186, 4294901760
  %2988 = vmatmul.f32.gmra.mxu0 %v2987
  %v2989 = vpop.f32.mrf.mxu0
  %v2990 = vadd.f32 %v2909, %v2989
  %2991 = vdwg.mxu0
  %v2992 = vand.u32 %v1304, 4294901760
  %2993 = vmatpush.msra.mxu0 %v2992
  %v2994 = vand.u32 %v1303, 4294901760
  %2995 = vmatpush.msra.mxu0 %v2994
  %v2996 = vand.u32 %v1302, 4294901760
  %2997 = vmatpush.msra.mxu0 %v2996
  %v2998 = vand.u32 %v1301, 4294901760
  %2999 = vmatpush.msra.mxu0 %v2998
  %v3000 = vand.u32 %v1300, 4294901760
  %3001 = vmatpush.msra.mxu0 %v3000
  %v3002 = vand.u32 %v1299, 4294901760
  %3003 = vmatpush.msra.mxu0 %v3002
  %v3004 = vand.u32 %v1298, 4294901760
  %3005 = vmatpush.msra.mxu0 %v3004
  %v3006 = vand.u32 %v1297, 4294901760
  %3007 = vmatpush.msra.mxu0 %v3006
  %v3008 = vand.u32 %v1296, 4294901760
  %3009 = vmatpush.msra.mxu0 %v3008
  %v3010 = vand.u32 %v1295, 4294901760
  %3011 = vmatpush.msra.mxu0 %v3010
  %v3012 = vand.u32 %v1294, 4294901760
  %3013 = vmatpush.msra.mxu0 %v3012
  %v3014 = vand.u32 %v1293, 4294901760
  %3015 = vmatpush.msra.mxu0 %v3014
  %v3016 = vand.u32 %v1292, 4294901760
  %3017 = vmatpush.msra.mxu0 %v3016
  %v3018 = vand.u32 %v1291, 4294901760
  %3019 = vmatpush.msra.mxu0 %v3018
  %v3020 = vand.u32 %v1290, 4294901760
  %3021 = vmatpush.msra.mxu0 %v3020
  %v3022 = vand.u32 %v1289, 4294901760
  %3023 = vmatpush.msra.mxu0 %v3022
  %v3024 = vand.u32 %v1174, 4294901760
  %3025 = vmatmul.f32.gmra.mxu0 %v3024
  %v3026 = vpop.f32.mrf.mxu0
  %v3027 = vadd.f32 %v2978, %v3026
  %v3028 = vand.u32 %v1178, 4294901760
  %3029 = vmatmul.f32.gmra.mxu0 %v3028
  %v3030 = vpop.f32.mrf.mxu0
  %v3031 = vadd.f32 %v2982, %v3030
  %v3032 = vand.u32 %v1182, 4294901760
  %3033 = vmatmul.f32.gmra.mxu0 %v3032
  %v3034 = vpop.f32.mrf.mxu0
  %v3035 = vadd.f32 %v2986, %v3034
  %v3036 = vand.u32 %v1186, 4294901760
  %3037 = vmatmul.f32.gmra.mxu0 %v3036
  %v3038 = vpop.f32.mrf.mxu0
  %v3039 = vadd.f32 %v2990, %v3038
  %3040 = vdwg.mxu0
  %vm3041 = vcmask 15360
  %3042 = vst.msk [vmem:[%s7] sm:$0xff] %vm3041, %v3027
  %3043 = vst.msk [vmem:[%s7 + $0x8] sm:$0xff] %vm3041, %v3031
  %3044 = vst.msk [vmem:[%s7 + $0x10] sm:$0xff] %vm3041, %v3035
  %3045 = vst.msk [vmem:[%s7 + $0x18] sm:$0xff] %vm3041, %v3039
  %v3046 = vld [vmem:[%s4] sm:$0xff]
  %v3047 = vld [vmem:[%s4 + $0x8] sm:$0xff]
  %v3048 = vld [vmem:[%s4 + $0x10] sm:$0xff]
  %v3049 = vld [vmem:[%s4 + $0x18] sm:$0xff]
  %v3050 = vld [vmem:[%s4 + $0x20] sm:$0xff]
  %v3051 = vld [vmem:[%s4 + $0x28] sm:$0xff]
  %v3052 = vld [vmem:[%s4 + $0x30] sm:$0xff]
  %v3053 = vld [vmem:[%s4 + $0x38] sm:$0xff]
  %v3054 = vld [vmem:[%s5] sm:$0xff]
  %v3055 = vld [vmem:[%s5 + $0x8] sm:$0xff]
  %v3056 = vld [vmem:[%s5 + $0x10] sm:$0xff]
  %v3057 = vld [vmem:[%s5 + $0x18] sm:$0xff]
  %v3058 = vld [vmem:[%s5 + $0x20] sm:$0xff]
  %v3059 = vld [vmem:[%s5 + $0x28] sm:$0xff]
  %v3060 = vld [vmem:[%s5 + $0x30] sm:$0xff]
  %v3061 = vld [vmem:[%s5 + $0x38] sm:$0xff]
  %3063 = vset.pattern.permute.xlu0 0
  %3064 = vperm.xlu0 %3063, %v3054
  %v3065 = vpop.permute.xlu0 %3064
  %3068 = vset.pattern.permute.xlu0 0
  %3069 = vperm.xlu0 %3068, %v3055
  %v3070 = vpop.permute.xlu0 %3069
  %3073 = vset.pattern.permute.xlu0 0
  %3074 = vperm.xlu0 %3073, %v3056
  %v3075 = vpop.permute.xlu0 %3074
  %3078 = vset.pattern.permute.xlu0 0
  %3079 = vperm.xlu0 %3078, %v3057
  %v3080 = vpop.permute.xlu0 %3079
  %3083 = vset.pattern.permute.xlu0 0
  %3084 = vperm.xlu0 %3083, %v3058
  %v3085 = vpop.permute.xlu0 %3084
  %3088 = vset.pattern.permute.xlu0 0
  %3089 = vperm.xlu0 %3088, %v3059
  %v3090 = vpop.permute.xlu0 %3089
  %3093 = vset.pattern.permute.xlu0 0
  %3094 = vperm.xlu0 %3093, %v3060
  %v3095 = vpop.permute.xlu0 %3094
  %3098 = vset.pattern.permute.xlu0 0
  %3099 = vperm.xlu0 %3098, %v3061
  %v3100 = vpop.permute.xlu0 %3099
  %vm3102 = vcmask 261120
  %v3104 = vsel %vm3102, %v3046, 0
  %v3107 = vsel %vm3102, %v3047, 0
  %v3110 = vsel %vm3102, %v3048, 0
  %v3113 = vsel %vm3102, %v3049, 0
  %v3116 = vsel %vm3102, %v3050, 0
  %v3119 = vsel %vm3102, %v3051, 0
  %v3122 = vsel %vm3102, %v3052, 0
  %v3125 = vsel %vm3102, %v3053, 0
  %3127 = vmatpush.msra.mxu0 0.0
  %3128 = vmatpush.msra.mxu0 0.0
  %3129 = vmatpush.msra.mxu0 0.0
  %3130 = vmatpush.msra.mxu0 0.0
  %3131 = vmatpush.msra.mxu0 0.0
  %3132 = vmatpush.msra.mxu0 0.0
  %3133 = vmatpush.msra.mxu0 0.0
  %3134 = vmatpush.msra.mxu0 0.0
  %3135 = vmatpush.msra.mxu0 0.0
  %3136 = vmatpush.msra.mxu0 0.0
  %3137 = vmatpush.msra.mxu0 0.0
  %3138 = vmatpush.msra.mxu0 0.0
  %v3139 = vand.u32 %v3039, 4294901760
  %3140 = vmatpush.msra.mxu0 %v3139
  %v3141 = vand.u32 %v3035, 4294901760
  %3142 = vmatpush.msra.mxu0 %v3141
  %v3143 = vand.u32 %v3031, 4294901760
  %3144 = vmatpush.msra.mxu0 %v3143
  %v3145 = vand.u32 %v3027, 4294901760
  %3146 = vmatpush.msra.mxu0 %v3145
  %v3147 = vand.u32 %v3104, 4294901760
  %v3148 = vsub.f32 %v3104, %v3147
  %v3149 = vand.u32 %v3148, 4294901760
  %v3150 = vsub.f32 %v3148, %v3149
  %v3151 = vand.u32 %v3150, 4294901760
  %3152 = vmatmul.f32.gmra.mxu0 %v3151
  %v3153 = vpop.f32.mrf.mxu0
  %v3154 = vadd.f32 %v3065, %v3153
  %v3155 = vand.u32 %v3107, 4294901760
  %v3156 = vsub.f32 %v3107, %v3155
  %v3157 = vand.u32 %v3156, 4294901760
  %v3158 = vsub.f32 %v3156, %v3157
  %v3159 = vand.u32 %v3158, 4294901760
  %3160 = vmatmul.f32.gmra.mxu0 %v3159
  %v3161 = vpop.f32.mrf.mxu0
  %v3162 = vadd.f32 %v3070, %v3161
  %v3163 = vand.u32 %v3110, 4294901760
  %v3164 = vsub.f32 %v3110, %v3163
  %v3165 = vand.u32 %v3164, 4294901760
  %v3166 = vsub.f32 %v3164, %v3165
  %v3167 = vand.u32 %v3166, 4294901760
  %3168 = vmatmul.f32.gmra.mxu0 %v3167
  %v3169 = vpop.f32.mrf.mxu0
  %v3170 = vadd.f32 %v3075, %v3169
  %v3171 = vand.u32 %v3113, 4294901760
  %v3172 = vsub.f32 %v3113, %v3171
  %v3173 = vand.u32 %v3172, 4294901760
  %v3174 = vsub.f32 %v3172, %v3173
  %v3175 = vand.u32 %v3174, 4294901760
  %3176 = vmatmul.f32.gmra.mxu0 %v3175
  %v3177 = vpop.f32.mrf.mxu0
  %v3178 = vadd.f32 %v3080, %v3177
  %v3179 = vand.u32 %v3116, 4294901760
  %v3180 = vsub.f32 %v3116, %v3179
  %v3181 = vand.u32 %v3180, 4294901760
  %v3182 = vsub.f32 %v3180, %v3181
  %v3183 = vand.u32 %v3182, 4294901760
  %3184 = vmatmul.f32.gmra.mxu0 %v3183
  %v3185 = vpop.f32.mrf.mxu0
  %v3186 = vadd.f32 %v3085, %v3185
  %v3187 = vand.u32 %v3119, 4294901760
  %v3188 = vsub.f32 %v3119, %v3187
  %v3189 = vand.u32 %v3188, 4294901760
  %v3190 = vsub.f32 %v3188, %v3189
  %v3191 = vand.u32 %v3190, 4294901760
  %3192 = vmatmul.f32.gmra.mxu0 %v3191
  %v3193 = vpop.f32.mrf.mxu0
  %v3194 = vadd.f32 %v3090, %v3193
  %v3195 = vand.u32 %v3122, 4294901760
  %v3196 = vsub.f32 %v3122, %v3195
  %v3197 = vand.u32 %v3196, 4294901760
  %v3198 = vsub.f32 %v3196, %v3197
  %v3199 = vand.u32 %v3198, 4294901760
  %3200 = vmatmul.f32.gmra.mxu0 %v3199
  %v3201 = vpop.f32.mrf.mxu0
  %v3202 = vadd.f32 %v3095, %v3201
  %v3203 = vand.u32 %v3125, 4294901760
  %v3204 = vsub.f32 %v3125, %v3203
  %v3205 = vand.u32 %v3204, 4294901760
  %v3206 = vsub.f32 %v3204, %v3205
  %v3207 = vand.u32 %v3206, 4294901760
  %3208 = vmatmul.f32.gmra.mxu0 %v3207
  %v3209 = vpop.f32.mrf.mxu0
  %v3210 = vadd.f32 %v3100, %v3209
  %3211 = vdwg.mxu0
  %3212 = vmatpush.msra.mxu0 0.0
  %3213 = vmatpush.msra.mxu0 0.0
  %3214 = vmatpush.msra.mxu0 0.0
  %3215 = vmatpush.msra.mxu0 0.0
  %3216 = vmatpush.msra.mxu0 0.0
  %3217 = vmatpush.msra.mxu0 0.0
  %3218 = vmatpush.msra.mxu0 0.0
  %3219 = vmatpush.msra.mxu0 0.0
  %3220 = vmatpush.msra.mxu0 0.0
  %3221 = vmatpush.msra.mxu0 0.0
  %3222 = vmatpush.msra.mxu0 0.0
  %3223 = vmatpush.msra.mxu0 0.0
  %v3224 = vand.u32 %v3039, 4294901760
  %v3225 = vsub.f32 %v3039, %v3224
  %v3226 = vand.u32 %v3225, 4294901760
  %v3227 = vsub.f32 %v3225, %v3226
  %v3228 = vand.u32 %v3227, 4294901760
  %3229 = vmatpush.msra.mxu0 %v3228
  %v3230 = vand.u32 %v3035, 4294901760
  %v3231 = vsub.f32 %v3035, %v3230
  %v3232 = vand.u32 %v3231, 4294901760
  %v3233 = vsub.f32 %v3231, %v3232
  %v3234 = vand.u32 %v3233, 4294901760
  %3235 = vmatpush.msra.mxu0 %v3234
  %v3236 = vand.u32 %v3031, 4294901760
  %v3237 = vsub.f32 %v3031, %v3236
  %v3238 = vand.u32 %v3237, 4294901760
  %v3239 = vsub.f32 %v3237, %v3238
  %v3240 = vand.u32 %v3239, 4294901760
  %3241 = vmatpush.msra.mxu0 %v3240
  %v3242 = vand.u32 %v3027, 4294901760
  %v3243 = vsub.f32 %v3027, %v3242
  %v3244 = vand.u32 %v3243, 4294901760
  %v3245 = vsub.f32 %v3243, %v3244
  %v3246 = vand.u32 %v3245, 4294901760
  %3247 = vmatpush.msra.mxu0 %v3246
  %v3248 = vand.u32 %v3104, 4294901760
  %3249 = vmatmul.f32.gmra.mxu0 %v3248
  %v3250 = vpop.f32.mrf.mxu0
  %v3251 = vadd.f32 %v3154, %v3250
  %v3252 = vand.u32 %v3107, 4294901760
  %3253 = vmatmul.f32.gmra.mxu0 %v3252
  %v3254 = vpop.f32.mrf.mxu0
  %v3255 = vadd.f32 %v3162, %v3254
  %v3256 = vand.u32 %v3110, 4294901760
  %3257 = vmatmul.f32.gmra.mxu0 %v3256
  %v3258 = vpop.f32.mrf.mxu0
  %v3259 = vadd.f32 %v3170, %v3258
  %v3260 = vand.u32 %v3113, 4294901760
  %3261 = vmatmul.f32.gmra.mxu0 %v3260
  %v3262 = vpop.f32.mrf.mxu0
  %v3263 = vadd.f32 %v3178, %v3262
  %v3264 = vand.u32 %v3116, 4294901760
  %3265 = vmatmul.f32.gmra.mxu0 %v3264
  %v3266 = vpop.f32.mrf.mxu0
  %v3267 = vadd.f32 %v3186, %v3266
  %v3268 = vand.u32 %v3119, 4294901760
  %3269 = vmatmul.f32.gmra.mxu0 %v3268
  %v3270 = vpop.f32.mrf.mxu0
  %v3271 = vadd.f32 %v3194, %v3270
  %v3272 = vand.u32 %v3122, 4294901760
  %3273 = vmatmul.f32.gmra.mxu0 %v3272
  %v3274 = vpop.f32.mrf.mxu0
  %v3275 = vadd.f32 %v3202, %v3274
  %v3276 = vand.u32 %v3125, 4294901760
  %3277 = vmatmul.f32.gmra.mxu0 %v3276
  %v3278 = vpop.f32.mrf.mxu0
  %v3279 = vadd.f32 %v3210, %v3278
  %3280 = vdwg.mxu0
  %3281 = vmatpush.msra.mxu0 0.0
  %3282 = vmatpush.msra.mxu0 0.0
  %3283 = vmatpush.msra.mxu0 0.0
  %3284 = vmatpush.msra.mxu0 0.0
  %3285 = vmatpush.msra.mxu0 0.0
  %3286 = vmatpush.msra.mxu0 0.0
  %3287 = vmatpush.msra.mxu0 0.0
  %3288 = vmatpush.msra.mxu0 0.0
  %3289 = vmatpush.msra.mxu0 0.0
  %3290 = vmatpush.msra.mxu0 0.0
  %3291 = vmatpush.msra.mxu0 0.0
  %3292 = vmatpush.msra.mxu0 0.0
  %v3293 = vand.u32 %v3039, 4294901760
  %v3294 = vsub.f32 %v3039, %v3293
  %3295 = vmatpush.msra.mxu0 %v3294
  %v3296 = vand.u32 %v3035, 4294901760
  %v3297 = vsub.f32 %v3035, %v3296
  %3298 = vmatpush.msra.mxu0 %v3297
  %v3299 = vand.u32 %v3031, 4294901760
  %v3300 = vsub.f32 %v3031, %v3299
  %3301 = vmatpush.msra.mxu0 %v3300
  %v3302 = vand.u32 %v3027, 4294901760
  %v3303 = vsub.f32 %v3027, %v3302
  %3304 = vmatpush.msra.mxu0 %v3303
  %v3305 = vand.u32 %v3104, 4294901760
  %v3306 = vsub.f32 %v3104, %v3305
  %3307 = vmatmul.f32.gmra.mxu0 %v3306
  %v3308 = vpop.f32.mrf.mxu0
  %v3309 = vadd.f32 %v3251, %v3308
  %v3310 = vand.u32 %v3107, 4294901760
  %v3311 = vsub.f32 %v3107, %v3310
  %3312 = vmatmul.f32.gmra.mxu0 %v3311
  %v3313 = vpop.f32.mrf.mxu0
  %v3314 = vadd.f32 %v3255, %v3313
  %v3315 = vand.u32 %v3110, 4294901760
  %v3316 = vsub.f32 %v3110, %v3315
  %3317 = vmatmul.f32.gmra.mxu0 %v3316
  %v3318 = vpop.f32.mrf.mxu0
  %v3319 = vadd.f32 %v3259, %v3318
  %v3320 = vand.u32 %v3113, 4294901760
  %v3321 = vsub.f32 %v3113, %v3320
  %3322 = vmatmul.f32.gmra.mxu0 %v3321
  %v3323 = vpop.f32.mrf.mxu0
  %v3324 = vadd.f32 %v3263, %v3323
  %v3325 = vand.u32 %v3116, 4294901760
  %v3326 = vsub.f32 %v3116, %v3325
  %3327 = vmatmul.f32.gmra.mxu0 %v3326
  %v3328 = vpop.f32.mrf.mxu0
  %v3329 = vadd.f32 %v3267, %v3328
  %v3330 = vand.u32 %v3119, 4294901760
  %v3331 = vsub.f32 %v3119, %v3330
  %3332 = vmatmul.f32.gmra.mxu0 %v3331
  %v3333 = vpop.f32.mrf.mxu0
  %v3334 = vadd.f32 %v3271, %v3333
  %v3335 = vand.u32 %v3122, 4294901760
  %v3336 = vsub.f32 %v3122, %v3335
  %3337 = vmatmul.f32.gmra.mxu0 %v3336
  %v3338 = vpop.f32.mrf.mxu0
  %v3339 = vadd.f32 %v3275, %v3338
  %v3340 = vand.u32 %v3125, 4294901760
  %v3341 = vsub.f32 %v3125, %v3340
  %3342 = vmatmul.f32.gmra.mxu0 %v3341
  %v3343 = vpop.f32.mrf.mxu0
  %v3344 = vadd.f32 %v3279, %v3343
  %3345 = vdwg.mxu0
  %3346 = vmatpush.msra.mxu0 0.0
  %3347 = vmatpush.msra.mxu0 0.0
  %3348 = vmatpush.msra.mxu0 0.0
  %3349 = vmatpush.msra.mxu0 0.0
  %3350 = vmatpush.msra.mxu0 0.0
  %3351 = vmatpush.msra.mxu0 0.0
  %3352 = vmatpush.msra.mxu0 0.0
  %3353 = vmatpush.msra.mxu0 0.0
  %3354 = vmatpush.msra.mxu0 0.0
  %3355 = vmatpush.msra.mxu0 0.0
  %3356 = vmatpush.msra.mxu0 0.0
  %3357 = vmatpush.msra.mxu0 0.0
  %v3358 = vand.u32 %v3039, 4294901760
  %3359 = vmatpush.msra.mxu0 %v3358
  %v3360 = vand.u32 %v3035, 4294901760
  %3361 = vmatpush.msra.mxu0 %v3360
  %v3362 = vand.u32 %v3031, 4294901760
  %3363 = vmatpush.msra.mxu0 %v3362
  %v3364 = vand.u32 %v3027, 4294901760
  %3365 = vmatpush.msra.mxu0 %v3364
  %v3366 = vand.u32 %v3104, 4294901760
  %v3367 = vsub.f32 %v3104, %v3366
  %v3368 = vand.u32 %v3367, 4294901760
  %3369 = vmatmul.f32.gmra.mxu0 %v3368
  %v3370 = vpop.f32.mrf.mxu0
  %v3371 = vadd.f32 %v3309, %v3370
  %v3372 = vand.u32 %v3107, 4294901760
  %v3373 = vsub.f32 %v3107, %v3372
  %v3374 = vand.u32 %v3373, 4294901760
  %3375 = vmatmul.f32.gmra.mxu0 %v3374
  %v3376 = vpop.f32.mrf.mxu0
  %v3377 = vadd.f32 %v3314, %v3376
  %v3378 = vand.u32 %v3110, 4294901760
  %v3379 = vsub.f32 %v3110, %v3378
  %v3380 = vand.u32 %v3379, 4294901760
  %3381 = vmatmul.f32.gmra.mxu0 %v3380
  %v3382 = vpop.f32.mrf.mxu0
  %v3383 = vadd.f32 %v3319, %v3382
  %v3384 = vand.u32 %v3113, 4294901760
  %v3385 = vsub.f32 %v3113, %v3384
  %v3386 = vand.u32 %v3385, 4294901760
  %3387 = vmatmul.f32.gmra.mxu0 %v3386
  %v3388 = vpop.f32.mrf.mxu0
  %v3389 = vadd.f32 %v3324, %v3388
  %v3390 = vand.u32 %v3116, 4294901760
  %v3391 = vsub.f32 %v3116, %v3390
  %v3392 = vand.u32 %v3391, 4294901760
  %3393 = vmatmul.f32.gmra.mxu0 %v3392
  %v3394 = vpop.f32.mrf.mxu0
  %v3395 = vadd.f32 %v3329, %v3394
  %v3396 = vand.u32 %v3119, 4294901760
  %v3397 = vsub.f32 %v3119, %v3396
  %v3398 = vand.u32 %v3397, 4294901760
  %3399 = vmatmul.f32.gmra.mxu0 %v3398
  %v3400 = vpop.f32.mrf.mxu0
  %v3401 = vadd.f32 %v3334, %v3400
  %v3402 = vand.u32 %v3122, 4294901760
  %v3403 = vsub.f32 %v3122, %v3402
  %v3404 = vand.u32 %v3403, 4294901760
  %3405 = vmatmul.f32.gmra.mxu0 %v3404
  %v3406 = vpop.f32.mrf.mxu0
  %v3407 = vadd.f32 %v3339, %v3406
  %v3408 = vand.u32 %v3125, 4294901760
  %v3409 = vsub.f32 %v3125, %v3408
  %v3410 = vand.u32 %v3409, 4294901760
  %3411 = vmatmul.f32.gmra.mxu0 %v3410
  %v3412 = vpop.f32.mrf.mxu0
  %v3413 = vadd.f32 %v3344, %v3412
  %3414 = vdwg.mxu0
  %3415 = vmatpush.msra.mxu0 0.0
  %3416 = vmatpush.msra.mxu0 0.0
  %3417 = vmatpush.msra.mxu0 0.0
  %3418 = vmatpush.msra.mxu0 0.0
  %3419 = vmatpush.msra.mxu0 0.0
  %3420 = vmatpush.msra.mxu0 0.0
  %3421 = vmatpush.msra.mxu0 0.0
  %3422 = vmatpush.msra.mxu0 0.0
  %3423 = vmatpush.msra.mxu0 0.0
  %3424 = vmatpush.msra.mxu0 0.0
  %3425 = vmatpush.msra.mxu0 0.0
  %3426 = vmatpush.msra.mxu0 0.0
  %v3427 = vand.u32 %v3039, 4294901760
  %v3428 = vsub.f32 %v3039, %v3427
  %v3429 = vand.u32 %v3428, 4294901760
  %3430 = vmatpush.msra.mxu0 %v3429
  %v3431 = vand.u32 %v3035, 4294901760
  %v3432 = vsub.f32 %v3035, %v3431
  %v3433 = vand.u32 %v3432, 4294901760
  %3434 = vmatpush.msra.mxu0 %v3433
  %v3435 = vand.u32 %v3031, 4294901760
  %v3436 = vsub.f32 %v3031, %v3435
  %v3437 = vand.u32 %v3436, 4294901760
  %3438 = vmatpush.msra.mxu0 %v3437
  %v3439 = vand.u32 %v3027, 4294901760
  %v3440 = vsub.f32 %v3027, %v3439
  %v3441 = vand.u32 %v3440, 4294901760
  %3442 = vmatpush.msra.mxu0 %v3441
  %v3443 = vand.u32 %v3104, 4294901760
  %3444 = vmatmul.f32.gmra.mxu0 %v3443
  %v3445 = vpop.f32.mrf.mxu0
  %v3446 = vadd.f32 %v3371, %v3445
  %v3447 = vand.u32 %v3107, 4294901760
  %3448 = vmatmul.f32.gmra.mxu0 %v3447
  %v3449 = vpop.f32.mrf.mxu0
  %v3450 = vadd.f32 %v3377, %v3449
  %v3451 = vand.u32 %v3110, 4294901760
  %3452 = vmatmul.f32.gmra.mxu0 %v3451
  %v3453 = vpop.f32.mrf.mxu0
  %v3454 = vadd.f32 %v3383, %v3453
  %v3455 = vand.u32 %v3113, 4294901760
  %3456 = vmatmul.f32.gmra.mxu0 %v3455
  %v3457 = vpop.f32.mrf.mxu0
  %v3458 = vadd.f32 %v3389, %v3457
  %v3459 = vand.u32 %v3116, 4294901760
  %3460 = vmatmul.f32.gmra.mxu0 %v3459
  %v3461 = vpop.f32.mrf.mxu0
  %v3462 = vadd.f32 %v3395, %v3461
  %v3463 = vand.u32 %v3119, 4294901760
  %3464 = vmatmul.f32.gmra.mxu0 %v3463
  %v3465 = vpop.f32.mrf.mxu0
  %v3466 = vadd.f32 %v3401, %v3465
  %v3467 = vand.u32 %v3122, 4294901760
  %3468 = vmatmul.f32.gmra.mxu0 %v3467
  %v3469 = vpop.f32.mrf.mxu0
  %v3470 = vadd.f32 %v3407, %v3469
  %v3471 = vand.u32 %v3125, 4294901760
  %3472 = vmatmul.f32.gmra.mxu0 %v3471
  %v3473 = vpop.f32.mrf.mxu0
  %v3474 = vadd.f32 %v3413, %v3473
  %3475 = vdwg.mxu0
  %3476 = vmatpush.msra.mxu0 0.0
  %3477 = vmatpush.msra.mxu0 0.0
  %3478 = vmatpush.msra.mxu0 0.0
  %3479 = vmatpush.msra.mxu0 0.0
  %3480 = vmatpush.msra.mxu0 0.0
  %3481 = vmatpush.msra.mxu0 0.0
  %3482 = vmatpush.msra.mxu0 0.0
  %3483 = vmatpush.msra.mxu0 0.0
  %3484 = vmatpush.msra.mxu0 0.0
  %3485 = vmatpush.msra.mxu0 0.0
  %3486 = vmatpush.msra.mxu0 0.0
  %3487 = vmatpush.msra.mxu0 0.0
  %v3488 = vand.u32 %v3039, 4294901760
  %3489 = vmatpush.msra.mxu0 %v3488
  %v3490 = vand.u32 %v3035, 4294901760
  %3491 = vmatpush.msra.mxu0 %v3490
  %v3492 = vand.u32 %v3031, 4294901760
  %3493 = vmatpush.msra.mxu0 %v3492
  %v3494 = vand.u32 %v3027, 4294901760
  %3495 = vmatpush.msra.mxu0 %v3494
  %v3496 = vand.u32 %v3104, 4294901760
  %3497 = vmatmul.f32.gmra.mxu0 %v3496
  %v3498 = vpop.f32.mrf.mxu0
  %v3499 = vadd.f32 %v3446, %v3498
  %v3500 = vand.u32 %v3107, 4294901760
  %3501 = vmatmul.f32.gmra.mxu0 %v3500
  %v3502 = vpop.f32.mrf.mxu0
  %v3503 = vadd.f32 %v3450, %v3502
  %v3504 = vand.u32 %v3110, 4294901760
  %3505 = vmatmul.f32.gmra.mxu0 %v3504
  %v3506 = vpop.f32.mrf.mxu0
  %v3507 = vadd.f32 %v3454, %v3506
  %v3508 = vand.u32 %v3113, 4294901760
  %3509 = vmatmul.f32.gmra.mxu0 %v3508
  %v3510 = vpop.f32.mrf.mxu0
  %v3511 = vadd.f32 %v3458, %v3510
  %v3512 = vand.u32 %v3116, 4294901760
  %3513 = vmatmul.f32.gmra.mxu0 %v3512
  %v3514 = vpop.f32.mrf.mxu0
  %v3515 = vadd.f32 %v3462, %v3514
  %v3516 = vand.u32 %v3119, 4294901760
  %3517 = vmatmul.f32.gmra.mxu0 %v3516
  %v3518 = vpop.f32.mrf.mxu0
  %v3519 = vadd.f32 %v3466, %v3518
  %v3520 = vand.u32 %v3122, 4294901760
  %3521 = vmatmul.f32.gmra.mxu0 %v3520
  %v3522 = vpop.f32.mrf.mxu0
  %v3523 = vadd.f32 %v3470, %v3522
  %v3524 = vand.u32 %v3125, 4294901760
  %3525 = vmatmul.f32.gmra.mxu0 %v3524
  %v3526 = vpop.f32.mrf.mxu0
  %v3527 = vadd.f32 %v3474, %v3526
  %3528 = vdwg.mxu0
  %3529 = vst.msk [vmem:[%s8] sm:$0xff] %vm3041, %v3499
  %3530 = vst.msk [vmem:[%s8 + $0x8] sm:$0xff] %vm3041, %v3503
  %3531 = vst.msk [vmem:[%s8 + $0x10] sm:$0xff] %vm3041, %v3507
  %3532 = vst.msk [vmem:[%s8 + $0x18] sm:$0xff] %vm3041, %v3511
  %3533 = vst.msk [vmem:[%s8 + $0x20] sm:$0xff] %vm3041, %v3515
  %3534 = vst.msk [vmem:[%s8 + $0x28] sm:$0xff] %vm3041, %v3519
  %3535 = vst.msk [vmem:[%s8 + $0x30] sm:$0xff] %vm3041, %v3523
  %3536 = vst.msk [vmem:[%s8 + $0x38] sm:$0xff] %vm3041, %v3527
  // Predicated region
  $region26: #{test_model_forward.1} parent=0 // pred_check
    _
  $region27: #{test_model_forward.1} parent=0 // pred_check_branch
    %3538 = sbr.rel (0) target = $region29
  $region28: #{test_model_forward.1} parent=0 // pred_region
    _
  $region29: #{test_model_forward.1} parent=0 // pred_fallthru
    _
  // Predicated region
  $region30: #{test_model_forward.1} parent=0 // pred_check
    _
  $region31: #{test_model_forward.1} parent=0 // pred_check_branch
    %3540 = sbr.rel (0) target = $region33
  $region32: #{test_model_forward.1} parent=0 // pred_region
    _
  $region33: #{test_model_forward.1} parent=0 // pred_fallthru
    _
  // Predicated region
  $region34: #{test_model_forward.1} parent=0 // pred_check
    _
  $region35: #{test_model_forward.1} parent=0 // pred_check_branch
    %3542 = sbr.rel (0) target = $region37
  $region36: #{test_model_forward.1} parent=0 // pred_region
    _
  $region37: #{test_model_forward.1} parent=0 // pred_fallthru
    _
  // Predicated region
  $region38: #{test_model_forward.1} parent=0 // pred_check
    _
  $region39: #{test_model_forward.1} parent=0 // pred_check_branch
    %3544 = sbr.rel (0) target = $region41
  $region40: #{test_model_forward.1} parent=0 // pred_region
    _
  $region41: #{test_model_forward.1} parent=0 // pred_fallthru
    _
  // Predicated region
  $region42: #{test_model_forward.1} parent=0 // pred_check
    _
  $region43: #{test_model_forward.1} parent=0 // pred_check_branch
    %3546 = sbr.rel (0) target = $region45
  $region44: #{test_model_forward.1} parent=0 // pred_region
    _
  $region45: #{test_model_forward.1} parent=0 // pred_fallthru
    _
  // Predicated region
  $region46: #{test_model_forward.1} parent=0 // pred_check
    _
  $region47: #{test_model_forward.1} parent=0 // pred_check_branch
    %3548 = sbr.rel (0) target = $region49
  $region48: #{test_model_forward.1} parent=0 // pred_region
    _
  $region49: #{test_model_forward.1} parent=0 // pred_fallthru
    _

</llo_original>
